<compile_context>
chip_gen: v6e
topology: v6e:2x2x1
jax: 0.10.0
libtpu: 0.0.40
codegen_flags: <defaults>
</compile_context>

<pallas_src>
import numpy as np
import jax
import jax.numpy as jnp
from jax.experimental import pallas as pl
from jax.experimental.pallas import tpu as pltpu

ENCODED_SIZE = 14  # default of the PyTorch module
_LANE = 128
_MIB = 1024 * 1024


def _round_up(x, m):
    return (x + m - 1) // m * m


def _mosaic_params(semantics, working_set_bytes):
    """CompilerParams with an explicit VMEM limit sized from the working set."""
    limit = int(min(max(32 * _MIB, 2 * working_set_bytes), 112 * _MIB))
    return pltpu.CompilerParams(dimension_semantics=semantics,
                                vmem_limit_bytes=limit)


# ----------------------------------------------------------------------------
# Kernel 1: conv stem as an M-tiled im2col matmul + fused bias (ones column)
# + ReLU.  bf16 operands, f32 MXU accumulation, lane-dense bf16 stores.
# ----------------------------------------------------------------------------
def _conv_relu_kernel(p_ref, w_ref, o_ref):
    acc = jnp.dot(p_ref[...], w_ref[...], preferred_element_type=jnp.float32)
    o_ref[...] = jnp.maximum(acc, 0.0).astype(o_ref.dtype)


def conv3x3_s2_relu(x_nhwc, w, b, *, tm=2048, out_dtype=jnp.bfloat16):
    """3x3 / stride-2 / pad-1 conv + bias + ReLU.

    im2col happens in JAX glue (bf16, K padded 27 -> 32 with the bias folded in
    as a ones column); the matmul is a Pallas kernel tiled over output rows.
    Output is bf16 by default (the feature map writeback dominates HBM traffic).
    """
    B, H, W, Cin = x_nhwc.shape
    k, stride, pad = 3, 2, 1
    Ho = (H + 2 * pad - k) // stride + 1
    Wo = (W + 2 * pad - k) // stride + 1
    D = w.shape[1]
    Dp = _round_up(D, _LANE)          # lane-dense output stores
    K0 = k * k * Cin                  # 27 for Cin=3
    Kp = _round_up(K0 + 1, 8)         # +1 ones column for the bias, pad to 8

    # --- im2col in bf16 (halves the patch HBM traffic vs f32) ---------------
    xb = x_nhwc.astype(jnp.bfloat16)
    xp = jnp.pad(xb, ((0, 0), (pad, pad), (pad, pad), (0, 0)))
    cols = []
    for dy in range(k):
        for dx in range(k):
            cols.append(xp[:, dy:dy + stride * (Ho - 1) + 1:stride,
                           dx:dx + stride * (Wo - 1) + 1:stride, :])
    patches = jnp.stack(cols, axis=3).reshape(B * Ho * Wo, K0)       # (M, 27)
    M = patches.shape[0]
    patches = jnp.concatenate(
        [patches,
         jnp.ones((M, 1), jnp.bfloat16),                 # bias column (== 1.0)
         jnp.zeros((M, Kp - K0 - 1), jnp.bfloat16)], axis=1)         # (M, Kp)

    # --- weights: (27, D) + bias row + zero pad -> (Kp, Dp), bf16 -----------
    # NOTE: padded output channels [D:Dp] stay exactly zero only because the
    # padded weight columns / bias are zero and ReLU(0) == 0; re-verify if the
    # epilogue nonlinearity ever changes.
    w_aug = jnp.zeros((Kp, Dp), jnp.float32)
    w_aug = w_aug.at[:K0, :D].set(w)
    w_aug = w_aug.at[K0, :D].set(b)
    w_aug = w_aug.astype(jnp.bfloat16)

    # --- tile the M axis and pad M to the tile size -------------------------
    tm = min(tm, _round_up(M, 8))
    Mp = _round_up(M, tm)
    patches = jnp.pad(patches, ((0, Mp - M), (0, 0)))

    out_bytes = jnp.dtype(out_dtype).itemsize
    ws = 2 * (tm * Kp * 2) + 2 * (tm * Dp * out_bytes) + Kp * Dp * 2

    out = pl.pallas_call(
        _conv_relu_kernel,
        out_shape=jax.ShapeDtypeStruct((Mp, Dp), out_dtype),
        grid=(Mp // tm,),
        in_specs=[
            pl.BlockSpec((tm, Kp), lambda i: (i, 0)),
            pl.BlockSpec((Kp, Dp), lambda i: (0, 0)),   # weights stay resident
        ],
        out_specs=pl.BlockSpec((tm, Dp), lambda i: (i, 0)),
        compiler_params=_mosaic_params(("parallel",), ws),
    )(patches, w_aug)
    return out[:M].reshape(B, Ho, Wo, Dp)        # NHWC, channels padded to Dp


# ----------------------------------------------------------------------------
# Kernel 2a/2b: separable AdaptiveAvgPool2d((S, S)) + flatten to (B, S*S, C).
#   pass 1:  tmp[b]   = Ph @ feat[b]   (contract H; feat viewed (Ho, Wo*C),
#                                       lane-tiled over Wo*C, bf16 out)
#   pass 2:  out[b,s] = Pw @ tmp[b,s]  (contract W; channel-tiled grid, f32 out)
# Exactly reproduces PyTorch adaptive average pooling windows; Ph/Pw stay f32.
# ----------------------------------------------------------------------------
def _pool_h_kernel(ph_ref, x_ref, o_ref):
    o_ref[...] = jnp.dot(ph_ref[...], x_ref[...].astype(jnp.float32),
                         preferred_element_type=jnp.float32).astype(o_ref.dtype)


def _pool_w_kernel(pw_ref, x_ref, o_ref):
    for s in range(o_ref.shape[0]):                      # S is small & static
        o_ref[s, :, :] = jnp.dot(pw_ref[...],
                                 x_ref[s, :, :].astype(jnp.float32),
                                 preferred_element_type=jnp.float32)


def _pool_matrix(in_size, out_size):
    """Row i averages input indices [floor(i*in/out), ceil((i+1)*in/out))."""
    m = np.zeros((out_size, in_size), np.float32)
    for i in range(out_size):
        start = (i * in_size) // out_size
        end = -((-(i + 1) * in_size) // out_size)
        m[i, start:end] = 1.0 / (end - start)
    return m


def _pick_tile(total, target, quantum=_LANE):
    """Largest multiple of `quantum` dividing `total` that is <= target."""
    assert total % quantum == 0, (total, quantum)   # guaranteed by Dp padding
    best = quantum
    for t in range(quantum, min(target, total) + 1, quantum):
        if total % t == 0:
            best = t
    return best if total > target else total


def adaptive_avg_pool_flatten(feat_nhwc, encoded_size):
    B, Ho, Wo, C = feat_nhwc.shape
    S = encoded_size
    ph = jnp.asarray(_pool_matrix(Ho, S))                # (S, Ho) f32
    pw = jnp.asarray(_pool_matrix(Wo, S))                # (S, Wo) f32

    # ---- pass 1: contract H; feat viewed as (B, Ho, Wo*C), lane-tiled ------
    wc = Wo * C
    tn = _pick_tile(wc, target=2048)
    feat3 = feat_nhwc.reshape(B, Ho, wc)                 # free view (row-major)
    fbytes = jnp.dtype(feat_nhwc.dtype).itemsize
    ws1 = 2 * (Ho * tn * fbytes) + 2 * (S * tn * 2) + S * Ho * 4
    tmp = pl.pallas_call(
        _pool_h_kernel,
        out_shape=jax.ShapeDtypeStruct((B, S, wc), jnp.bfloat16),
        grid=(B, wc // tn),
        in_specs=[
            pl.BlockSpec((S, Ho), lambda b, n: (0, 0)),
            pl.BlockSpec((None, Ho, tn), lambda b, n: (b, 0, n)),
        ],
        out_specs=pl.BlockSpec((None, S, tn), lambda b, n: (b, 0, n)),
        compiler_params=_mosaic_params(("parallel", "parallel"), ws1),
    )(ph, feat3)

    # ---- pass 2: contract W; tmp viewed as (B, S, Wo, C), channel-tiled ----
    tc = _pick_tile(C, target=512)
    tmp4 = tmp.reshape(B, S, Wo, C)                      # free view
    ws2 = 2 * (S * Wo * tc * 2) + 2 * (S * S * tc * 4) + S * Wo * 4
    out = pl.pallas_call(
        _pool_w_kernel,
        out_shape=jax.ShapeDtypeStruct((B, S, S, C), jnp.float32),
        grid=(B, C // tc),
        in_specs=[
            pl.BlockSpec((S, Wo), lambda b, c: (0, 0)),
            pl.BlockSpec((None, S, Wo, tc), lambda b, c: (b, 0, 0, c)),
        ],
        out_specs=pl.BlockSpec((None, S, S, tc), lambda b, c: (b, 0, 0, c)),
        compiler_params=_mosaic_params(("parallel", "parallel"), ws2),
    )(pw, tmp4)

    # permute(0,2,3,1) + view(B, -1, C): already NHWC, so just a reshape.
    return out.reshape(B, S * S, C)


# ----------------------------------------------------------------------------
# EncoderCNN.forward
# ----------------------------------------------------------------------------
def encoder_cnn_forward(images_nchw, params, encoded_size=ENCODED_SIZE, *,
                        conv_tm=2048, feat_dtype=jnp.bfloat16):
    """EncoderCNN.forward: images (B, Cin, H, W) -> region features (B, L, D)."""
    D = params["w"].shape[1]
    x = jnp.transpose(images_nchw, (0, 2, 3, 1))                   # -> NHWC
    feat = conv3x3_s2_relu(x, params["w"], params["b"],
                           tm=conv_tm, out_dtype=feat_dtype)       # (B,Ho,Wo,Dp)
    pooled = adaptive_avg_pool_flatten(feat, encoded_size)         # (B, L, Dp)
    return pooled[:, :, :D]                                        # drop lane pad


# ----------------------------------------------------------------------------
# Pure-JAX reference (independent path: XLA conv + einsum pooling), with the
# same bf16 quantization points (input/weights/bias, feature map, pool tmp)
# and f32 accumulation, so the check verifies the kernels, not bf16 rounding.
# ----------------------------------------------------------------------------
def reference_forward(images_nchw, params, encoded_size=ENCODED_SIZE, *,
                      feat_dtype=jnp.bfloat16):
    Cin = images_nchw.shape[1]
    D = params["w"].shape[1]
    w4 = params["w"].astype(jnp.bfloat16).reshape(3, 3, Cin, D)    # HWIO
    b = params["b"].astype(jnp.bfloat16)
    feat = jax.lax.conv_general_dilated(
        images_nchw.astype(jnp.bfloat16), w4,
        window_strides=(2, 2), padding=((1, 1), (1, 1)),
        dimension_numbers=("NCHW", "HWIO", "NHWC"),
        preferred_element_type=jnp.float32)
    feat = jnp.maximum(feat + b.astype(jnp.float32), 0.0).astype(feat_dtype)
    B, H, W, C = feat.shape
    ph = jnp.asarray(_pool_matrix(H, encoded_size))
    pw = jnp.asarray(_pool_matrix(W, encoded_size))
    tmp = jnp.einsum("sh,bhwc->bswc", ph, feat.astype(jnp.float32))
    tmp = tmp.astype(jnp.bfloat16).astype(jnp.float32)             # mirror kernel
    pooled = jnp.einsum("bswc,tw->bstc", tmp, pw)
    return pooled.reshape(B, encoded_size * encoded_size, C)


if __name__ == "__main__":
    # Small demo shapes (spatial 64 so the 14x14 adaptive pool has windows >= 2
    # and the conv grid has several steps); D=128 stands in for the real
    # ResNet-50 layer3 dim of 1024 and keeps all stores lane-dense.
    B, Cin, H, W = 2, 3, 64, 64
    D = 128

    key = jax.random.PRNGKey(0)
    k_img, k_w, k_b = jax.random.split(key, 3)
    images = jax.random.normal(k_img, (B, Cin, H, W), dtype=jnp.float32)
    params = {
        "w": jax.random.normal(k_w, (3 * 3 * Cin, D), dtype=jnp.float32) * 0.05,
        "b": jax.random.normal(k_b, (D,), dtype=jnp.float32) * 0.01,
    }

    # conv_tm=512 so the toy size (M = 2*32*32 = 2048) exercises a 4-step grid;
    # production sizes should use the tm=2048 default (sweep 1024-4096).
    fwd = jax.jit(lambda imgs, p: encoder_cnn_forward(
        imgs, p, ENCODED_SIZE, conv_tm=512))
    out = jax.block_until_ready(fwd(images, params))

    ref = jax.block_until_ready(reference_forward(images, params, ENCODED_SIZE))
    assert out.shape == (B, ENCODED_SIZE * ENCODED_SIZE, D), out.shape
    np.testing.assert_allclose(np.asarray(out, dtype=np.float32),
                               np.asarray(ref, dtype=np.float32),
                               rtol=5e-3, atol=5e-3)
    print("KERNEL_OK")
</pallas_src>

<mosaic_0001>
module attributes {stable_mosaic.version = 11 : i64} {
  func.func @_conv_relu_kernel(%arg0: i32, %arg1: memref<512x32xbf16, #tpu.memory_space<vmem>>, %arg2: memref<32x128xbf16, #tpu.memory_space<vmem>>, %arg3: memref<512x128xbf16, #tpu.memory_space<vmem>>) attributes {dimension_semantics = [#tpu.dimension_semantics<parallel>], iteration_bounds = array<i64: 4>, scalar_prefetch = 0 : i64, scratch_operands = 0 : i64, tpu.core_type = #tpu.core_type<tc>, window_params = [{transform_indices = @transform_0, window_bounds = array<i64: 512, 32>}, {pipeline_mode = #tpu.pipeline_mode<synchronous>, transform_indices = @transform_1, window_bounds = array<i64: 32, 128>}, {transform_indices = @transform_2, window_bounds = array<i64: 512, 128>}]} {
    %c0 = arith.constant 0 : index
    %c0_0 = arith.constant 0 : index
    %0 = vector.load %arg1[%c0, %c0_0] : memref<512x32xbf16, #tpu.memory_space<vmem>>, vector<512x32xbf16>
    %c0_1 = arith.constant 0 : index
    %c0_2 = arith.constant 0 : index
    %1 = vector.load %arg2[%c0_1, %c0_2] : memref<32x128xbf16, #tpu.memory_space<vmem>>, vector<32x128xbf16>
    %cst = arith.constant dense<0.000000e+00> : vector<512x128xf32>
    %2 = tpu.matmul %0, %1, %cst {dimension_numbers = #tpu.dot_dimension_numbers<[1], [0], [0], [1], [0, 0, 1, 1], [], []>} : vector<512x32xbf16>, vector<32x128xbf16>, vector<512x128xf32> -> vector<512x128xf32>
    %cst_3 = arith.constant 0.000000e+00 : f32
    %3 = vector.broadcast %cst_3 : f32 to vector<512x128xf32>
    %4 = arith.maximumf %2, %3 : vector<512x128xf32>
    %5 = arith.truncf %4 : vector<512x128xf32> to vector<512x128xbf16>
    %c0_4 = arith.constant 0 : index
    %c0_5 = arith.constant 0 : index
    %6 = vector.load %arg3[%c0_4, %c0_5] : memref<512x128xbf16, #tpu.memory_space<vmem>>, vector<512x128xbf16>
    tpu.vector_store %arg3[%c0_4, %c0_5], %5 {strides = array<i32>} : memref<512x128xbf16, #tpu.memory_space<vmem>>, vector<512x128xbf16>,
    return
  }
  func.func @transform_0(%arg0: i32) -> (i32, i32) {
    %c0_i32 = arith.constant 0 : i32
    %c0_i32_0 = arith.constant 0 : i32
    return %arg0, %c0_i32 : i32, i32
  }
  func.func @transform_1(%arg0: i32) -> (i32, i32) {
    %c0_i32 = arith.constant 0 : i32
    %c0_i32_0 = arith.constant 0 : i32
    %c0_i32_1 = arith.constant 0 : i32
    return %c0_i32, %c0_i32_0 : i32, i32
  }
  func.func @transform_2(%arg0: i32) -> (i32, i32) {
    %c0_i32 = arith.constant 0 : i32
    %c0_i32_0 = arith.constant 0 : i32
    return %arg0, %c0_i32 : i32, i32
  }
}

module attributes {stable_mosaic.version = 11 : i64} {
  func.func @_pool_h_kernel(%arg0: i32, %arg1: i32, %arg2: memref<14x32xf32, #tpu.memory_space<vmem>>, %arg3: memref<1x32x2048xbf16, #tpu.memory_space<vmem>>, %arg4: memref<1x14x2048xbf16, #tpu.memory_space<vmem>>) attributes {dimension_semantics = [#tpu.dimension_semantics<parallel>, #tpu.dimension_semantics<parallel>], iteration_bounds = array<i64: 2, 2>, scalar_prefetch = 0 : i64, scratch_operands = 0 : i64, tpu.core_type = #tpu.core_type<tc>, window_params = [{pipeline_mode = #tpu.pipeline_mode<synchronous>, transform_indices = @transform_0, window_bounds = array<i64: 14, 32>}, {transform_indices = @transform_1, window_bounds = array<i64: 1, 32, 2048>}, {transform_indices = @transform_2, window_bounds = array<i64: 1, 14, 2048>}]} {
    %c0 = arith.constant 0 : index
    %c0_0 = arith.constant 0 : index
    %0 = vector.load %arg2[%c0, %c0_0] : memref<14x32xf32, #tpu.memory_space<vmem>>, vector<14x32xf32>
    %c0_1 = arith.constant 0 : index
    %c0_2 = arith.constant 0 : index
    %c0_3 = arith.constant 0 : index
    %1 = vector.load %arg3[%c0_1, %c0_2, %c0_3] : memref<1x32x2048xbf16, #tpu.memory_space<vmem>>, vector<1x32x2048xbf16>
    %2 = vector.shape_cast %1 : vector<1x32x2048xbf16> to vector<32x2048xbf16>
    %3 = arith.extf %2 : vector<32x2048xbf16> to vector<32x2048xf32>
    %cst = arith.constant dense<0.000000e+00> : vector<14x2048xf32>
    %4 = tpu.matmul %0, %3, %cst {dimension_numbers = #tpu.dot_dimension_numbers<[1], [0], [0], [1], [0, 0, 1, 1], [], []>} : vector<14x32xf32>, vector<32x2048xf32>, vector<14x2048xf32> -> vector<14x2048xf32>
    %5 = arith.truncf %4 : vector<14x2048xf32> to vector<14x2048xbf16>
    %c0_4 = arith.constant 0 : index
    %c0_5 = arith.constant 0 : index
    %c0_6 = arith.constant 0 : index
    %6 = vector.load %arg4[%c0_4, %c0_5, %c0_6] : memref<1x14x2048xbf16, #tpu.memory_space<vmem>>, vector<1x14x2048xbf16>
    %7 = vector.shape_cast %6 : vector<1x14x2048xbf16> to vector<14x2048xbf16>
    %8 = vector.shape_cast %5 : vector<14x2048xbf16> to vector<1x14x2048xbf16>
    tpu.vector_store %arg4[%c0_4, %c0_5, %c0_6], %8 {strides = array<i32>} : memref<1x14x2048xbf16, #tpu.memory_space<vmem>>, vector<1x14x2048xbf16>,
    return
  }
  func.func @transform_0(%arg0: i32, %arg1: i32) -> (i32, i32) {
    %c0_i32 = arith.constant 0 : i32
    %c0_i32_0 = arith.constant 0 : i32
    %c0_i32_1 = arith.constant 0 : i32
    return %c0_i32, %c0_i32_0 : i32, i32
  }
  func.func @transform_1(%arg0: i32, %arg1: i32) -> (i32, i32, i32) {
    %c0_i32 = arith.constant 0 : i32
    %c0_i32_0 = arith.constant 0 : i32
    return %arg0, %c0_i32, %arg1 : i32, i32, i32
  }
  func.func @transform_2(%arg0: i32, %arg1: i32) -> (i32, i32, i32) {
    %c0_i32 = arith.constant 0 : i32
    %c0_i32_0 = arith.constant 0 : i32
    return %arg0, %c0_i32, %arg1 : i32, i32, i32
  }
}

module attributes {stable_mosaic.version = 11 : i64} {
  func.func @_pool_w_kernel(%arg0: i32, %arg1: i32, %arg2: memref<14x32xf32, #tpu.memory_space<vmem>>, %arg3: memref<1x14x32x128xbf16, #tpu.memory_space<vmem>>, %arg4: memref<1x14x14x128xf32, #tpu.memory_space<vmem>>) attributes {dimension_semantics = [#tpu.dimension_semantics<parallel>, #tpu.dimension_semantics<parallel>], iteration_bounds = array<i64: 2, 1>, scalar_prefetch = 0 : i64, scratch_operands = 0 : i64, tpu.core_type = #tpu.core_type<tc>, window_params = [{pipeline_mode = #tpu.pipeline_mode<synchronous>, transform_indices = @transform_0, window_bounds = array<i64: 14, 32>}, {transform_indices = @transform_1, window_bounds = array<i64: 1, 14, 32, 128>}, {transform_indices = @transform_2, window_bounds = array<i64: 1, 14, 14, 128>}]} {
    %c0 = arith.constant 0 : index
    %c0_0 = arith.constant 0 : index
    %0 = vector.load %arg2[%c0, %c0_0] : memref<14x32xf32, #tpu.memory_space<vmem>>, vector<14x32xf32>
    %c0_1 = arith.constant 0 : index
    %c0_2 = arith.constant 0 : index
    %c0_3 = arith.constant 0 : index
    %c0_4 = arith.constant 0 : index
    %1 = vector.load %arg3[%c0_1, %c0_2, %c0_3, %c0_4] : memref<1x14x32x128xbf16, #tpu.memory_space<vmem>>, vector<1x1x32x128xbf16>
    %2 = vector.shape_cast %1 : vector<1x1x32x128xbf16> to vector<32x128xbf16>
    %3 = arith.extf %2 : vector<32x128xbf16> to vector<32x128xf32>
    %cst = arith.constant dense<0.000000e+00> : vector<14x128xf32>
    %4 = tpu.matmul %0, %3, %cst {dimension_numbers = #tpu.dot_dimension_numbers<[1], [0], [0], [1], [0, 0, 1, 1], [], []>} : vector<14x32xf32>, vector<32x128xf32>, vector<14x128xf32> -> vector<14x128xf32>
    %c0_5 = arith.constant 0 : index
    %c0_6 = arith.constant 0 : index
    %c0_7 = arith.constant 0 : index
    %c0_8 = arith.constant 0 : index
    %5 = vector.load %arg4[%c0_5, %c0_6, %c0_7, %c0_8] : memref<1x14x14x128xf32, #tpu.memory_space<vmem>>, vector<1x1x14x128xf32>
    %6 = vector.shape_cast %5 : vector<1x1x14x128xf32> to vector<14x128xf32>
    %7 = vector.shape_cast %4 : vector<14x128xf32> to vector<1x1x14x128xf32>
    tpu.vector_store %arg4[%c0_5, %c0_6, %c0_7, %c0_8], %7 {strides = array<i32>} : memref<1x14x14x128xf32, #tpu.memory_space<vmem>>, vector<1x1x14x128xf32>,
    %c0_9 = arith.constant 0 : index
    %c0_10 = arith.constant 0 : index
    %8 = vector.load %arg2[%c0_9, %c0_10] : memref<14x32xf32, #tpu.memory_space<vmem>>, vector<14x32xf32>
    %c0_11 = arith.constant 0 : index
    %c1 = arith.constant 1 : index
    %c0_12 = arith.constant 0 : index
    %c0_13 = arith.constant 0 : index
    %9 = vector.load %arg3[%c0_11, %c1, %c0_12, %c0_13] : memref<1x14x32x128xbf16, #tpu.memory_space<vmem>>, vector<1x1x32x128xbf16>
    %10 = vector.shape_cast %9 : vector<1x1x32x128xbf16> to vector<32x128xbf16>
    %11 = arith.extf %10 : vector<32x128xbf16> to vector<32x128xf32>
    %cst_14 = arith.constant dense<0.000000e+00> : vector<14x128xf32>
    %12 = tpu.matmul %8, %11, %cst_14 {dimension_numbers = #tpu.dot_dimension_numbers<[1], [0], [0], [1], [0, 0, 1, 1], [], []>} : vector<14x32xf32>, vector<32x128xf32>, vector<14x128xf32> -> vector<14x128xf32>
    %c0_15 = arith.constant 0 : index
    %c1_16 = arith.constant 1 : index
    %c0_17 = arith.constant 0 : index
    %c0_18 = arith.constant 0 : index
    %13 = vector.load %arg4[%c0_15, %c1_16, %c0_17, %c0_18] : memref<1x14x14x128xf32, #tpu.memory_space<vmem>>, vector<1x1x14x128xf32>
    %14 = vector.shape_cast %13 : vector<1x1x14x128xf32> to vector<14x128xf32>
    %15 = vector.shape_cast %12 : vector<14x128xf32> to vector<1x1x14x128xf32>
    tpu.vector_store %arg4[%c0_15, %c1_16, %c0_17, %c0_18], %15 {strides = array<i32>} : memref<1x14x14x128xf32, #tpu.memory_space<vmem>>, vector<1x1x14x128xf32>,
    %c0_19 = arith.constant 0 : index
    %c0_20 = arith.constant 0 : index
    %16 = vector.load %arg2[%c0_19, %c0_20] : memref<14x32xf32, #tpu.memory_space<vmem>>, vector<14x32xf32>
    %c0_21 = arith.constant 0 : index
    %c2 = arith.constant 2 : index
    %c0_22 = arith.constant 0 : index
    %c0_23 = arith.constant 0 : index
    %17 = vector.load %arg3[%c0_21, %c2, %c0_22, %c0_23] : memref<1x14x32x128xbf16, #tpu.memory_space<vmem>>, vector<1x1x32x128xbf16>
    %18 = vector.shape_cast %17 : vector<1x1x32x128xbf16> to vector<32x128xbf16>
    %19 = arith.extf %18 : vector<32x128xbf16> to vector<32x128xf32>
    %cst_24 = arith.constant dense<0.000000e+00> : vector<14x128xf32>
    %20 = tpu.matmul %16, %19, %cst_24 {dimension_numbers = #tpu.dot_dimension_numbers<[1], [0], [0], [1], [0, 0, 1, 1], [], []>} : vector<14x32xf32>, vector<32x128xf32>, vector<14x128xf32> -> vector<14x128xf32>
    %c0_25 = arith.constant 0 : index
    %c2_26 = arith.constant 2 : index
    %c0_27 = arith.constant 0 : index
    %c0_28 = arith.constant 0 : index
    %21 = vector.load %arg4[%c0_25, %c2_26, %c0_27, %c0_28] : memref<1x14x14x128xf32, #tpu.memory_space<vmem>>, vector<1x1x14x128xf32>
    %22 = vector.shape_cast %21 : vector<1x1x14x128xf32> to vector<14x128xf32>
    %23 = vector.shape_cast %20 : vector<14x128xf32> to vector<1x1x14x128xf32>
    tpu.vector_store %arg4[%c0_25, %c2_26, %c0_27, %c0_28], %23 {strides = array<i32>} : memref<1x14x14x128xf32, #tpu.memory_space<vmem>>, vector<1x1x14x128xf32>,
    %c0_29 = arith.constant 0 : index
    %c0_30 = arith.constant 0 : index
    %24 = vector.load %arg2[%c0_29, %c0_30] : memref<14x32xf32, #tpu.memory_space<vmem>>, vector<14x32xf32>
    %c0_31 = arith.constant 0 : index
    %c3 = arith.constant 3 : index
    %c0_32 = arith.constant 0 : index
    %c0_33 = arith.constant 0 : index
    %25 = vector.load %arg3[%c0_31, %c3, %c0_32, %c0_33] : memref<1x14x32x128xbf16, #tpu.memory_space<vmem>>, vector<1x1x32x128xbf16>
    %26 = vector.shape_cast %25 : vector<1x1x32x128xbf16> to vector<32x128xbf16>
    %27 = arith.extf %26 : vector<32x128xbf16> to vector<32x128xf32>
    %cst_34 = arith.constant dense<0.000000e+00> : vector<14x128xf32>
    %28 = tpu.matmul %24, %27, %cst_34 {dimension_numbers = #tpu.dot_dimension_numbers<[1], [0], [0], [1], [0, 0, 1, 1], [], []>} : vector<14x32xf32>, vector<32x128xf32>, vector<14x128xf32> -> vector<14x128xf32>
    %c0_35 = arith.constant 0 : index
    %c3_36 = arith.constant 3 : index
    %c0_37 = arith.constant 0 : index
    %c0_38 = arith.constant 0 : index
    %29 = vector.load %arg4[%c0_35, %c3_36, %c0_37, %c0_38] : memref<1x14x14x128xf32, #tpu.memory_space<vmem>>, vector<1x1x14x128xf32>
    %30 = vector.shape_cast %29 : vector<1x1x14x128xf32> to vector<14x128xf32>
    %31 = vector.shape_cast %28 : vector<14x128xf32> to vector<1x1x14x128xf32>
    tpu.vector_store %arg4[%c0_35, %c3_36, %c0_37, %c0_38], %31 {strides = array<i32>} : memref<1x14x14x128xf32, #tpu.memory_space<vmem>>, vector<1x1x14x128xf32>,
    %c0_39 = arith.constant 0 : index
    %c0_40 = arith.constant 0 : index
    %32 = vector.load %arg2[%c0_39, %c0_40] : memref<14x32xf32, #tpu.memory_space<vmem>>, vector<14x32xf32>
    %c0_41 = arith.constant 0 : index
    %c4 = arith.constant 4 : index
    %c0_42 = arith.constant 0 : index
    %c0_43 = arith.constant 0 : index
    %33 = vector.load %arg3[%c0_41, %c4, %c0_42, %c0_43] : memref<1x14x32x128xbf16, #tpu.memory_space<vmem>>, vector<1x1x32x128xbf16>
    %34 = vector.shape_cast %33 : vector<1x1x32x128xbf16> to vector<32x128xbf16>
    %35 = arith.extf %34 : vector<32x128xbf16> to vector<32x128xf32>
    %cst_44 = arith.constant dense<0.000000e+00> : vector<14x128xf32>
    %36 = tpu.matmul %32, %35, %cst_44 {dimension_numbers = #tpu.dot_dimension_numbers<[1], [0], [0], [1], [0, 0, 1, 1], [], []>} : vector<14x32xf32>, vector<32x128xf32>, vector<14x128xf32> -> vector<14x128xf32>
    %c0_45 = arith.constant 0 : index
    %c4_46 = arith.constant 4 : index
    %c0_47 = arith.constant 0 : index
    %c0_48 = arith.constant 0 : index
    %37 = vector.load %arg4[%c0_45, %c4_46, %c0_47, %c0_48] : memref<1x14x14x128xf32, #tpu.memory_space<vmem>>, vector<1x1x14x128xf32>
    %38 = vector.shape_cast %37 : vector<1x1x14x128xf32> to vector<14x128xf32>
    %39 = vector.shape_cast %36 : vector<14x128xf32> to vector<1x1x14x128xf32>
    tpu.vector_store %arg4[%c0_45, %c4_46, %c0_47, %c0_48], %39 {strides = array<i32>} : memref<1x14x14x128xf32, #tpu.memory_space<vmem>>, vector<1x1x14x128xf32>,
    %c0_49 = arith.constant 0 : index
    %c0_50 = arith.constant 0 : index
    %40 = vector.load %arg2[%c0_49, %c0_50] : memref<14x32xf32, #tpu.memory_space<vmem>>, vector<14x32xf32>
    %c0_51 = arith.constant 0 : index
    %c5 = arith.constant 5 : index
    %c0_52 = arith.constant 0 : index
    %c0_53 = arith.constant 0 : index
    %41 = vector.load %arg3[%c0_51, %c5, %c0_52, %c0_53] : memref<1x14x32x128xbf16, #tpu.memory_space<vmem>>, vector<1x1x32x128xbf16>
    %42 = vector.shape_cast %41 : vector<1x1x32x128xbf16> to vector<32x128xbf16>
    %43 = arith.extf %42 : vector<32x128xbf16> to vector<32x128xf32>
    %cst_54 = arith.constant dense<0.000000e+00> : vector<14x128xf32>
    %44 = tpu.matmul %40, %43, %cst_54 {dimension_numbers = #tpu.dot_dimension_numbers<[1], [0], [0], [1], [0, 0, 1, 1], [], []>} : vector<14x32xf32>, vector<32x128xf32>, vector<14x128xf32> -> vector<14x128xf32>
    %c0_55 = arith.constant 0 : index
    %c5_56 = arith.constant 5 : index
    %c0_57 = arith.constant 0 : index
    %c0_58 = arith.constant 0 : index
    %45 = vector.load %arg4[%c0_55, %c5_56, %c0_57, %c0_58] : memref<1x14x14x128xf32, #tpu.memory_space<vmem>>, vector<1x1x14x128xf32>
    %46 = vector.shape_cast %45 : vector<1x1x14x128xf32> to vector<14x128xf32>
    %47 = vector.shape_cast %44 : vector<14x128xf32> to vector<1x1x14x128xf32>
    tpu.vector_store %arg4[%c0_55, %c5_56, %c0_57, %c0_58], %47 {strides = array<i32>} : memref<1x14x14x128xf32, #tpu.memory_space<vmem>>, vector<1x1x14x128xf32>,
    %c0_59 = arith.constant 0 : index
    %c0_60 = arith.constant 0 : index
    %48 = vector.load %arg2[%c0_59, %c0_60] : memref<14x32xf32, #tpu.memory_space<vmem>>, vector<14x32xf32>
    %c0_61 = arith.constant 0 : index
    %c6 = arith.constant 6 : index
    %c0_62 = arith.constant 0 : index
    %c0_63 = arith.constant 0 : index
    %49 = vector.load %arg3[%c0_61, %c6, %c0_62, %c0_63] : memref<1x14x32x128xbf16, #tpu.memory_space<vmem>>, vector<1x1x32x128xbf16>
    %50 = vector.shape_cast %49 : vector<1x1x32x128xbf16> to vector<32x128xbf16>
    %51 = arith.extf %50 : vector<32x128xbf16> to vector<32x128xf32>
    %cst_64 = arith.constant dense<0.000000e+00> : vector<14x128xf32>
    %52 = tpu.matmul %48, %51, %cst_64 {dimension_numbers = #tpu.dot_dimension_numbers<[1], [0], [0], [1], [0, 0, 1, 1], [], []>} : vector<14x32xf32>, vector<32x128xf32>, vector<14x128xf32> -> vector<14x128xf32>
    %c0_65 = arith.constant 0 : index
    %c6_66 = arith.constant 6 : index
    %c0_67 = arith.constant 0 : index
    %c0_68 = arith.constant 0 : index
    %53 = vector.load %arg4[%c0_65, %c6_66, %c0_67, %c0_68] : memref<1x14x14x128xf32, #tpu.memory_space<vmem>>, vector<1x1x14x128xf32>
    %54 = vector.shape_cast %53 : vector<1x1x14x128xf32> to vector<14x128xf32>
    %55 = vector.shape_cast %52 : vector<14x128xf32> to vector<1x1x14x128xf32>
    tpu.vector_store %arg4[%c0_65, %c6_66, %c0_67, %c0_68], %55 {strides = array<i32>} : memref<1x14x14x128xf32, #tpu.memory_space<vmem>>, vector<1x1x14x128xf32>,
    %c0_69 = arith.constant 0 : index
    %c0_70 = arith.constant 0 : index
    %56 = vector.load %arg2[%c0_69, %c0_70] : memref<14x32xf32, #tpu.memory_space<vmem>>, vector<14x32xf32>
    %c0_71 = arith.constant 0 : index
    %c7 = arith.constant 7 : index
    %c0_72 = arith.constant 0 : index
    %c0_73 = arith.constant 0 : index
    %57 = vector.load %arg3[%c0_71, %c7, %c0_72, %c0_73] : memref<1x14x32x128xbf16, #tpu.memory_space<vmem>>, vector<1x1x32x128xbf16>
    %58 = vector.shape_cast %57 : vector<1x1x32x128xbf16> to vector<32x128xbf16>
    %59 = arith.extf %58 : vector<32x128xbf16> to vector<32x128xf32>
    %cst_74 = arith.constant dense<0.000000e+00> : vector<14x128xf32>
    %60 = tpu.matmul %56, %59, %cst_74 {dimension_numbers = #tpu.dot_dimension_numbers<[1], [0], [0], [1], [0, 0, 1, 1], [], []>} : vector<14x32xf32>, vector<32x128xf32>, vector<14x128xf32> -> vector<14x128xf32>
    %c0_75 = arith.constant 0 : index
    %c7_76 = arith.constant 7 : index
    %c0_77 = arith.constant 0 : index
    %c0_78 = arith.constant 0 : index
    %61 = vector.load %arg4[%c0_75, %c7_76, %c0_77, %c0_78] : memref<1x14x14x128xf32, #tpu.memory_space<vmem>>, vector<1x1x14x128xf32>
    %62 = vector.shape_cast %61 : vector<1x1x14x128xf32> to vector<14x128xf32>
    %63 = vector.shape_cast %60 : vector<14x128xf32> to vector<1x1x14x128xf32>
    tpu.vector_store %arg4[%c0_75, %c7_76, %c0_77, %c0_78], %63 {strides = array<i32>} : memref<1x14x14x128xf32, #tpu.memory_space<vmem>>, vector<1x1x14x128xf32>,
    %c0_79 = arith.constant 0 : index
    %c0_80 = arith.constant 0 : index
    %64 = vector.load %arg2[%c0_79, %c0_80] : memref<14x32xf32, #tpu.memory_space<vmem>>, vector<14x32xf32>
    %c0_81 = arith.constant 0 : index
    %c8 = arith.constant 8 : index
    %c0_82 = arith.constant 0 : index
    %c0_83 = arith.constant 0 : index
    %65 = vector.load %arg3[%c0_81, %c8, %c0_82, %c0_83] : memref<1x14x32x128xbf16, #tpu.memory_space<vmem>>, vector<1x1x32x128xbf16>
    %66 = vector.shape_cast %65 : vector<1x1x32x128xbf16> to vector<32x128xbf16>
    %67 = arith.extf %66 : vector<32x128xbf16> to vector<32x128xf32>
    %cst_84 = arith.constant dense<0.000000e+00> : vector<14x128xf32>
    %68 = tpu.matmul %64, %67, %cst_84 {dimension_numbers = #tpu.dot_dimension_numbers<[1], [0], [0], [1], [0, 0, 1, 1], [], []>} : vector<14x32xf32>, vector<32x128xf32>, vector<14x128xf32> -> vector<14x128xf32>
    %c0_85 = arith.constant 0 : index
    %c8_86 = arith.constant 8 : index
    %c0_87 = arith.constant 0 : index
    %c0_88 = arith.constant 0 : index
    %69 = vector.load %arg4[%c0_85, %c8_86, %c0_87, %c0_88] : memref<1x14x14x128xf32, #tpu.memory_space<vmem>>, vector<1x1x14x128xf32>
    %70 = vector.shape_cast %69 : vector<1x1x14x128xf32> to vector<14x128xf32>
    %71 = vector.shape_cast %68 : vector<14x128xf32> to vector<1x1x14x128xf32>
    tpu.vector_store %arg4[%c0_85, %c8_86, %c0_87, %c0_88], %71 {strides = array<i32>} : memref<1x14x14x128xf32, #tpu.memory_space<vmem>>, vector<1x1x14x128xf32>,
    %c0_89 = arith.constant 0 : index
    %c0_90 = arith.constant 0 : index
    %72 = vector.load %arg2[%c0_89, %c0_90] : memref<14x32xf32, #tpu.memory_space<vmem>>, vector<14x32xf32>
    %c0_91 = arith.constant 0 : index
    %c9 = arith.constant 9 : index
    %c0_92 = arith.constant 0 : index
    %c0_93 = arith.constant 0 : index
    %73 = vector.load %arg3[%c0_91, %c9, %c0_92, %c0_93] : memref<1x14x32x128xbf16, #tpu.memory_space<vmem>>, vector<1x1x32x128xbf16>
    %74 = vector.shape_cast %73 : vector<1x1x32x128xbf16> to vector<32x128xbf16>
    %75 = arith.extf %74 : vector<32x128xbf16> to vector<32x128xf32>
    %cst_94 = arith.constant dense<0.000000e+00> : vector<14x128xf32>
    %76 = tpu.matmul %72, %75, %cst_94 {dimension_numbers = #tpu.dot_dimension_numbers<[1], [0], [0], [1], [0, 0, 1, 1], [], []>} : vector<14x32xf32>, vector<32x128xf32>, vector<14x128xf32> -> vector<14x128xf32>
    %c0_95 = arith.constant 0 : index
    %c9_96 = arith.constant 9 : index
    %c0_97 = arith.constant 0 : index
    %c0_98 = arith.constant 0 : index
    %77 = vector.load %arg4[%c0_95, %c9_96, %c0_97, %c0_98] : memref<1x14x14x128xf32, #tpu.memory_space<vmem>>, vector<1x1x14x128xf32>
    %78 = vector.shape_cast %77 : vector<1x1x14x128xf32> to vector<14x128xf32>
    %79 = vector.shape_cast %76 : vector<14x128xf32> to vector<1x1x14x128xf32>
    tpu.vector_store %arg4[%c0_95, %c9_96, %c0_97, %c0_98], %79 {strides = array<i32>} : memref<1x14x14x128xf32, #tpu.memory_space<vmem>>, vector<1x1x14x128xf32>,
    %c0_99 = arith.constant 0 : index
    %c0_100 = arith.constant 0 : index
    %80 = vector.load %arg2[%c0_99, %c0_100] : memref<14x32xf32, #tpu.memory_space<vmem>>, vector<14x32xf32>
    %c0_101 = arith.constant 0 : index
    %c10 = arith.constant 10 : index
    %c0_102 = arith.constant 0 : index
    %c0_103 = arith.constant 0 : index
    %81 = vector.load %arg3[%c0_101, %c10, %c0_102, %c0_103] : memref<1x14x32x128xbf16, #tpu.memory_space<vmem>>, vector<1x1x32x128xbf16>
    %82 = vector.shape_cast %81 : vector<1x1x32x128xbf16> to vector<32x128xbf16>
    %83 = arith.extf %82 : vector<32x128xbf16> to vector<32x128xf32>
    %cst_104 = arith.constant dense<0.000000e+00> : vector<14x128xf32>
    %84 = tpu.matmul %80, %83, %cst_104 {dimension_numbers = #tpu.dot_dimension_numbers<[1], [0], [0], [1], [0, 0, 1, 1], [], []>} : vector<14x32xf32>, vector<32x128xf32>, vector<14x128xf32> -> vector<14x128xf32>
    %c0_105 = arith.constant 0 : index
    %c10_106 = arith.constant 10 : index
    %c0_107 = arith.constant 0 : index
    %c0_108 = arith.constant 0 : index
    %85 = vector.load %arg4[%c0_105, %c10_106, %c0_107, %c0_108] : memref<1x14x14x128xf32, #tpu.memory_space<vmem>>, vector<1x1x14x128xf32>
    %86 = vector.shape_cast %85 : vector<1x1x14x128xf32> to vector<14x128xf32>
    %87 = vector.shape_cast %84 : vector<14x128xf32> to vector<1x1x14x128xf32>
    tpu.vector_store %arg4[%c0_105, %c10_106, %c0_107, %c0_108], %87 {strides = array<i32>} : memref<1x14x14x128xf32, #tpu.memory_space<vmem>>, vector<1x1x14x128xf32>,
    %c0_109 = arith.constant 0 : index
    %c0_110 = arith.constant 0 : index
    %88 = vector.load %arg2[%c0_109, %c0_110] : memref<14x32xf32, #tpu.memory_space<vmem>>, vector<14x32xf32>
    %c0_111 = arith.constant 0 : index
    %c11 = arith.constant 11 : index
    %c0_112 = arith.constant 0 : index
    %c0_113 = arith.constant 0 : index
    %89 = vector.load %arg3[%c0_111, %c11, %c0_112, %c0_113] : memref<1x14x32x128xbf16, #tpu.memory_space<vmem>>, vector<1x1x32x128xbf16>
    %90 = vector.shape_cast %89 : vector<1x1x32x128xbf16> to vector<32x128xbf16>
    %91 = arith.extf %90 : vector<32x128xbf16> to vector<32x128xf32>
    %cst_114 = arith.constant dense<0.000000e+00> : vector<14x128xf32>
    %92 = tpu.matmul %88, %91, %cst_114 {dimension_numbers = #tpu.dot_dimension_numbers<[1], [0], [0], [1], [0, 0, 1, 1], [], []>} : vector<14x32xf32>, vector<32x128xf32>, vector<14x128xf32> -> vector<14x128xf32>
    %c0_115 = arith.constant 0 : index
    %c11_116 = arith.constant 11 : index
    %c0_117 = arith.constant 0 : index
    %c0_118 = arith.constant 0 : index
    %93 = vector.load %arg4[%c0_115, %c11_116, %c0_117, %c0_118] : memref<1x14x14x128xf32, #tpu.memory_space<vmem>>, vector<1x1x14x128xf32>
    %94 = vector.shape_cast %93 : vector<1x1x14x128xf32> to vector<14x128xf32>
    %95 = vector.shape_cast %92 : vector<14x128xf32> to vector<1x1x14x128xf32>
    tpu.vector_store %arg4[%c0_115, %c11_116, %c0_117, %c0_118], %95 {strides = array<i32>} : memref<1x14x14x128xf32, #tpu.memory_space<vmem>>, vector<1x1x14x128xf32>,
    %c0_119 = arith.constant 0 : index
    %c0_120 = arith.constant 0 : index
    %96 = vector.load %arg2[%c0_119, %c0_120] : memref<14x32xf32, #tpu.memory_space<vmem>>, vector<14x32xf32>
    %c0_121 = arith.constant 0 : index
    %c12 = arith.constant 12 : index
    %c0_122 = arith.constant 0 : index
    %c0_123 = arith.constant 0 : index
    %97 = vector.load %arg3[%c0_121, %c12, %c0_122, %c0_123] : memref<1x14x32x128xbf16, #tpu.memory_space<vmem>>, vector<1x1x32x128xbf16>
    %98 = vector.shape_cast %97 : vector<1x1x32x128xbf16> to vector<32x128xbf16>
    %99 = arith.extf %98 : vector<32x128xbf16> to vector<32x128xf32>
    %cst_124 = arith.constant dense<0.000000e+00> : vector<14x128xf32>
    %100 = tpu.matmul %96, %99, %cst_124 {dimension_numbers = #tpu.dot_dimension_numbers<[1], [0], [0], [1], [0, 0, 1, 1], [], []>} : vector<14x32xf32>, vector<32x128xf32>, vector<14x128xf32> -> vector<14x128xf32>
    %c0_125 = arith.constant 0 : index
    %c12_126 = arith.constant 12 : index
    %c0_127 = arith.constant 0 : index
    %c0_128 = arith.constant 0 : index
    %101 = vector.load %arg4[%c0_125, %c12_126, %c0_127, %c0_128] : memref<1x14x14x128xf32, #tpu.memory_space<vmem>>, vector<1x1x14x128xf32>
    %102 = vector.shape_cast %101 : vector<1x1x14x128xf32> to vector<14x128xf32>
    %103 = vector.shape_cast %100 : vector<14x128xf32> to vector<1x1x14x128xf32>
    tpu.vector_store %arg4[%c0_125, %c12_126, %c0_127, %c0_128], %103 {strides = array<i32>} : memref<1x14x14x128xf32, #tpu.memory_space<vmem>>, vector<1x1x14x128xf32>,
    %c0_129 = arith.constant 0 : index
    %c0_130 = arith.constant 0 : index
    %104 = vector.load %arg2[%c0_129, %c0_130] : memref<14x32xf32, #tpu.memory_space<vmem>>, vector<14x32xf32>
    %c0_131 = arith.constant 0 : index
    %c13 = arith.constant 13 : index
    %c0_132 = arith.constant 0 : index
    %c0_133 = arith.constant 0 : index
    %105 = vector.load %arg3[%c0_131, %c13, %c0_132, %c0_133] : memref<1x14x32x128xbf16, #tpu.memory_space<vmem>>, vector<1x1x32x128xbf16>
    %106 = vector.shape_cast %105 : vector<1x1x32x128xbf16> to vector<32x128xbf16>
    %107 = arith.extf %106 : vector<32x128xbf16> to vector<32x128xf32>
    %cst_134 = arith.constant dense<0.000000e+00> : vector<14x128xf32>
    %108 = tpu.matmul %104, %107, %cst_134 {dimension_numbers = #tpu.dot_dimension_numbers<[1], [0], [0], [1], [0, 0, 1, 1], [], []>} : vector<14x32xf32>, vector<32x128xf32>, vector<14x128xf32> -> vector<14x128xf32>
    %c0_135 = arith.constant 0 : index
    %c13_136 = arith.constant 13 : index
    %c0_137 = arith.constant 0 : index
    %c0_138 = arith.constant 0 : index
    %109 = vector.load %arg4[%c0_135, %c13_136, %c0_137, %c0_138] : memref<1x14x14x128xf32, #tpu.memory_space<vmem>>, vector<1x1x14x128xf32>
    %110 = vector.shape_cast %109 : vector<1x1x14x128xf32> to vector<14x128xf32>
    %111 = vector.shape_cast %108 : vector<14x128xf32> to vector<1x1x14x128xf32>
    tpu.vector_store %arg4[%c0_135, %c13_136, %c0_137, %c0_138], %111 {strides = array<i32>} : memref<1x14x14x128xf32, #tpu.memory_space<vmem>>, vector<1x1x14x128xf32>,
    return
  }
  func.func @transform_0(%arg0: i32, %arg1: i32) -> (i32, i32) {
    %c0_i32 = arith.constant 0 : i32
    %c0_i32_0 = arith.constant 0 : i32
    %c0_i32_1 = arith.constant 0 : i32
    return %c0_i32, %c0_i32_0 : i32, i32
  }
  func.func @transform_1(%arg0: i32, %arg1: i32) -> (i32, i32, i32, i32) {
    %c0_i32 = arith.constant 0 : i32
    %c0_i32_0 = arith.constant 0 : i32
    %c0_i32_1 = arith.constant 0 : i32
    return %arg0, %c0_i32, %c0_i32_0, %arg1 : i32, i32, i32, i32
  }
  func.func @transform_2(%arg0: i32, %arg1: i32) -> (i32, i32, i32, i32) {
    %c0_i32 = arith.constant 0 : i32
    %c0_i32_0 = arith.constant 0 : i32
    %c0_i32_1 = arith.constant 0 : i32
    return %arg0, %c0_i32, %c0_i32_0, %arg1 : i32, i32, i32, i32
  }
}

</mosaic_0001>

<llo_original>
// kernel: _lambda_.3
$region0: #{_lambda_.3}
  #allocation0 [shape = 'u32[]', space=smem, size = 0x4, offset = 0x4, fixed_abs, tag = 'smem constant byte address 0x4 - core index']
  #allocation1 [shape = 'u32[144,128]{1,0:T(1,128)}', space=vmem, size = 0x12000, scoped, tag = 'internal scratch']
  %s0 = inlined_call_operand.vmem [shape: bf16[2048,32], index: 0, kind: input, shape index: {}]
  %s1 = inlined_call_operand.vmem [shape: bf16[32,128], index: 1, kind: input, shape index: {}]
  %s2 = inlined_call_operand.vmem [shape: bf16[2048,128], index: 2, kind: output, shape index: {}]
  %s3 = sld [smem:[#allocation0]]
  $region41: #{_lambda_.3} parent=0
    _
  %s5 = ssub.s32 1, %s3
  %s6 = scalar_select 0, %s5, %s3
  loop: start=0, step=1, limit=6
  $region2: #{_lambda_.3} parent=0 // loop_pre_header
    _
  $region3: #{_lambda_.3} parent=0 // loop_header
    %s8 = sphi 0, %s12
    %p9 = scmp.ge.s32.totalorder %s8, 6
    %s18 = sphi 0, %s20
    %s21 = sphi 0, %s18
    %s22 = sphi 0, %s21
    %s38 = sphi 0, %s22
    %s42 = sphi 0, %s42
    %s44 = sphi 0, %s42
    %s45 = sphi 0, %s44
    %s59 = sphi 0, %s45
    %s65 = sphi 0, %s67
    %s68 = sphi 0, %s65
    %s69 = sphi 0, %s68
    %s85 = sphi 0, %s69
  $region4: #{_lambda_.3} parent=0 // loop_header_branch
    %11 = sbr.rel (%p9) target = $region8
  $region5: #{_lambda_.3} parent=0 // loop_body
    %s13 = ssub.s32 %s8, 1
    %s14 = ssub.s32 %s8, 2
    %s15 = sadd.s32 %s8, 1
    %s16 = ssub.s32 %s8, %s15
    %p17 = scmp.eq.s32.totalorder %s16, 0
    %s19 = sadd.s32 %s18, 1
    %s20 = scalar_select %p17, %s18, %s19
    %p23 = pneg %p17
    %p24 = scmp.eq.s32.totalorder %s8, 3
    %p25 = por %p23, %p24
    %p26 = scmp.ne.s32.totalorder %s18, %s21
    %p27 = scmp.eq.s32.totalorder %s8, 0
    %p28 = por %p26, %p27
    %p29 = scmp.ne.s32.totalorder %s18, %s21
    %p30 = scmp.eq.s32.totalorder %s13, 3
    %p31 = por %p29, %p30
    %p32 = scmp.ne.s32.totalorder %s21, %s22
    %p33 = scmp.eq.s32.totalorder %s13, 0
    %p34 = por %p32, %p33
    %p35 = scmp.ne.s32.totalorder %s21, %s22
    %p36 = scmp.eq.s32.totalorder %s14, 3
    %p37 = por %p35, %p36
    %p39 = scmp.ne.s32.totalorder %s22, %s38
    %p40 = scmp.eq.s32.totalorder %s14, 0
    %p41 = por %p39, %p40
    %s43 = sadd.s32 %s42, 1
    %p46 = scmp.eq.s32.totalorder %s8, 3
    %p47 = scmp.ne.s32.totalorder %s42, %s44
    %p48 = scmp.eq.s32.totalorder %s8, 0
    %p49 = por %p47, %p48
    %p50 = scmp.ne.s32.totalorder %s42, %s44
    %p51 = scmp.eq.s32.totalorder %s13, 3
    %p52 = por %p50, %p51
    %p53 = scmp.ne.s32.totalorder %s44, %s45
    %p54 = scmp.eq.s32.totalorder %s13, 0
    %p55 = por %p53, %p54
    %p56 = scmp.ne.s32.totalorder %s44, %s45
    %p57 = scmp.eq.s32.totalorder %s14, 3
    %p58 = por %p56, %p57
    %p60 = scmp.ne.s32.totalorder %s45, %s59
    %p61 = scmp.eq.s32.totalorder %s14, 0
    %p62 = por %p60, %p61
    %s63 = ssub.s32 %s8, %s15
    %p64 = scmp.eq.s32.totalorder %s63, 0
    %s66 = sadd.s32 %s65, 1
    %s67 = scalar_select %p64, %s65, %s66
    %p70 = pneg %p64
    %p71 = scmp.eq.s32.totalorder %s8, 3
    %p72 = por %p70, %p71
    %p73 = scmp.ne.s32.totalorder %s65, %s68
    %p74 = scmp.eq.s32.totalorder %s8, 0
    %p75 = por %p73, %p74
    %p76 = scmp.ne.s32.totalorder %s65, %s68
    %p77 = scmp.eq.s32.totalorder %s13, 3
    %p78 = por %p76, %p77
    %p79 = scmp.ne.s32.totalorder %s68, %s69
    %p80 = scmp.eq.s32.totalorder %s13, 0
    %p81 = por %p79, %p80
    %p82 = scmp.ne.s32.totalorder %s68, %s69
    %p83 = scmp.eq.s32.totalorder %s14, 3
    %p84 = por %p82, %p83
    %p86 = scmp.ne.s32.totalorder %s69, %s85
    %p87 = scmp.eq.s32.totalorder %s14, 0
    %p88 = por %p86, %p87
    %p89 = scmp.le.s32.totalorder 1, %s8
    %p90 = scmp.lt.s32.totalorder %s8, 5
    %p91 = pnand %p89, %p90
    %p92 = pneg %p91
    // Predicated region
    $region9: #{_lambda_.3} parent=5 // pred_check
      _
    $region10: #{_lambda_.3} parent=5 // pred_check_branch
      %94 = sbr.rel (%p91) target = $region12
    $region11: #{_lambda_.3} parent=5 // pred_region
      %s95 = ssub.s32 %s8, 1
      // Predicated region
      $region13: #{_lambda_.3} parent=11 // pred_check
        %p96 = pneg %p55
      $region14: #{_lambda_.3} parent=11 // pred_check_branch
        %98 = sbr.rel (%p96) target = $region16
      $region15: #{_lambda_.3} parent=11 // pred_region
        _
      $region16: #{_lambda_.3} parent=11 // pred_fallthru
        _
    $region12: #{_lambda_.3} parent=5 // pred_fallthru
      _
    %p99 = scmp.lt.s32.totalorder %s8, 4
    // Predicated region
    $region17: #{_lambda_.3} parent=5 // pred_check
      %p100 = pneg %p99
    $region18: #{_lambda_.3} parent=5 // pred_check_branch
      %102 = sbr.rel (%p100) target = $region20
    $region19: #{_lambda_.3} parent=5 // pred_region
      // Predicated region
      $region21: #{_lambda_.3} parent=19 // pred_check
        %p103 = pneg %p28
      $region22: #{_lambda_.3} parent=19 // pred_check_branch
        %105 = sbr.rel (%p103) target = $region24
      $region23: #{_lambda_.3} parent=19 // pred_region
        %s106 = smul.u32 64, %s8
        %p107 = scmp.lt.s32.totalorder %s106, 255
        %s108 = scalar_select %p107, %s106, 255
        %s109 = smul.addr %s108, 4
        %s110 = scalar_lea.vmem %s0, %s109
        %s111 = smul.u32 64, %s8
      $region24: #{_lambda_.3} parent=19 // pred_fallthru
        _
    $region20: #{_lambda_.3} parent=5 // pred_fallthru
      _
    %p112 = scmp.le.s32.totalorder 1, %s8
    %p113 = scmp.lt.s32.totalorder %s8, 5
    %p114 = pnand %p112, %p113
    %p115 = pneg %p114
    // Predicated region
    $region25: #{_lambda_.3} parent=5 // pred_check
      _
    $region26: #{_lambda_.3} parent=5 // pred_check_branch
      %117 = sbr.rel (%p114) target = $region28
    $region27: #{_lambda_.3} parent=5 // pred_region
      %s118 = ssub.s32 %s8, 1
      %s119 = smul.u32 64, %s13
      %p120 = scmp.lt.s32.totalorder %s119, 255
      %s121 = scalar_select %p120, %s119, 255
      %s122 = smul.addr %s121, 4
      %s123 = scalar_lea.vmem %s0, %s122
      %p124 = pneg %p34
      %p125 = pneg %p31
      %p126 = pneg %p55
      %p127 = pneg %p52
      %p128 = pneg %p81
      %p129 = pneg %p78
      %s130 = smul.u32 64, %s13
      %p131 = scmp.lt.s32.totalorder %s130, 255
      %s132 = scalar_select %p131, %s130, 255
      %s133 = smul.addr %s132, 4
      %s134 = scalar_lea.vmem %s2, %s133
      %s135 = smul.u32 64, %s13
      %p136 = scmp.lt.s32.totalorder %s135, 255
      %s137 = scalar_select %p136, %s135, 255
      %s138 = smul.addr %s137, 4
      %s139 = scalar_lea.vmem %s0, %s138
      %s140 = smul.u32 64, %s13
      %s141 = smul.u32 64, %s13
      %p142 = scmp.lt.s32.totalorder %s141, 255
      %s143 = scalar_select %p142, %s141, 255
      %s144 = smul.addr %s143, 4
      %s145 = scalar_lea.vmem %s2, %s144
      %s146 = smul.u32 64, %s13
      %v148 = vld [vmem:[%s139] sm:$0xf]
      %v149 = vld [vmem:[%s139 + $0x4] sm:$0xf]
      %v150 = vld [vmem:[%s139 + $0x8] sm:$0xf]
      %v151 = vld [vmem:[%s139 + $0xc] sm:$0xf]
      %v152 = vld [vmem:[%s139 + $0x10] sm:$0xf]
      %v153 = vld [vmem:[%s139 + $0x14] sm:$0xf]
      %v154 = vld [vmem:[%s139 + $0x18] sm:$0xf]
      %v155 = vld [vmem:[%s139 + $0x1c] sm:$0xf]
      %v156 = vld [vmem:[%s139 + $0x20] sm:$0xf]
      %v157 = vld [vmem:[%s139 + $0x24] sm:$0xf]
      %v158 = vld [vmem:[%s139 + $0x28] sm:$0xf]
      %v159 = vld [vmem:[%s139 + $0x2c] sm:$0xf]
      %v160 = vld [vmem:[%s139 + $0x30] sm:$0xf]
      %v161 = vld [vmem:[%s139 + $0x34] sm:$0xf]
      %v162 = vld [vmem:[%s139 + $0x38] sm:$0xf]
      %v163 = vld [vmem:[%s139 + $0x3c] sm:$0xf]
      %v164 = vld [vmem:[%s139 + $0x40] sm:$0xf]
      %v165 = vld [vmem:[%s139 + $0x44] sm:$0xf]
      %v166 = vld [vmem:[%s139 + $0x48] sm:$0xf]
      %v167 = vld [vmem:[%s139 + $0x4c] sm:$0xf]
      %v168 = vld [vmem:[%s139 + $0x50] sm:$0xf]
      %v169 = vld [vmem:[%s139 + $0x54] sm:$0xf]
      %v170 = vld [vmem:[%s139 + $0x58] sm:$0xf]
      %v171 = vld [vmem:[%s139 + $0x5c] sm:$0xf]
      %v172 = vld [vmem:[%s139 + $0x60] sm:$0xf]
      %v173 = vld [vmem:[%s139 + $0x64] sm:$0xf]
      %v174 = vld [vmem:[%s139 + $0x68] sm:$0xf]
      %v175 = vld [vmem:[%s139 + $0x6c] sm:$0xf]
      %v176 = vld [vmem:[%s139 + $0x70] sm:$0xf]
      %v177 = vld [vmem:[%s139 + $0x74] sm:$0xf]
      %v178 = vld [vmem:[%s139 + $0x78] sm:$0xf]
      %v179 = vld [vmem:[%s139 + $0x7c] sm:$0xf]
      %v180 = vld [vmem:[%s139 + $0x80] sm:$0xf]
      %v181 = vld [vmem:[%s139 + $0x84] sm:$0xf]
      %v182 = vld [vmem:[%s139 + $0x88] sm:$0xf]
      %v183 = vld [vmem:[%s139 + $0x8c] sm:$0xf]
      %v184 = vld [vmem:[%s139 + $0x90] sm:$0xf]
      %v185 = vld [vmem:[%s139 + $0x94] sm:$0xf]
      %v186 = vld [vmem:[%s139 + $0x98] sm:$0xf]
      %v187 = vld [vmem:[%s139 + $0x9c] sm:$0xf]
      %v188 = vld [vmem:[%s139 + $0xa0] sm:$0xf]
      %v189 = vld [vmem:[%s139 + $0xa4] sm:$0xf]
      %v190 = vld [vmem:[%s139 + $0xa8] sm:$0xf]
      %v191 = vld [vmem:[%s139 + $0xac] sm:$0xf]
      %v192 = vld [vmem:[%s139 + $0xb0] sm:$0xf]
      %v193 = vld [vmem:[%s139 + $0xb4] sm:$0xf]
      %v194 = vld [vmem:[%s139 + $0xb8] sm:$0xf]
      %v195 = vld [vmem:[%s139 + $0xbc] sm:$0xf]
      %v196 = vld [vmem:[%s139 + $0xc0] sm:$0xf]
      %v197 = vld [vmem:[%s139 + $0xc4] sm:$0xf]
      %v198 = vld [vmem:[%s139 + $0xc8] sm:$0xf]
      %v199 = vld [vmem:[%s139 + $0xcc] sm:$0xf]
      %v200 = vld [vmem:[%s139 + $0xd0] sm:$0xf]
      %v201 = vld [vmem:[%s139 + $0xd4] sm:$0xf]
      %v202 = vld [vmem:[%s139 + $0xd8] sm:$0xf]
      %v203 = vld [vmem:[%s139 + $0xdc] sm:$0xf]
      %v204 = vld [vmem:[%s139 + $0xe0] sm:$0xf]
      %v205 = vld [vmem:[%s139 + $0xe4] sm:$0xf]
      %v206 = vld [vmem:[%s139 + $0xe8] sm:$0xf]
      %v207 = vld [vmem:[%s139 + $0xec] sm:$0xf]
      %v208 = vld [vmem:[%s139 + $0xf0] sm:$0xf]
      %v209 = vld [vmem:[%s139 + $0xf4] sm:$0xf]
      %v210 = vld [vmem:[%s139 + $0xf8] sm:$0xf]
      %v211 = vld [vmem:[%s139 + $0xfc] sm:$0xf]
      %v212 = vld [vmem:[%s1] sm:$0xf]
      %v213 = vld [vmem:[%s1 + $0x4] sm:$0xf]
      %v214 = vld [vmem:[%s1 + $0x8] sm:$0xf]
      %v215 = vld [vmem:[%s1 + $0xc] sm:$0xf]
      %v280 = vunpack.c.l.b16 %v148
      %v281 = vunpack.c.l.b16 %v149
      %v282 = vunpack.c.l.b16 %v150
      %v283 = vunpack.c.l.b16 %v151
      %v284 = vunpack.c.l.b16 %v152
      %v285 = vunpack.c.l.b16 %v153
      %v286 = vunpack.c.l.b16 %v154
      %v287 = vunpack.c.l.b16 %v155
      %v288 = vunpack.c.l.b16 %v156
      %v289 = vunpack.c.l.b16 %v157
      %v290 = vunpack.c.l.b16 %v158
      %v291 = vunpack.c.l.b16 %v159
      %v292 = vunpack.c.l.b16 %v160
      %v293 = vunpack.c.l.b16 %v161
      %v294 = vunpack.c.l.b16 %v162
      %v295 = vunpack.c.l.b16 %v163
      %v296 = vunpack.c.l.b16 %v164
      %v297 = vunpack.c.l.b16 %v165
      %v298 = vunpack.c.l.b16 %v166
      %v299 = vunpack.c.l.b16 %v167
      %v300 = vunpack.c.l.b16 %v168
      %v301 = vunpack.c.l.b16 %v169
      %v302 = vunpack.c.l.b16 %v170
      %v303 = vunpack.c.l.b16 %v171
      %v304 = vunpack.c.l.b16 %v172
      %v305 = vunpack.c.l.b16 %v173
      %v306 = vunpack.c.l.b16 %v174
      %v307 = vunpack.c.l.b16 %v175
      %v308 = vunpack.c.l.b16 %v176
      %v309 = vunpack.c.l.b16 %v177
      %v310 = vunpack.c.l.b16 %v178
      %v311 = vunpack.c.l.b16 %v179
      %v312 = vunpack.c.l.b16 %v180
      %v313 = vunpack.c.l.b16 %v181
      %v314 = vunpack.c.l.b16 %v182
      %v315 = vunpack.c.l.b16 %v183
      %v316 = vunpack.c.l.b16 %v184
      %v317 = vunpack.c.l.b16 %v185
      %v318 = vunpack.c.l.b16 %v186
      %v319 = vunpack.c.l.b16 %v187
      %v320 = vunpack.c.l.b16 %v188
      %v321 = vunpack.c.l.b16 %v189
      %v322 = vunpack.c.l.b16 %v190
      %v323 = vunpack.c.l.b16 %v191
      %v324 = vunpack.c.l.b16 %v192
      %v325 = vunpack.c.l.b16 %v193
      %v326 = vunpack.c.l.b16 %v194
      %v327 = vunpack.c.l.b16 %v195
      %v328 = vunpack.c.l.b16 %v196
      %v329 = vunpack.c.l.b16 %v197
      %v330 = vunpack.c.l.b16 %v198
      %v331 = vunpack.c.l.b16 %v199
      %v332 = vunpack.c.l.b16 %v200
      %v333 = vunpack.c.l.b16 %v201
      %v334 = vunpack.c.l.b16 %v202
      %v335 = vunpack.c.l.b16 %v203
      %v336 = vunpack.c.l.b16 %v204
      %v337 = vunpack.c.l.b16 %v205
      %v338 = vunpack.c.l.b16 %v206
      %v339 = vunpack.c.l.b16 %v207
      %v340 = vunpack.c.l.b16 %v208
      %v341 = vunpack.c.l.b16 %v209
      %v342 = vunpack.c.l.b16 %v210
      %v343 = vunpack.c.l.b16 %v211
      %v344 = vpack.c.b16 %v281, %v280
      %v345 = vpack.c.b16 %v283, %v282
      %v346 = vpack.c.b16 %v285, %v284
      %v347 = vpack.c.b16 %v287, %v286
      %v348 = vpack.c.b16 %v289, %v288
      %v349 = vpack.c.b16 %v291, %v290
      %v350 = vpack.c.b16 %v293, %v292
      %v351 = vpack.c.b16 %v295, %v294
      %v352 = vpack.c.b16 %v297, %v296
      %v353 = vpack.c.b16 %v299, %v298
      %v354 = vpack.c.b16 %v301, %v300
      %v355 = vpack.c.b16 %v303, %v302
      %v356 = vpack.c.b16 %v305, %v304
      %v357 = vpack.c.b16 %v307, %v306
      %v358 = vpack.c.b16 %v309, %v308
      %v359 = vpack.c.b16 %v311, %v310
      %v360 = vpack.c.b16 %v313, %v312
      %v361 = vpack.c.b16 %v315, %v314
      %v362 = vpack.c.b16 %v317, %v316
      %v363 = vpack.c.b16 %v319, %v318
      %v364 = vpack.c.b16 %v321, %v320
      %v365 = vpack.c.b16 %v323, %v322
      %v366 = vpack.c.b16 %v325, %v324
      %v367 = vpack.c.b16 %v327, %v326
      %v368 = vpack.c.b16 %v329, %v328
      %v369 = vpack.c.b16 %v331, %v330
      %v370 = vpack.c.b16 %v333, %v332
      %v371 = vpack.c.b16 %v335, %v334
      %v372 = vpack.c.b16 %v337, %v336
      %v373 = vpack.c.b16 %v339, %v338
      %v374 = vpack.c.b16 %v341, %v340
      %v375 = vpack.c.b16 %v343, %v342
      %v380 = vunpack.c.l.b16 %v212
      %v381 = vunpack.c.l.b16 %v213
      %v382 = vunpack.c.l.b16 %v214
      %v383 = vunpack.c.l.b16 %v215
      %v384 = vpack.c.b16 %v381, %v380
      %v385 = vpack.c.b16 %v383, %v382
      %vm388 = vcmask 261120
      %v390 = vsel %vm388, %v344, 0
      %v393 = vsel %vm388, %v345, 0
      %v396 = vsel %vm388, %v346, 0
      %v399 = vsel %vm388, %v347, 0
      %v402 = vsel %vm388, %v348, 0
      %v405 = vsel %vm388, %v349, 0
      %v408 = vsel %vm388, %v350, 0
      %v411 = vsel %vm388, %v351, 0
      %v414 = vsel %vm388, %v352, 0
      %v417 = vsel %vm388, %v353, 0
      %v420 = vsel %vm388, %v354, 0
      %v423 = vsel %vm388, %v355, 0
      %v426 = vsel %vm388, %v356, 0
      %v429 = vsel %vm388, %v357, 0
      %v432 = vsel %vm388, %v358, 0
      %v435 = vsel %vm388, %v359, 0
      %v438 = vsel %vm388, %v360, 0
      %v441 = vsel %vm388, %v361, 0
      %v444 = vsel %vm388, %v362, 0
      %v447 = vsel %vm388, %v363, 0
      %v450 = vsel %vm388, %v364, 0
      %v453 = vsel %vm388, %v365, 0
      %v456 = vsel %vm388, %v366, 0
      %v459 = vsel %vm388, %v367, 0
      %v462 = vsel %vm388, %v368, 0
      %v465 = vsel %vm388, %v369, 0
      %v468 = vsel %vm388, %v370, 0
      %v471 = vsel %vm388, %v371, 0
      %v474 = vsel %vm388, %v372, 0
      %v477 = vsel %vm388, %v373, 0
      %v480 = vsel %vm388, %v374, 0
      %v483 = vsel %vm388, %v375, 0
      %485 = vmatprep.subr.bf16.mxu0 0
      %486 = vmatpush1.bf16.msra.mxu0 0
      %487 = vmatprep.subr.bf16.mxu0 0
      %488 = vmatpush1.bf16.msra.mxu0 0
      %489 = vmatprep.subr.bf16.mxu0 0
      %490 = vmatpush1.bf16.msra.mxu0 0
      %491 = vmatprep.subr.bf16.mxu0 0
      %492 = vmatpush1.bf16.msra.mxu0 0
      %493 = vmatprep.subr.bf16.mxu0 0
      %494 = vmatpush1.bf16.msra.mxu0 0
      %495 = vmatprep.subr.bf16.mxu0 0
      %496 = vmatpush1.bf16.msra.mxu0 0
      %497 = vmatprep.subr.bf16.mxu0 0
      %498 = vmatpush1.bf16.msra.mxu0 %v385
      %499 = vmatprep.subr.bf16.mxu0 0
      %500 = vmatpush1.bf16.msra.mxu0 %v384
      %501 = vmatprep.subr.bf16.mxu0 0
      %502 = vmatpush2.bf16.msra.mxu0 0
      %503 = vmatprep.subr.bf16.mxu0 0
      %504 = vmatpush2.bf16.msra.mxu0 0
      %505 = vmatprep.subr.bf16.mxu0 0
      %506 = vmatpush2.bf16.msra.mxu0 0
      %507 = vmatprep.subr.bf16.mxu0 0
      %508 = vmatpush2.bf16.msra.mxu0 0
      %509 = vmatprep.subr.bf16.mxu0 0
      %510 = vmatpush2.bf16.msra.mxu0 0
      %511 = vmatprep.subr.bf16.mxu0 0
      %512 = vmatpush2.bf16.msra.mxu0 0
      %513 = vmatprep.subr.bf16.mxu0 0
      %514 = vmatpush2.bf16.msra.mxu0 0
      %515 = vmatprep.subr.bf16.mxu0 0
      %516 = vmatpush2.bf16.msra.mxu0 0
      %517 = vmatprep.mubr.bf16.mxu0 0
      %518 = vmatmul.mubr.bf16.gmra.mxu0 %v390
      %v519 = vpop.f32.mrf.mxu0
      %v520 = vadd.f32 0.0, %v519
      %v521 = vpop.f32.mrf.mxu0
      %v522 = vpop.f32.mrf.mxu0
      %v523 = vadd.f32 0.0, %v522
      %v524 = vpop.f32.mrf.mxu0
      %525 = vmatprep.mubr.bf16.mxu0 0
      %526 = vmatmul.mubr.bf16.gmra.mxu0 %v393
      %v527 = vpop.f32.mrf.mxu0
      %v528 = vadd.f32 0.0, %v527
      %v529 = vpop.f32.mrf.mxu0
      %v530 = vpop.f32.mrf.mxu0
      %v531 = vadd.f32 0.0, %v530
      %v532 = vpop.f32.mrf.mxu0
      %533 = vmatprep.mubr.bf16.mxu0 0
      %534 = vmatmul.mubr.bf16.gmra.mxu0 %v396
      %v535 = vpop.f32.mrf.mxu0
      %v536 = vadd.f32 0.0, %v535
      %v537 = vpop.f32.mrf.mxu0
      %v538 = vpop.f32.mrf.mxu0
      %v539 = vadd.f32 0.0, %v538
      %v540 = vpop.f32.mrf.mxu0
      %541 = vmatprep.mubr.bf16.mxu0 0
      %542 = vmatmul.mubr.bf16.gmra.mxu0 %v399
      %v543 = vpop.f32.mrf.mxu0
      %v544 = vadd.f32 0.0, %v543
      %v545 = vpop.f32.mrf.mxu0
      %v546 = vpop.f32.mrf.mxu0
      %v547 = vadd.f32 0.0, %v546
      %v548 = vpop.f32.mrf.mxu0
      %549 = vmatprep.mubr.bf16.mxu0 0
      %550 = vmatmul.mubr.bf16.gmra.mxu0 %v402
      %v551 = vpop.f32.mrf.mxu0
      %v552 = vadd.f32 0.0, %v551
      %v553 = vpop.f32.mrf.mxu0
      %v554 = vpop.f32.mrf.mxu0
      %v555 = vadd.f32 0.0, %v554
      %v556 = vpop.f32.mrf.mxu0
      %557 = vmatprep.mubr.bf16.mxu0 0
      %558 = vmatmul.mubr.bf16.gmra.mxu0 %v405
      %v559 = vpop.f32.mrf.mxu0
      %v560 = vadd.f32 0.0, %v559
      %v561 = vpop.f32.mrf.mxu0
      %v562 = vpop.f32.mrf.mxu0
      %v563 = vadd.f32 0.0, %v562
      %v564 = vpop.f32.mrf.mxu0
      %565 = vmatprep.mubr.bf16.mxu0 0
      %566 = vmatmul.mubr.bf16.gmra.mxu0 %v408
      %v567 = vpop.f32.mrf.mxu0
      %v568 = vadd.f32 0.0, %v567
      %v569 = vpop.f32.mrf.mxu0
      %v570 = vpop.f32.mrf.mxu0
      %v571 = vadd.f32 0.0, %v570
      %v572 = vpop.f32.mrf.mxu0
      %573 = vmatprep.mubr.bf16.mxu0 0
      %574 = vmatmul.mubr.bf16.gmra.mxu0 %v411
      %v575 = vpop.f32.mrf.mxu0
      %v576 = vadd.f32 0.0, %v575
      %v577 = vpop.f32.mrf.mxu0
      %v578 = vpop.f32.mrf.mxu0
      %v579 = vadd.f32 0.0, %v578
      %v580 = vpop.f32.mrf.mxu0
      %581 = vmatprep.mubr.bf16.mxu0 0
      %582 = vmatmul.mubr.bf16.gmra.mxu0 %v414
      %v583 = vpop.f32.mrf.mxu0
      %v584 = vadd.f32 0.0, %v583
      %v585 = vpop.f32.mrf.mxu0
      %v586 = vpop.f32.mrf.mxu0
      %v587 = vadd.f32 0.0, %v586
      %v588 = vpop.f32.mrf.mxu0
      %589 = vmatprep.mubr.bf16.mxu0 0
      %590 = vmatmul.mubr.bf16.gmra.mxu0 %v417
      %v591 = vpop.f32.mrf.mxu0
      %v592 = vadd.f32 0.0, %v591
      %v593 = vpop.f32.mrf.mxu0
      %v594 = vpop.f32.mrf.mxu0
      %v595 = vadd.f32 0.0, %v594
      %v596 = vpop.f32.mrf.mxu0
      %597 = vmatprep.mubr.bf16.mxu0 0
      %598 = vmatmul.mubr.bf16.gmra.mxu0 %v420
      %v599 = vpop.f32.mrf.mxu0
      %v600 = vadd.f32 0.0, %v599
      %v601 = vpop.f32.mrf.mxu0
      %v602 = vpop.f32.mrf.mxu0
      %v603 = vadd.f32 0.0, %v602
      %v604 = vpop.f32.mrf.mxu0
      %605 = vmatprep.mubr.bf16.mxu0 0
      %606 = vmatmul.mubr.bf16.gmra.mxu0 %v423
      %v607 = vpop.f32.mrf.mxu0
      %v608 = vadd.f32 0.0, %v607
      %v609 = vpop.f32.mrf.mxu0
      %v610 = vpop.f32.mrf.mxu0
      %v611 = vadd.f32 0.0, %v610
      %v612 = vpop.f32.mrf.mxu0
      %613 = vmatprep.mubr.bf16.mxu0 0
      %614 = vmatmul.mubr.bf16.gmra.mxu0 %v426
      %v615 = vpop.f32.mrf.mxu0
      %v616 = vadd.f32 0.0, %v615
      %v617 = vpop.f32.mrf.mxu0
      %v618 = vpop.f32.mrf.mxu0
      %v619 = vadd.f32 0.0, %v618
      %v620 = vpop.f32.mrf.mxu0
      %621 = vmatprep.mubr.bf16.mxu0 0
      %622 = vmatmul.mubr.bf16.gmra.mxu0 %v429
      %v623 = vpop.f32.mrf.mxu0
      %v624 = vadd.f32 0.0, %v623
      %v625 = vpop.f32.mrf.mxu0
      %v626 = vpop.f32.mrf.mxu0
      %v627 = vadd.f32 0.0, %v626
      %v628 = vpop.f32.mrf.mxu0
      %629 = vmatprep.mubr.bf16.mxu0 0
      %630 = vmatmul.mubr.bf16.gmra.mxu0 %v432
      %v631 = vpop.f32.mrf.mxu0
      %v632 = vadd.f32 0.0, %v631
      %v633 = vpop.f32.mrf.mxu0
      %v634 = vpop.f32.mrf.mxu0
      %v635 = vadd.f32 0.0, %v634
      %v636 = vpop.f32.mrf.mxu0
      %637 = vmatprep.mubr.bf16.mxu0 0
      %638 = vmatmul.mubr.bf16.gmra.mxu0 %v435
      %v639 = vpop.f32.mrf.mxu0
      %v640 = vadd.f32 0.0, %v639
      %v641 = vpop.f32.mrf.mxu0
      %v642 = vpop.f32.mrf.mxu0
      %v643 = vadd.f32 0.0, %v642
      %v644 = vpop.f32.mrf.mxu0
      %645 = vmatprep.mubr.bf16.mxu0 0
      %646 = vmatmul.mubr.bf16.gmra.mxu0 %v438
      %v647 = vpop.f32.mrf.mxu0
      %v648 = vadd.f32 0.0, %v647
      %v649 = vpop.f32.mrf.mxu0
      %v650 = vpop.f32.mrf.mxu0
      %v651 = vadd.f32 0.0, %v650
      %v652 = vpop.f32.mrf.mxu0
      %653 = vmatprep.mubr.bf16.mxu0 0
      %654 = vmatmul.mubr.bf16.gmra.mxu0 %v441
      %v655 = vpop.f32.mrf.mxu0
      %v656 = vadd.f32 0.0, %v655
      %v657 = vpop.f32.mrf.mxu0
      %v658 = vpop.f32.mrf.mxu0
      %v659 = vadd.f32 0.0, %v658
      %v660 = vpop.f32.mrf.mxu0
      %661 = vmatprep.mubr.bf16.mxu0 0
      %662 = vmatmul.mubr.bf16.gmra.mxu0 %v444
      %v663 = vpop.f32.mrf.mxu0
      %v664 = vadd.f32 0.0, %v663
      %v665 = vpop.f32.mrf.mxu0
      %v666 = vpop.f32.mrf.mxu0
      %v667 = vadd.f32 0.0, %v666
      %v668 = vpop.f32.mrf.mxu0
      %669 = vmatprep.mubr.bf16.mxu0 0
      %670 = vmatmul.mubr.bf16.gmra.mxu0 %v447
      %v671 = vpop.f32.mrf.mxu0
      %v672 = vadd.f32 0.0, %v671
      %v673 = vpop.f32.mrf.mxu0
      %v674 = vpop.f32.mrf.mxu0
      %v675 = vadd.f32 0.0, %v674
      %v676 = vpop.f32.mrf.mxu0
      %677 = vmatprep.mubr.bf16.mxu0 0
      %678 = vmatmul.mubr.bf16.gmra.mxu0 %v450
      %v679 = vpop.f32.mrf.mxu0
      %v680 = vadd.f32 0.0, %v679
      %v681 = vpop.f32.mrf.mxu0
      %v682 = vpop.f32.mrf.mxu0
      %v683 = vadd.f32 0.0, %v682
      %v684 = vpop.f32.mrf.mxu0
      %685 = vmatprep.mubr.bf16.mxu0 0
      %686 = vmatmul.mubr.bf16.gmra.mxu0 %v453
      %v687 = vpop.f32.mrf.mxu0
      %v688 = vadd.f32 0.0, %v687
      %v689 = vpop.f32.mrf.mxu0
      %v690 = vpop.f32.mrf.mxu0
      %v691 = vadd.f32 0.0, %v690
      %v692 = vpop.f32.mrf.mxu0
      %693 = vmatprep.mubr.bf16.mxu0 0
      %694 = vmatmul.mubr.bf16.gmra.mxu0 %v456
      %v695 = vpop.f32.mrf.mxu0
      %v696 = vadd.f32 0.0, %v695
      %v697 = vpop.f32.mrf.mxu0
      %v698 = vpop.f32.mrf.mxu0
      %v699 = vadd.f32 0.0, %v698
      %v700 = vpop.f32.mrf.mxu0
      %701 = vmatprep.mubr.bf16.mxu0 0
      %702 = vmatmul.mubr.bf16.gmra.mxu0 %v459
      %v703 = vpop.f32.mrf.mxu0
      %v704 = vadd.f32 0.0, %v703
      %v705 = vpop.f32.mrf.mxu0
      %v706 = vpop.f32.mrf.mxu0
      %v707 = vadd.f32 0.0, %v706
      %v708 = vpop.f32.mrf.mxu0
      %709 = vmatprep.mubr.bf16.mxu0 0
      %710 = vmatmul.mubr.bf16.gmra.mxu0 %v462
      %v711 = vpop.f32.mrf.mxu0
      %v712 = vadd.f32 0.0, %v711
      %v713 = vpop.f32.mrf.mxu0
      %v714 = vpop.f32.mrf.mxu0
      %v715 = vadd.f32 0.0, %v714
      %v716 = vpop.f32.mrf.mxu0
      %717 = vmatprep.mubr.bf16.mxu0 0
      %718 = vmatmul.mubr.bf16.gmra.mxu0 %v465
      %v719 = vpop.f32.mrf.mxu0
      %v720 = vadd.f32 0.0, %v719
      %v721 = vpop.f32.mrf.mxu0
      %v722 = vpop.f32.mrf.mxu0
      %v723 = vadd.f32 0.0, %v722
      %v724 = vpop.f32.mrf.mxu0
      %725 = vmatprep.mubr.bf16.mxu0 0
      %726 = vmatmul.mubr.bf16.gmra.mxu0 %v468
      %v727 = vpop.f32.mrf.mxu0
      %v728 = vadd.f32 0.0, %v727
      %v729 = vpop.f32.mrf.mxu0
      %v730 = vpop.f32.mrf.mxu0
      %v731 = vadd.f32 0.0, %v730
      %v732 = vpop.f32.mrf.mxu0
      %733 = vmatprep.mubr.bf16.mxu0 0
      %734 = vmatmul.mubr.bf16.gmra.mxu0 %v471
      %v735 = vpop.f32.mrf.mxu0
      %v736 = vadd.f32 0.0, %v735
      %v737 = vpop.f32.mrf.mxu0
      %v738 = vpop.f32.mrf.mxu0
      %v739 = vadd.f32 0.0, %v738
      %v740 = vpop.f32.mrf.mxu0
      %741 = vmatprep.mubr.bf16.mxu0 0
      %742 = vmatmul.mubr.bf16.gmra.mxu0 %v474
      %v743 = vpop.f32.mrf.mxu0
      %v744 = vadd.f32 0.0, %v743
      %v745 = vpop.f32.mrf.mxu0
      %v746 = vpop.f32.mrf.mxu0
      %v747 = vadd.f32 0.0, %v746
      %v748 = vpop.f32.mrf.mxu0
      %749 = vmatprep.mubr.bf16.mxu0 0
      %750 = vmatmul.mubr.bf16.gmra.mxu0 %v477
      %v751 = vpop.f32.mrf.mxu0
      %v752 = vadd.f32 0.0, %v751
      %v753 = vpop.f32.mrf.mxu0
      %v754 = vpop.f32.mrf.mxu0
      %v755 = vadd.f32 0.0, %v754
      %v756 = vpop.f32.mrf.mxu0
      %757 = vmatprep.mubr.bf16.mxu0 0
      %758 = vmatmul.mubr.bf16.gmra.mxu0 %v480
      %v759 = vpop.f32.mrf.mxu0
      %v760 = vadd.f32 0.0, %v759
      %v761 = vpop.f32.mrf.mxu0
      %v762 = vpop.f32.mrf.mxu0
      %v763 = vadd.f32 0.0, %v762
      %v764 = vpop.f32.mrf.mxu0
      %765 = vmatprep.mubr.bf16.mxu0 0
      %766 = vmatmul.mubr.bf16.gmra.mxu0 %v483
      %v767 = vpop.f32.mrf.mxu0
      %v768 = vadd.f32 0.0, %v767
      %v769 = vpop.f32.mrf.mxu0
      %v770 = vpop.f32.mrf.mxu0
      %v771 = vadd.f32 0.0, %v770
      %v772 = vpop.f32.mrf.mxu0
      %773 = vdwg.mxu0
      %v774 = vmax.f32 %v520, 0.0
      %v775 = vmax.f32 %v523, 0.0
      %v776 = vmax.f32 %v528, 0.0
      %v777 = vmax.f32 %v531, 0.0
      %v778 = vmax.f32 %v536, 0.0
      %v779 = vmax.f32 %v539, 0.0
      %v780 = vmax.f32 %v544, 0.0
      %v781 = vmax.f32 %v547, 0.0
      %v782 = vmax.f32 %v552, 0.0
      %v783 = vmax.f32 %v555, 0.0
      %v784 = vmax.f32 %v560, 0.0
      %v785 = vmax.f32 %v563, 0.0
      %v786 = vmax.f32 %v568, 0.0
      %v787 = vmax.f32 %v571, 0.0
      %v788 = vmax.f32 %v576, 0.0
      %v789 = vmax.f32 %v579, 0.0
      %v790 = vmax.f32 %v584, 0.0
      %v791 = vmax.f32 %v587, 0.0
      %v792 = vmax.f32 %v592, 0.0
      %v793 = vmax.f32 %v595, 0.0
      %v794 = vmax.f32 %v600, 0.0
      %v795 = vmax.f32 %v603, 0.0
      %v796 = vmax.f32 %v608, 0.0
      %v797 = vmax.f32 %v611, 0.0
      %v798 = vmax.f32 %v616, 0.0
      %v799 = vmax.f32 %v619, 0.0
      %v800 = vmax.f32 %v624, 0.0
      %v801 = vmax.f32 %v627, 0.0
      %v802 = vmax.f32 %v632, 0.0
      %v803 = vmax.f32 %v635, 0.0
      %v804 = vmax.f32 %v640, 0.0
      %v805 = vmax.f32 %v643, 0.0
      %v806 = vmax.f32 %v648, 0.0
      %v807 = vmax.f32 %v651, 0.0
      %v808 = vmax.f32 %v656, 0.0
      %v809 = vmax.f32 %v659, 0.0
      %v810 = vmax.f32 %v664, 0.0
      %v811 = vmax.f32 %v667, 0.0
      %v812 = vmax.f32 %v672, 0.0
      %v813 = vmax.f32 %v675, 0.0
      %v814 = vmax.f32 %v680, 0.0
      %v815 = vmax.f32 %v683, 0.0
      %v816 = vmax.f32 %v688, 0.0
      %v817 = vmax.f32 %v691, 0.0
      %v818 = vmax.f32 %v696, 0.0
      %v819 = vmax.f32 %v699, 0.0
      %v820 = vmax.f32 %v704, 0.0
      %v821 = vmax.f32 %v707, 0.0
      %v822 = vmax.f32 %v712, 0.0
      %v823 = vmax.f32 %v715, 0.0
      %v824 = vmax.f32 %v720, 0.0
      %v825 = vmax.f32 %v723, 0.0
      %v826 = vmax.f32 %v728, 0.0
      %v827 = vmax.f32 %v731, 0.0
      %v828 = vmax.f32 %v736, 0.0
      %v829 = vmax.f32 %v739, 0.0
      %v830 = vmax.f32 %v744, 0.0
      %v831 = vmax.f32 %v747, 0.0
      %v832 = vmax.f32 %v752, 0.0
      %v833 = vmax.f32 %v755, 0.0
      %v834 = vmax.f32 %v760, 0.0
      %v835 = vmax.f32 %v763, 0.0
      %v836 = vmax.f32 %v768, 0.0
      %v837 = vmax.f32 %v771, 0.0
      %v838 = vpack.c.bf16 %v775, %v774
      %v839 = vpack.c.bf16 %v777, %v776
      %v840 = vpack.c.bf16 %v779, %v778
      %v841 = vpack.c.bf16 %v781, %v780
      %v842 = vpack.c.bf16 %v783, %v782
      %v843 = vpack.c.bf16 %v785, %v784
      %v844 = vpack.c.bf16 %v787, %v786
      %v845 = vpack.c.bf16 %v789, %v788
      %v846 = vpack.c.bf16 %v791, %v790
      %v847 = vpack.c.bf16 %v793, %v792
      %v848 = vpack.c.bf16 %v795, %v794
      %v849 = vpack.c.bf16 %v797, %v796
      %v850 = vpack.c.bf16 %v799, %v798
      %v851 = vpack.c.bf16 %v801, %v800
      %v852 = vpack.c.bf16 %v803, %v802
      %v853 = vpack.c.bf16 %v805, %v804
      %v854 = vpack.c.bf16 %v807, %v806
      %v855 = vpack.c.bf16 %v809, %v808
      %v856 = vpack.c.bf16 %v811, %v810
      %v857 = vpack.c.bf16 %v813, %v812
      %v858 = vpack.c.bf16 %v815, %v814
      %v859 = vpack.c.bf16 %v817, %v816
      %v860 = vpack.c.bf16 %v819, %v818
      %v861 = vpack.c.bf16 %v821, %v820
      %v862 = vpack.c.bf16 %v823, %v822
      %v863 = vpack.c.bf16 %v825, %v824
      %v864 = vpack.c.bf16 %v827, %v826
      %v865 = vpack.c.bf16 %v829, %v828
      %v866 = vpack.c.bf16 %v831, %v830
      %v867 = vpack.c.bf16 %v833, %v832
      %v868 = vpack.c.bf16 %v835, %v834
      %v869 = vpack.c.bf16 %v837, %v836
      %v902 = vunpack.c.l.b16 %v838
      %v903 = vunpack.c.h.b16 %v838
      %v904 = vunpack.c.l.b16 %v839
      %v905 = vunpack.c.h.b16 %v839
      %v906 = vunpack.c.l.b16 %v840
      %v907 = vunpack.c.h.b16 %v840
      %v908 = vunpack.c.l.b16 %v841
      %v909 = vunpack.c.h.b16 %v841
      %v910 = vunpack.c.l.b16 %v842
      %v911 = vunpack.c.h.b16 %v842
      %v912 = vunpack.c.l.b16 %v843
      %v913 = vunpack.c.h.b16 %v843
      %v914 = vunpack.c.l.b16 %v844
      %v915 = vunpack.c.h.b16 %v844
      %v916 = vunpack.c.l.b16 %v845
      %v917 = vunpack.c.h.b16 %v845
      %v918 = vunpack.c.l.b16 %v846
      %v919 = vunpack.c.h.b16 %v846
      %v920 = vunpack.c.l.b16 %v847
      %v921 = vunpack.c.h.b16 %v847
      %v922 = vunpack.c.l.b16 %v848
      %v923 = vunpack.c.h.b16 %v848
      %v924 = vunpack.c.l.b16 %v849
      %v925 = vunpack.c.h.b16 %v849
      %v926 = vunpack.c.l.b16 %v850
      %v927 = vunpack.c.h.b16 %v850
      %v928 = vunpack.c.l.b16 %v851
      %v929 = vunpack.c.h.b16 %v851
      %v930 = vunpack.c.l.b16 %v852
      %v931 = vunpack.c.h.b16 %v852
      %v932 = vunpack.c.l.b16 %v853
      %v933 = vunpack.c.h.b16 %v853
      %v934 = vunpack.c.l.b16 %v854
      %v935 = vunpack.c.h.b16 %v854
      %v936 = vunpack.c.l.b16 %v855
      %v937 = vunpack.c.h.b16 %v855
      %v938 = vunpack.c.l.b16 %v856
      %v939 = vunpack.c.h.b16 %v856
      %v940 = vunpack.c.l.b16 %v857
      %v941 = vunpack.c.h.b16 %v857
      %v942 = vunpack.c.l.b16 %v858
      %v943 = vunpack.c.h.b16 %v858
      %v944 = vunpack.c.l.b16 %v859
      %v945 = vunpack.c.h.b16 %v859
      %v946 = vunpack.c.l.b16 %v860
      %v947 = vunpack.c.h.b16 %v860
      %v948 = vunpack.c.l.b16 %v861
      %v949 = vunpack.c.h.b16 %v861
      %v950 = vunpack.c.l.b16 %v862
      %v951 = vunpack.c.h.b16 %v862
      %v952 = vunpack.c.l.b16 %v863
      %v953 = vunpack.c.h.b16 %v863
      %v954 = vunpack.c.l.b16 %v864
      %v955 = vunpack.c.h.b16 %v864
      %v956 = vunpack.c.l.b16 %v865
      %v957 = vunpack.c.h.b16 %v865
      %v958 = vunpack.c.l.b16 %v866
      %v959 = vunpack.c.h.b16 %v866
      %v960 = vunpack.c.l.b16 %v867
      %v961 = vunpack.c.h.b16 %v867
      %v962 = vunpack.c.l.b16 %v868
      %v963 = vunpack.c.h.b16 %v868
      %v964 = vunpack.c.l.b16 %v869
      %v965 = vunpack.c.h.b16 %v869
      %v966 = vpack.c.b16 %v902, %v902
      %v967 = vpack.c.b16 %v903, %v903
      %v968 = vpack.c.b16 %v904, %v904
      %v969 = vpack.c.b16 %v905, %v905
      %v970 = vpack.c.b16 %v906, %v906
      %v971 = vpack.c.b16 %v907, %v907
      %v972 = vpack.c.b16 %v908, %v908
      %v973 = vpack.c.b16 %v909, %v909
      %v974 = vpack.c.b16 %v910, %v910
      %v975 = vpack.c.b16 %v911, %v911
      %v976 = vpack.c.b16 %v912, %v912
      %v977 = vpack.c.b16 %v913, %v913
      %v978 = vpack.c.b16 %v914, %v914
      %v979 = vpack.c.b16 %v915, %v915
      %v980 = vpack.c.b16 %v916, %v916
      %v981 = vpack.c.b16 %v917, %v917
      %v982 = vpack.c.b16 %v918, %v918
      %v983 = vpack.c.b16 %v919, %v919
      %v984 = vpack.c.b16 %v920, %v920
      %v985 = vpack.c.b16 %v921, %v921
      %v986 = vpack.c.b16 %v922, %v922
      %v987 = vpack.c.b16 %v923, %v923
      %v988 = vpack.c.b16 %v924, %v924
      %v989 = vpack.c.b16 %v925, %v925
      %v990 = vpack.c.b16 %v926, %v926
      %v991 = vpack.c.b16 %v927, %v927
      %v992 = vpack.c.b16 %v928, %v928
      %v993 = vpack.c.b16 %v929, %v929
      %v994 = vpack.c.b16 %v930, %v930
      %v995 = vpack.c.b16 %v931, %v931
      %v996 = vpack.c.b16 %v932, %v932
      %v997 = vpack.c.b16 %v933, %v933
      %v998 = vpack.c.b16 %v934, %v934
      %v999 = vpack.c.b16 %v935, %v935
      %v1000 = vpack.c.b16 %v936, %v936
      %v1001 = vpack.c.b16 %v937, %v937
      %v1002 = vpack.c.b16 %v938, %v938
      %v1003 = vpack.c.b16 %v939, %v939
      %v1004 = vpack.c.b16 %v940, %v940
      %v1005 = vpack.c.b16 %v941, %v941
      %v1006 = vpack.c.b16 %v942, %v942
      %v1007 = vpack.c.b16 %v943, %v943
      %v1008 = vpack.c.b16 %v944, %v944
      %v1009 = vpack.c.b16 %v945, %v945
      %v1010 = vpack.c.b16 %v946, %v946
      %v1011 = vpack.c.b16 %v947, %v947
      %v1012 = vpack.c.b16 %v948, %v948
      %v1013 = vpack.c.b16 %v949, %v949
      %v1014 = vpack.c.b16 %v950, %v950
      %v1015 = vpack.c.b16 %v951, %v951
      %v1016 = vpack.c.b16 %v952, %v952
      %v1017 = vpack.c.b16 %v953, %v953
      %v1018 = vpack.c.b16 %v954, %v954
      %v1019 = vpack.c.b16 %v955, %v955
      %v1020 = vpack.c.b16 %v956, %v956
      %v1021 = vpack.c.b16 %v957, %v957
      %v1022 = vpack.c.b16 %v958, %v958
      %v1023 = vpack.c.b16 %v959, %v959
      %v1024 = vpack.c.b16 %v960, %v960
      %v1025 = vpack.c.b16 %v961, %v961
      %v1026 = vpack.c.b16 %v962, %v962
      %v1027 = vpack.c.b16 %v963, %v963
      %v1028 = vpack.c.b16 %v964, %v964
      %v1029 = vpack.c.b16 %v965, %v965
      %1094 = vst [vmem:[%s145] sm:$0xf] %v966
      %1095 = vst [vmem:[%s145 + $0x4] sm:$0xf] %v967
      %1096 = vst [vmem:[%s145 + $0x8] sm:$0xf] %v968
      %1097 = vst [vmem:[%s145 + $0xc] sm:$0xf] %v969
      %1098 = vst [vmem:[%s145 + $0x10] sm:$0xf] %v970
      %1099 = vst [vmem:[%s145 + $0x14] sm:$0xf] %v971
      %1100 = vst [vmem:[%s145 + $0x18] sm:$0xf] %v972
      %1101 = vst [vmem:[%s145 + $0x1c] sm:$0xf] %v973
      %1102 = vst [vmem:[%s145 + $0x20] sm:$0xf] %v974
      %1103 = vst [vmem:[%s145 + $0x24] sm:$0xf] %v975
      %1104 = vst [vmem:[%s145 + $0x28] sm:$0xf] %v976
      %1105 = vst [vmem:[%s145 + $0x2c] sm:$0xf] %v977
      %1106 = vst [vmem:[%s145 + $0x30] sm:$0xf] %v978
      %1107 = vst [vmem:[%s145 + $0x34] sm:$0xf] %v979
      %1108 = vst [vmem:[%s145 + $0x38] sm:$0xf] %v980
      %1109 = vst [vmem:[%s145 + $0x3c] sm:$0xf] %v981
      %1110 = vst [vmem:[%s145 + $0x40] sm:$0xf] %v982
      %1111 = vst [vmem:[%s145 + $0x44] sm:$0xf] %v983
      %1112 = vst [vmem:[%s145 + $0x48] sm:$0xf] %v984
      %1113 = vst [vmem:[%s145 + $0x4c] sm:$0xf] %v985
      %1114 = vst [vmem:[%s145 + $0x50] sm:$0xf] %v986
      %1115 = vst [vmem:[%s145 + $0x54] sm:$0xf] %v987
      %1116 = vst [vmem:[%s145 + $0x58] sm:$0xf] %v988
      %1117 = vst [vmem:[%s145 + $0x5c] sm:$0xf] %v989
      %1118 = vst [vmem:[%s145 + $0x60] sm:$0xf] %v990
      %1119 = vst [vmem:[%s145 + $0x64] sm:$0xf] %v991
      %1120 = vst [vmem:[%s145 + $0x68] sm:$0xf] %v992
      %1121 = vst [vmem:[%s145 + $0x6c] sm:$0xf] %v993
      %1122 = vst [vmem:[%s145 + $0x70] sm:$0xf] %v994
      %1123 = vst [vmem:[%s145 + $0x74] sm:$0xf] %v995
      %1124 = vst [vmem:[%s145 + $0x78] sm:$0xf] %v996
      %1125 = vst [vmem:[%s145 + $0x7c] sm:$0xf] %v997
      %1126 = vst [vmem:[%s145 + $0x80] sm:$0xf] %v998
      %1127 = vst [vmem:[%s145 + $0x84] sm:$0xf] %v999
      %1128 = vst [vmem:[%s145 + $0x88] sm:$0xf] %v1000
      %1129 = vst [vmem:[%s145 + $0x8c] sm:$0xf] %v1001
      %1130 = vst [vmem:[%s145 + $0x90] sm:$0xf] %v1002
      %1131 = vst [vmem:[%s145 + $0x94] sm:$0xf] %v1003
      %1132 = vst [vmem:[%s145 + $0x98] sm:$0xf] %v1004
      %1133 = vst [vmem:[%s145 + $0x9c] sm:$0xf] %v1005
      %1134 = vst [vmem:[%s145 + $0xa0] sm:$0xf] %v1006
      %1135 = vst [vmem:[%s145 + $0xa4] sm:$0xf] %v1007
      %1136 = vst [vmem:[%s145 + $0xa8] sm:$0xf] %v1008
      %1137 = vst [vmem:[%s145 + $0xac] sm:$0xf] %v1009
      %1138 = vst [vmem:[%s145 + $0xb0] sm:$0xf] %v1010
      %1139 = vst [vmem:[%s145 + $0xb4] sm:$0xf] %v1011
      %1140 = vst [vmem:[%s145 + $0xb8] sm:$0xf] %v1012
      %1141 = vst [vmem:[%s145 + $0xbc] sm:$0xf] %v1013
      %1142 = vst [vmem:[%s145 + $0xc0] sm:$0xf] %v1014
      %1143 = vst [vmem:[%s145 + $0xc4] sm:$0xf] %v1015
      %1144 = vst [vmem:[%s145 + $0xc8] sm:$0xf] %v1016
      %1145 = vst [vmem:[%s145 + $0xcc] sm:$0xf] %v1017
      %1146 = vst [vmem:[%s145 + $0xd0] sm:$0xf] %v1018
      %1147 = vst [vmem:[%s145 + $0xd4] sm:$0xf] %v1019
      %1148 = vst [vmem:[%s145 + $0xd8] sm:$0xf] %v1020
      %1149 = vst [vmem:[%s145 + $0xdc] sm:$0xf] %v1021
      %1150 = vst [vmem:[%s145 + $0xe0] sm:$0xf] %v1022
      %1151 = vst [vmem:[%s145 + $0xe4] sm:$0xf] %v1023
      %1152 = vst [vmem:[%s145 + $0xe8] sm:$0xf] %v1024
      %1153 = vst [vmem:[%s145 + $0xec] sm:$0xf] %v1025
      %1154 = vst [vmem:[%s145 + $0xf0] sm:$0xf] %v1026
      %1155 = vst [vmem:[%s145 + $0xf4] sm:$0xf] %v1027
      %1156 = vst [vmem:[%s145 + $0xf8] sm:$0xf] %v1028
      %1157 = vst [vmem:[%s145 + $0xfc] sm:$0xf] %v1029
      %s1158 = smul.u32 64, %s13
      %p1159 = scmp.lt.s32.totalorder %s1158, 255
      %s1160 = scalar_select %p1159, %s1158, 255
      %s1161 = smul.addr %s1160, 4
      %s1162 = scalar_lea.vmem %s2, %s1161
      // Predicated region
      $region29: #{_lambda_.3} parent=27 // pred_check
        %p1163 = pneg %p78
      $region30: #{_lambda_.3} parent=27 // pred_check_branch
        %1165 = sbr.rel (%p1163) target = $region32
      $region31: #{_lambda_.3} parent=27 // pred_region
        %s1166 = smul.u32 64, %s13
      $region32: #{_lambda_.3} parent=27 // pred_fallthru
        _
    $region28: #{_lambda_.3} parent=5 // pred_fallthru
      _
    %p1167 = scmp.le.s32.totalorder 2, %s8
    // Predicated region
    $region33: #{_lambda_.3} parent=5 // pred_check
      %p1168 = pneg %p1167
    $region34: #{_lambda_.3} parent=5 // pred_check_branch
      %1170 = sbr.rel (%p1168) target = $region36
    $region35: #{_lambda_.3} parent=5 // pred_region
      %s1171 = ssub.s32 %s8, 2
      // Predicated region
      $region37: #{_lambda_.3} parent=35 // pred_check
        %p1172 = pneg %p84
      $region38: #{_lambda_.3} parent=35 // pred_check_branch
        %1174 = sbr.rel (%p1172) target = $region40
      $region39: #{_lambda_.3} parent=35 // pred_region
        %s1175 = smul.u32 64, %s14
        %p1176 = scmp.lt.s32.totalorder %s1175, 255
        %s1177 = scalar_select %p1176, %s1175, 255
        %s1178 = smul.addr %s1177, 4
        %s1179 = scalar_lea.vmem %s2, %s1178
      $region40: #{_lambda_.3} parent=35 // pred_fallthru
        _
    $region36: #{_lambda_.3} parent=5 // pred_fallthru
      _
  $region6: #{_lambda_.3} parent=0 // loop_footer
    %s12 = sadd.s32 1, %s8
  $region7: #{_lambda_.3} parent=0 // loop_footer_branch
    %7 = sbr.rel target = $region3
  $region8: #{_lambda_.3} parent=0 // loop_exit
    _

// kernel: _lambda_.4
$region0: #{_lambda_.4}
  #allocation0 [shape = 'u32[]', space=smem, size = 0x4, offset = 0x4, fixed_abs, tag = 'smem constant byte address 0x4 - core index']
  #allocation1 [shape = 'u32[144,128]{1,0:T(1,128)}', space=vmem, size = 0x12000, scoped, tag = 'internal scratch']
  %s0 = inlined_call_operand.vmem [shape: f32[14,32], index: 0, kind: input, shape index: {}]
  %s1 = inlined_call_operand.vmem [shape: bf16[2,32,4096], index: 1, kind: input, shape index: {}]
  %s2 = inlined_call_operand.vmem [shape: bf16[2,14,4096], index: 2, kind: output, shape index: {}]
  %s3 = sld [smem:[#allocation0]]
  $region83: #{_lambda_.4} parent=0
    _
  %s5 = ssub.s32 1, %s3
  %s6 = scalar_select 0, %s5, %s3
  $region1: #{_lambda_.4} parent=0
    #allocation2 [shape = 'u8[262144]{0}', space=vmem, size = 0x40000, scoped, tag = 'input window, operand 1']
    #allocation3 [shape = 'u8[131072]{0}', space=vmem, size = 0x20000, scoped, tag = 'output window, operand 0']
    loop: start=0, step=1, limit=6
    $region2: #{_lambda_.4} parent=1 // loop_pre_header
      _
    $region3: #{_lambda_.4} parent=1 // loop_header
      %s8 = sphi 0, %s12
      %p9 = scmp.ge.s32.totalorder %s8, 6
      %s15 = sphi 0, %s27
      %s16 = sphi 0, %s23
      %s17 = sphi 0, %s15
      %s18 = sphi 0, %s16
      %s19 = sphi 0, %s17
      %s20 = sphi 0, %s18
      %s28 = sphi 0, %s28
      %s30 = sphi 0, %s28
      %s31 = sphi 0, %s30
      %s45 = sphi 0, %s31
      %s53 = sphi 0, %s55
      %s56 = sphi 0, %s53
      %s57 = sphi 0, %s56
      %s73 = sphi 0, %s57
      %s81 = sphi 0, %s83
      %s84 = sphi 0, %s81
      %s85 = sphi 0, %s84
      %s101 = sphi 0, %s85
    $region4: #{_lambda_.4} parent=1 // loop_header_branch
      %11 = sbr.rel (%p9) target = $region8
    $region5: #{_lambda_.4} parent=1 // loop_body
      %s13 = ssub.s32 %s8, 1
      %s14 = ssub.s32 %s8, 2
      %s21 = sadd.s32 1, %s16
      %p22 = scmp.ge.s32.totalorder %s21, 2
      %s23 = scalar_select %p22, 0, %s21
      %s24 = sadd.s32 1, %s15
      %s25 = scalar_select %p22, %s24, %s15
      %p26 = scmp.ge.s32.totalorder %s25, 2
      %s27 = scalar_select %p26, 0, %s25
      %s29 = sadd.s32 %s28, 1
      %p32 = scmp.eq.s32.totalorder %s8, 3
      %p33 = scmp.ne.s32.totalorder %s28, %s30
      %p34 = scmp.eq.s32.totalorder %s8, 0
      %p35 = por %p33, %p34
      %p36 = scmp.ne.s32.totalorder %s28, %s30
      %p37 = scmp.eq.s32.totalorder %s13, 3
      %p38 = por %p36, %p37
      %p39 = scmp.ne.s32.totalorder %s30, %s31
      %p40 = scmp.eq.s32.totalorder %s13, 0
      %p41 = por %p39, %p40
      %p42 = scmp.ne.s32.totalorder %s30, %s31
      %p43 = scmp.eq.s32.totalorder %s14, 3
      %p44 = por %p42, %p43
      %p46 = scmp.ne.s32.totalorder %s31, %s45
      %p47 = scmp.eq.s32.totalorder %s14, 0
      %p48 = por %p46, %p47
      %s49 = ssub.s32 %s15, %s27
      %s50 = ssub.s32 %s16, %s23
      %s51 = sor.u32 %s49, %s50
      %p52 = scmp.eq.s32.totalorder %s51, 0
      %s54 = sadd.s32 %s53, 1
      %s55 = scalar_select %p52, %s53, %s54
      %p58 = pneg %p52
      %p59 = scmp.eq.s32.totalorder %s8, 3
      %p60 = por %p58, %p59
      %p61 = scmp.ne.s32.totalorder %s53, %s56
      %p62 = scmp.eq.s32.totalorder %s8, 0
      %p63 = por %p61, %p62
      %p64 = scmp.ne.s32.totalorder %s53, %s56
      %p65 = scmp.eq.s32.totalorder %s13, 3
      %p66 = por %p64, %p65
      %p67 = scmp.ne.s32.totalorder %s56, %s57
      %p68 = scmp.eq.s32.totalorder %s13, 0
      %p69 = por %p67, %p68
      %p70 = scmp.ne.s32.totalorder %s56, %s57
      %p71 = scmp.eq.s32.totalorder %s14, 3
      %p72 = por %p70, %p71
      %p74 = scmp.ne.s32.totalorder %s57, %s73
      %p75 = scmp.eq.s32.totalorder %s14, 0
      %p76 = por %p74, %p75
      %s77 = ssub.s32 %s15, %s27
      %s78 = ssub.s32 %s16, %s23
      %s79 = sor.u32 %s77, %s78
      %p80 = scmp.eq.s32.totalorder %s79, 0
      %s82 = sadd.s32 %s81, 1
      %s83 = scalar_select %p80, %s81, %s82
      %p86 = pneg %p80
      %p87 = scmp.eq.s32.totalorder %s8, 3
      %p88 = por %p86, %p87
      %p89 = scmp.ne.s32.totalorder %s81, %s84
      %p90 = scmp.eq.s32.totalorder %s8, 0
      %p91 = por %p89, %p90
      %p92 = scmp.ne.s32.totalorder %s81, %s84
      %p93 = scmp.eq.s32.totalorder %s13, 3
      %p94 = por %p92, %p93
      %p95 = scmp.ne.s32.totalorder %s84, %s85
      %p96 = scmp.eq.s32.totalorder %s13, 0
      %p97 = por %p95, %p96
      %p98 = scmp.ne.s32.totalorder %s84, %s85
      %p99 = scmp.eq.s32.totalorder %s14, 3
      %p100 = por %p98, %p99
      %p102 = scmp.ne.s32.totalorder %s85, %s101
      %p103 = scmp.eq.s32.totalorder %s14, 0
      %p104 = por %p102, %p103
      %p105 = scmp.le.s32.totalorder 1, %s8
      %p106 = scmp.lt.s32.totalorder %s8, 5
      %p107 = pnand %p105, %p106
      %p108 = pneg %p107
      // Predicated region
      $region9: #{_lambda_.4} parent=5 // pred_check
        _
      $region10: #{_lambda_.4} parent=5 // pred_check_branch
        %110 = sbr.rel (%p107) target = $region12
      $region11: #{_lambda_.4} parent=5 // pred_region
        %s111 = ssub.s32 %s8, 1
        // Predicated region
        $region13: #{_lambda_.4} parent=11 // pred_check
          %p112 = pneg %p41
        $region14: #{_lambda_.4} parent=11 // pred_check_branch
          %114 = sbr.rel (%p112) target = $region16
        $region15: #{_lambda_.4} parent=11 // pred_region
          _
        $region16: #{_lambda_.4} parent=11 // pred_fallthru
          _
      $region12: #{_lambda_.4} parent=5 // pred_fallthru
        _
      %p115 = scmp.lt.s32.totalorder %s8, 4
      // Predicated region
      $region17: #{_lambda_.4} parent=5 // pred_check
        %p116 = pneg %p115
      $region18: #{_lambda_.4} parent=5 // pred_check_branch
        %118 = sbr.rel (%p116) target = $region20
      $region19: #{_lambda_.4} parent=5 // pred_region
        // Predicated region
        $region21: #{_lambda_.4} parent=19 // pred_check
          %p119 = pneg %p63
        $region22: #{_lambda_.4} parent=19 // pred_check_branch
          %121 = sbr.rel (%p119) target = $region24
        $region23: #{_lambda_.4} parent=19 // pred_region
          %s122 = sand.u32 %s53, 1
          %s123 = sand.u32 %s53, 1
          %s124 = smul.addr %s123, 256
          %s125 = scalar_lea.vmem [#allocation2], %s124
          %s126 = smul.u32 16, %s16
          %s127 = smul.addr %s15, 128
          %s128 = sadd.s32 %s126, %s127
          %s129 = smul.addr %s128, 4
          %s130 = scalar_lea.vmem %s1, %s129
          // Predicated region
          $region25: #{_lambda_.4} parent=23 // pred_check
            _
          $region26: #{_lambda_.4} parent=23 // pred_check_branch
            %132 = sbr.rel (0) target = $region28
          $region27: #{_lambda_.4} parent=23 // pred_region
            // Predicated region
            $region29: #{_lambda_.4} parent=27 // pred_check
              _
            $region30: #{_lambda_.4} parent=27 // pred_check_branch
              %134 = sbr.rel (0) target = $region32
            $region31: #{_lambda_.4} parent=27 // pred_region
              loop: start=0, step=1, limit=1
              $region33: #{_lambda_.4} parent=31 // loop_pre_header
                _
              $region34: #{_lambda_.4} parent=31 // loop_header
                %s136 = sphi 0, %s140
                %p137 = scmp.ge.s32.totalorder %s136, 1
                %s141 = sphi %s130, %s130
                %s142 = sphi %s125, %s125
              $region35: #{_lambda_.4} parent=31 // loop_header_branch
                %139 = sbr.rel (%p137) target = $region39
              $region36: #{_lambda_.4} parent=31 // loop_body
                %v143 = vld [vmem:[%s141] sm:$0xff]
                %144 = vst [vmem:[%s142] sm:$0xff] %v143
                %v145 = vld [vmem:[%s141 + $0x8] sm:$0xff]
                %146 = vst [vmem:[%s142 + $0x8] sm:$0xff] %v145
                %v147 = vld [vmem:[%s141 + $0x10] sm:$0xff]
                %148 = vst [vmem:[%s142 + $0x10] sm:$0xff] %v147
                %v149 = vld [vmem:[%s141 + $0x18] sm:$0xff]
                %150 = vst [vmem:[%s142 + $0x18] sm:$0xff] %v149
                %v151 = vld [vmem:[%s141 + $0x20] sm:$0xff]
                %152 = vst [vmem:[%s142 + $0x20] sm:$0xff] %v151
                %v153 = vld [vmem:[%s141 + $0x28] sm:$0xff]
                %154 = vst [vmem:[%s142 + $0x28] sm:$0xff] %v153
                %v155 = vld [vmem:[%s141 + $0x30] sm:$0xff]
                %156 = vst [vmem:[%s142 + $0x30] sm:$0xff] %v155
                %v157 = vld [vmem:[%s141 + $0x38] sm:$0xff]
                %158 = vst [vmem:[%s142 + $0x38] sm:$0xff] %v157
                %v159 = vld [vmem:[%s141 + $0x80] sm:$0xff]
                %160 = vst [vmem:[%s142 + $0x40] sm:$0xff] %v159
                %v161 = vld [vmem:[%s141 + $0x88] sm:$0xff]
                %162 = vst [vmem:[%s142 + $0x48] sm:$0xff] %v161
                %v163 = vld [vmem:[%s141 + $0x90] sm:$0xff]
                %164 = vst [vmem:[%s142 + $0x50] sm:$0xff] %v163
                %v165 = vld [vmem:[%s141 + $0x98] sm:$0xff]
                %166 = vst [vmem:[%s142 + $0x58] sm:$0xff] %v165
                %v167 = vld [vmem:[%s141 + $0xa0] sm:$0xff]
                %168 = vst [vmem:[%s142 + $0x60] sm:$0xff] %v167
                %v169 = vld [vmem:[%s141 + $0xa8] sm:$0xff]
                %170 = vst [vmem:[%s142 + $0x68] sm:$0xff] %v169
                %v171 = vld [vmem:[%s141 + $0xb0] sm:$0xff]
                %172 = vst [vmem:[%s142 + $0x70] sm:$0xff] %v171
                %v173 = vld [vmem:[%s141 + $0xb8] sm:$0xff]
                %174 = vst [vmem:[%s142 + $0x78] sm:$0xff] %v173
                %v175 = vld [vmem:[%s141 + $0x100] sm:$0xff]
                %176 = vst [vmem:[%s142 + $0x80] sm:$0xff] %v175
                %v177 = vld [vmem:[%s141 + $0x108] sm:$0xff]
                %178 = vst [vmem:[%s142 + $0x88] sm:$0xff] %v177
                %v179 = vld [vmem:[%s141 + $0x110] sm:$0xff]
                %180 = vst [vmem:[%s142 + $0x90] sm:$0xff] %v179
                %v181 = vld [vmem:[%s141 + $0x118] sm:$0xff]
                %182 = vst [vmem:[%s142 + $0x98] sm:$0xff] %v181
                %v183 = vld [vmem:[%s141 + $0x120] sm:$0xff]
                %184 = vst [vmem:[%s142 + $0xa0] sm:$0xff] %v183
                %v185 = vld [vmem:[%s141 + $0x128] sm:$0xff]
                %186 = vst [vmem:[%s142 + $0xa8] sm:$0xff] %v185
                %v187 = vld [vmem:[%s141 + $0x130] sm:$0xff]
                %188 = vst [vmem:[%s142 + $0xb0] sm:$0xff] %v187
                %v189 = vld [vmem:[%s141 + $0x138] sm:$0xff]
                %190 = vst [vmem:[%s142 + $0xb8] sm:$0xff] %v189
                %v191 = vld [vmem:[%s141 + $0x180] sm:$0xff]
                %192 = vst [vmem:[%s142 + $0xc0] sm:$0xff] %v191
                %v193 = vld [vmem:[%s141 + $0x188] sm:$0xff]
                %194 = vst [vmem:[%s142 + $0xc8] sm:$0xff] %v193
                %v195 = vld [vmem:[%s141 + $0x190] sm:$0xff]
                %196 = vst [vmem:[%s142 + $0xd0] sm:$0xff] %v195
                %v197 = vld [vmem:[%s141 + $0x198] sm:$0xff]
                %198 = vst [vmem:[%s142 + $0xd8] sm:$0xff] %v197
                %v199 = vld [vmem:[%s141 + $0x1a0] sm:$0xff]
                %200 = vst [vmem:[%s142 + $0xe0] sm:$0xff] %v199
                %v201 = vld [vmem:[%s141 + $0x1a8] sm:$0xff]
                %202 = vst [vmem:[%s142 + $0xe8] sm:$0xff] %v201
                %v203 = vld [vmem:[%s141 + $0x1b0] sm:$0xff]
                %204 = vst [vmem:[%s142 + $0xf0] sm:$0xff] %v203
                %v205 = vld [vmem:[%s141 + $0x1b8] sm:$0xff]
                %206 = vst [vmem:[%s142 + $0xf8] sm:$0xff] %v205
              $region37: #{_lambda_.4} parent=31 // loop_footer
                %s140 = sadd.s32 1, %s136
              $region38: #{_lambda_.4} parent=31 // loop_footer_branch
                %135 = sbr.rel target = $region34
              $region39: #{_lambda_.4} parent=31 // loop_exit
                _
            $region32: #{_lambda_.4} parent=27 // pred_fallthru
              _
            // Predicated region
            $region40: #{_lambda_.4} parent=27 // pred_check
              _
            $region41: #{_lambda_.4} parent=27 // pred_check_branch
              %208 = sbr.rel target = $region43
            $region42: #{_lambda_.4} parent=27 // pred_region
              _
            $region43: #{_lambda_.4} parent=27 // pred_fallthru
              _
          $region28: #{_lambda_.4} parent=23 // pred_fallthru
            _
          %209 = vnop
        $region24: #{_lambda_.4} parent=19 // pred_fallthru
          _
      $region20: #{_lambda_.4} parent=5 // pred_fallthru
        _
      %p210 = scmp.le.s32.totalorder 1, %s8
      %p211 = scmp.lt.s32.totalorder %s8, 5
      %p212 = pnand %p210, %p211
      %p213 = pneg %p212
      // Predicated region
      $region44: #{_lambda_.4} parent=5 // pred_check
        _
      $region45: #{_lambda_.4} parent=5 // pred_check_branch
        %215 = sbr.rel (%p212) target = $region47
      $region46: #{_lambda_.4} parent=5 // pred_region
        %s216 = ssub.s32 %s8, 1
        %s217 = sand.u32 %s56, 1
        %s218 = sand.u32 %s56, 1
        %s219 = smul.addr %s218, 256
        %s220 = scalar_lea.vmem [#allocation2], %s219
        // Predicated region
        $region48: #{_lambda_.4} parent=46 // pred_check
          %p221 = pneg %p69
        $region49: #{_lambda_.4} parent=46 // pred_check_branch
          %223 = sbr.rel (%p221) target = $region51
        $region50: #{_lambda_.4} parent=46 // pred_region
          _
        $region51: #{_lambda_.4} parent=46 // pred_fallthru
          _
        %p224 = pneg %p41
        %p225 = pneg %p38
        %s226 = sand.u32 %s56, 1
        %s227 = sand.u32 %s56, 1
        %s228 = smul.addr %s227, 256
        %s229 = scalar_lea.vmem [#allocation2], %s228
        %p230 = pneg %p69
        %p231 = pneg %p66
        %p232 = pneg %p97
        %p233 = pneg %p94
        %s234 = sand.u32 %s84, 1
        %s235 = sand.u32 %s84, 1
        %s236 = smul.addr %s235, 128
        %s237 = scalar_lea.vmem [#allocation3], %s236
        %s238 = smul.u32 16, %s18
        %s239 = smul.u32 16, %s18
        %v240 = vld [vmem:[%s0] sm:$0xff]
        %v241 = vld [vmem:[%s0 + $0x8] sm:$0x3f]
        %v242 = vld [vmem:[%s220] sm:$0xff]
        %v243 = vld [vmem:[%s220 + $0x8] sm:$0xff]
        %v244 = vld [vmem:[%s220 + $0x10] sm:$0xff]
        %v245 = vld [vmem:[%s220 + $0x18] sm:$0xff]
        %v246 = vld [vmem:[%s220 + $0x20] sm:$0xff]
        %v247 = vld [vmem:[%s220 + $0x28] sm:$0xff]
        %v248 = vld [vmem:[%s220 + $0x30] sm:$0xff]
        %v249 = vld [vmem:[%s220 + $0x38] sm:$0xff]
        %v250 = vld [vmem:[%s220 + $0x40] sm:$0xff]
        %v251 = vld [vmem:[%s220 + $0x48] sm:$0xff]
        %v252 = vld [vmem:[%s220 + $0x50] sm:$0xff]
        %v253 = vld [vmem:[%s220 + $0x58] sm:$0xff]
        %v254 = vld [vmem:[%s220 + $0x60] sm:$0xff]
        %v255 = vld [vmem:[%s220 + $0x68] sm:$0xff]
        %v256 = vld [vmem:[%s220 + $0x70] sm:$0xff]
        %v257 = vld [vmem:[%s220 + $0x78] sm:$0xff]
        %v258 = vld [vmem:[%s220 + $0x80] sm:$0xff]
        %v259 = vld [vmem:[%s220 + $0x88] sm:$0xff]
        %v260 = vld [vmem:[%s220 + $0x90] sm:$0xff]
        %v261 = vld [vmem:[%s220 + $0x98] sm:$0xff]
        %v262 = vld [vmem:[%s220 + $0xa0] sm:$0xff]
        %v263 = vld [vmem:[%s220 + $0xa8] sm:$0xff]
        %v264 = vld [vmem:[%s220 + $0xb0] sm:$0xff]
        %v265 = vld [vmem:[%s220 + $0xb8] sm:$0xff]
        %v266 = vld [vmem:[%s220 + $0xc0] sm:$0xff]
        %v267 = vld [vmem:[%s220 + $0xc8] sm:$0xff]
        %v268 = vld [vmem:[%s220 + $0xd0] sm:$0xff]
        %v269 = vld [vmem:[%s220 + $0xd8] sm:$0xff]
        %v270 = vld [vmem:[%s220 + $0xe0] sm:$0xff]
        %v271 = vld [vmem:[%s220 + $0xe8] sm:$0xff]
        %v272 = vld [vmem:[%s220 + $0xf0] sm:$0xff]
        %v273 = vld [vmem:[%s220 + $0xf8] sm:$0xff]
        %v274 = vunpack.c.l.bf16 %v242
        %v275 = vunpack.c.h.bf16 %v242
        %v276 = vunpack.c.l.bf16 %v243
        %v277 = vunpack.c.h.bf16 %v243
        %v278 = vunpack.c.l.bf16 %v244
        %v279 = vunpack.c.h.bf16 %v244
        %v280 = vunpack.c.l.bf16 %v245
        %v281 = vunpack.c.h.bf16 %v245
        %v282 = vunpack.c.l.bf16 %v246
        %v283 = vunpack.c.h.bf16 %v246
        %v284 = vunpack.c.l.bf16 %v247
        %v285 = vunpack.c.h.bf16 %v247
        %v286 = vunpack.c.l.bf16 %v248
        %v287 = vunpack.c.h.bf16 %v248
        %v288 = vunpack.c.l.bf16 %v249
        %v289 = vunpack.c.h.bf16 %v249
        %v290 = vunpack.c.l.bf16 %v250
        %v291 = vunpack.c.h.bf16 %v250
        %v292 = vunpack.c.l.bf16 %v251
        %v293 = vunpack.c.h.bf16 %v251
        %v294 = vunpack.c.l.bf16 %v252
        %v295 = vunpack.c.h.bf16 %v252
        %v296 = vunpack.c.l.bf16 %v253
        %v297 = vunpack.c.h.bf16 %v253
        %v298 = vunpack.c.l.bf16 %v254
        %v299 = vunpack.c.h.bf16 %v254
        %v300 = vunpack.c.l.bf16 %v255
        %v301 = vunpack.c.h.bf16 %v255
        %v302 = vunpack.c.l.bf16 %v256
        %v303 = vunpack.c.h.bf16 %v256
        %v304 = vunpack.c.l.bf16 %v257
        %v305 = vunpack.c.h.bf16 %v257
        %v306 = vunpack.c.l.bf16 %v258
        %v307 = vunpack.c.h.bf16 %v258
        %v308 = vunpack.c.l.bf16 %v259
        %v309 = vunpack.c.h.bf16 %v259
        %v310 = vunpack.c.l.bf16 %v260
        %v311 = vunpack.c.h.bf16 %v260
        %v312 = vunpack.c.l.bf16 %v261
        %v313 = vunpack.c.h.bf16 %v261
        %v314 = vunpack.c.l.bf16 %v262
        %v315 = vunpack.c.h.bf16 %v262
        %v316 = vunpack.c.l.bf16 %v263
        %v317 = vunpack.c.h.bf16 %v263
        %v318 = vunpack.c.l.bf16 %v264
        %v319 = vunpack.c.h.bf16 %v264
        %v320 = vunpack.c.l.bf16 %v265
        %v321 = vunpack.c.h.bf16 %v265
        %v322 = vunpack.c.l.bf16 %v266
        %v323 = vunpack.c.h.bf16 %v266
        %v324 = vunpack.c.l.bf16 %v267
        %v325 = vunpack.c.h.bf16 %v267
        %v326 = vunpack.c.l.bf16 %v268
        %v327 = vunpack.c.h.bf16 %v268
        %v328 = vunpack.c.l.bf16 %v269
        %v329 = vunpack.c.h.bf16 %v269
        %v330 = vunpack.c.l.bf16 %v270
        %v331 = vunpack.c.h.bf16 %v270
        %v332 = vunpack.c.l.bf16 %v271
        %v333 = vunpack.c.h.bf16 %v271
        %v334 = vunpack.c.l.bf16 %v272
        %v335 = vunpack.c.h.bf16 %v272
        %v336 = vunpack.c.l.bf16 %v273
        %v337 = vunpack.c.h.bf16 %v273
        %vm338 = vcmask 261120
        %v340 = vsel %vm338, %v240, 0
        %v343 = vsel %vm338, %v241, 0
        %345 = vmatprep.subr.mxu0 0.0
        %346 = vmatpush1.msra.mxu0 0.0
        %347 = vmatprep.subr.mxu0 0.0
        %348 = vmatpush1.msra.mxu0 0.0
        %349 = vmatprep.subr.mxu0 0.0
        %350 = vmatpush1.msra.mxu0 0.0
        %351 = vmatprep.subr.mxu0 0.0
        %352 = vmatpush1.msra.mxu0 0.0
        %353 = vmatprep.subr.mxu0 0.0
        %354 = vmatpush1.msra.mxu0 0.0
        %355 = vmatprep.subr.mxu0 0.0
        %356 = vmatpush1.msra.mxu0 0.0
        %357 = vmatprep.subr.mxu0 0.0
        %358 = vmatpush1.msra.mxu0 0.0
        %359 = vmatprep.subr.mxu0 0.0
        %360 = vmatpush1.msra.mxu0 0.0
        %361 = vmatprep.subr.mxu0 0.0
        %362 = vmatpush1.msra.mxu0 0.0
        %363 = vmatprep.subr.mxu0 0.0
        %364 = vmatpush1.msra.mxu0 0.0
        %365 = vmatprep.subr.mxu0 0.0
        %366 = vmatpush1.msra.mxu0 0.0
        %367 = vmatprep.subr.mxu0 0.0
        %368 = vmatpush1.msra.mxu0 0.0
        %369 = vmatprep.subr.mxu0 %v323
        %370 = vmatpush1.msra.mxu0 %v322
        %371 = vmatprep.subr.mxu0 %v307
        %372 = vmatpush1.msra.mxu0 %v306
        %373 = vmatprep.subr.mxu0 %v291
        %374 = vmatpush1.msra.mxu0 %v290
        %375 = vmatprep.subr.mxu0 %v275
        %376 = vmatpush1.msra.mxu0 %v274
        %377 = vmatprep.subr.mxu0 0.0
        %378 = vmatpush2.msra.mxu0 0.0
        %379 = vmatprep.subr.mxu0 0.0
        %380 = vmatpush2.msra.mxu0 0.0
        %381 = vmatprep.subr.mxu0 0.0
        %382 = vmatpush2.msra.mxu0 0.0
        %383 = vmatprep.subr.mxu0 0.0
        %384 = vmatpush2.msra.mxu0 0.0
        %385 = vmatprep.subr.mxu0 0.0
        %386 = vmatpush2.msra.mxu0 0.0
        %387 = vmatprep.subr.mxu0 0.0
        %388 = vmatpush2.msra.mxu0 0.0
        %389 = vmatprep.subr.mxu0 0.0
        %390 = vmatpush2.msra.mxu0 0.0
        %391 = vmatprep.subr.mxu0 0.0
        %392 = vmatpush2.msra.mxu0 0.0
        %393 = vmatprep.subr.mxu0 0.0
        %394 = vmatpush2.msra.mxu0 0.0
        %395 = vmatprep.subr.mxu0 0.0
        %396 = vmatpush2.msra.mxu0 0.0
        %397 = vmatprep.subr.mxu0 0.0
        %398 = vmatpush2.msra.mxu0 0.0
        %399 = vmatprep.subr.mxu0 0.0
        %400 = vmatpush2.msra.mxu0 0.0
        %401 = vmatprep.subr.mxu0 0.0
        %402 = vmatpush2.msra.mxu0 0.0
        %403 = vmatprep.subr.mxu0 0.0
        %404 = vmatpush2.msra.mxu0 0.0
        %405 = vmatprep.subr.mxu0 0.0
        %406 = vmatpush2.msra.mxu0 0.0
        %407 = vmatprep.subr.mxu0 0.0
        %408 = vmatpush2.msra.mxu0 0.0
        %409 = vmatprep.mubr.f32.mxu0 0.0
        %410 = vmatmul.mubr.f32.gmra.mxu0 %v340
        %v411 = vpop.f32.mrf.mxu0
        %v412 = vadd.f32 0.0, %v411
        %v413 = vpop.f32.mrf.mxu0
        %v414 = vadd.f32 0.0, %v413
        %415 = vmatprep.mubr.f32.mxu0 0.0
        %416 = vmatmul.mubr.f32.gmra.mxu0 %v343
        %v417 = vpop.f32.mrf.mxu0
        %v418 = vadd.f32 0.0, %v417
        %v419 = vpop.f32.mrf.mxu0
        %v420 = vadd.f32 0.0, %v419
        %421 = vdwg.mxu0
        %422 = vmatprep.subr.mxu0 0.0
        %423 = vmatpush1.msra.mxu0 0.0
        %424 = vmatprep.subr.mxu0 0.0
        %425 = vmatpush1.msra.mxu0 0.0
        %426 = vmatprep.subr.mxu0 0.0
        %427 = vmatpush1.msra.mxu0 0.0
        %428 = vmatprep.subr.mxu0 0.0
        %429 = vmatpush1.msra.mxu0 0.0
        %430 = vmatprep.subr.mxu0 0.0
        %431 = vmatpush1.msra.mxu0 0.0
        %432 = vmatprep.subr.mxu0 0.0
        %433 = vmatpush1.msra.mxu0 0.0
        %434 = vmatprep.subr.mxu0 0.0
        %435 = vmatpush1.msra.mxu0 0.0
        %436 = vmatprep.subr.mxu0 0.0
        %437 = vmatpush1.msra.mxu0 0.0
        %438 = vmatprep.subr.mxu0 0.0
        %439 = vmatpush1.msra.mxu0 0.0
        %440 = vmatprep.subr.mxu0 0.0
        %441 = vmatpush1.msra.mxu0 0.0
        %442 = vmatprep.subr.mxu0 0.0
        %443 = vmatpush1.msra.mxu0 0.0
        %444 = vmatprep.subr.mxu0 0.0
        %445 = vmatpush1.msra.mxu0 0.0
        %446 = vmatprep.subr.mxu0 %v325
        %447 = vmatpush1.msra.mxu0 %v324
        %448 = vmatprep.subr.mxu0 %v309
        %449 = vmatpush1.msra.mxu0 %v308
        %450 = vmatprep.subr.mxu0 %v293
        %451 = vmatpush1.msra.mxu0 %v292
        %452 = vmatprep.subr.mxu0 %v277
        %453 = vmatpush1.msra.mxu0 %v276
        %454 = vmatprep.subr.mxu0 0.0
        %455 = vmatpush2.msra.mxu0 0.0
        %456 = vmatprep.subr.mxu0 0.0
        %457 = vmatpush2.msra.mxu0 0.0
        %458 = vmatprep.subr.mxu0 0.0
        %459 = vmatpush2.msra.mxu0 0.0
        %460 = vmatprep.subr.mxu0 0.0
        %461 = vmatpush2.msra.mxu0 0.0
        %462 = vmatprep.subr.mxu0 0.0
        %463 = vmatpush2.msra.mxu0 0.0
        %464 = vmatprep.subr.mxu0 0.0
        %465 = vmatpush2.msra.mxu0 0.0
        %466 = vmatprep.subr.mxu0 0.0
        %467 = vmatpush2.msra.mxu0 0.0
        %468 = vmatprep.subr.mxu0 0.0
        %469 = vmatpush2.msra.mxu0 0.0
        %470 = vmatprep.subr.mxu0 0.0
        %471 = vmatpush2.msra.mxu0 0.0
        %472 = vmatprep.subr.mxu0 0.0
        %473 = vmatpush2.msra.mxu0 0.0
        %474 = vmatprep.subr.mxu0 0.0
        %475 = vmatpush2.msra.mxu0 0.0
        %476 = vmatprep.subr.mxu0 0.0
        %477 = vmatpush2.msra.mxu0 0.0
        %478 = vmatprep.subr.mxu0 0.0
        %479 = vmatpush2.msra.mxu0 0.0
        %480 = vmatprep.subr.mxu0 0.0
        %481 = vmatpush2.msra.mxu0 0.0
        %482 = vmatprep.subr.mxu0 0.0
        %483 = vmatpush2.msra.mxu0 0.0
        %484 = vmatprep.subr.mxu0 0.0
        %485 = vmatpush2.msra.mxu0 0.0
        %486 = vmatprep.mubr.f32.mxu0 0.0
        %487 = vmatmul.mubr.f32.gmra.mxu0 %v340
        %v488 = vpop.f32.mrf.mxu0
        %v489 = vadd.f32 0.0, %v488
        %v490 = vpop.f32.mrf.mxu0
        %v491 = vadd.f32 0.0, %v490
        %492 = vmatprep.mubr.f32.mxu0 0.0
        %493 = vmatmul.mubr.f32.gmra.mxu0 %v343
        %v494 = vpop.f32.mrf.mxu0
        %v495 = vadd.f32 0.0, %v494
        %v496 = vpop.f32.mrf.mxu0
        %v497 = vadd.f32 0.0, %v496
        %498 = vdwg.mxu0
        %499 = vmatprep.subr.mxu0 0.0
        %500 = vmatpush1.msra.mxu0 0.0
        %501 = vmatprep.subr.mxu0 0.0
        %502 = vmatpush1.msra.mxu0 0.0
        %503 = vmatprep.subr.mxu0 0.0
        %504 = vmatpush1.msra.mxu0 0.0
        %505 = vmatprep.subr.mxu0 0.0
        %506 = vmatpush1.msra.mxu0 0.0
        %507 = vmatprep.subr.mxu0 0.0
        %508 = vmatpush1.msra.mxu0 0.0
        %509 = vmatprep.subr.mxu0 0.0
        %510 = vmatpush1.msra.mxu0 0.0
        %511 = vmatprep.subr.mxu0 0.0
        %512 = vmatpush1.msra.mxu0 0.0
        %513 = vmatprep.subr.mxu0 0.0
        %514 = vmatpush1.msra.mxu0 0.0
        %515 = vmatprep.subr.mxu0 0.0
        %516 = vmatpush1.msra.mxu0 0.0
        %517 = vmatprep.subr.mxu0 0.0
        %518 = vmatpush1.msra.mxu0 0.0
        %519 = vmatprep.subr.mxu0 0.0
        %520 = vmatpush1.msra.mxu0 0.0
        %521 = vmatprep.subr.mxu0 0.0
        %522 = vmatpush1.msra.mxu0 0.0
        %523 = vmatprep.subr.mxu0 %v327
        %524 = vmatpush1.msra.mxu0 %v326
        %525 = vmatprep.subr.mxu0 %v311
        %526 = vmatpush1.msra.mxu0 %v310
        %527 = vmatprep.subr.mxu0 %v295
        %528 = vmatpush1.msra.mxu0 %v294
        %529 = vmatprep.subr.mxu0 %v279
        %530 = vmatpush1.msra.mxu0 %v278
        %531 = vmatprep.subr.mxu0 0.0
        %532 = vmatpush2.msra.mxu0 0.0
        %533 = vmatprep.subr.mxu0 0.0
        %534 = vmatpush2.msra.mxu0 0.0
        %535 = vmatprep.subr.mxu0 0.0
        %536 = vmatpush2.msra.mxu0 0.0
        %537 = vmatprep.subr.mxu0 0.0
        %538 = vmatpush2.msra.mxu0 0.0
        %539 = vmatprep.subr.mxu0 0.0
        %540 = vmatpush2.msra.mxu0 0.0
        %541 = vmatprep.subr.mxu0 0.0
        %542 = vmatpush2.msra.mxu0 0.0
        %543 = vmatprep.subr.mxu0 0.0
        %544 = vmatpush2.msra.mxu0 0.0
        %545 = vmatprep.subr.mxu0 0.0
        %546 = vmatpush2.msra.mxu0 0.0
        %547 = vmatprep.subr.mxu0 0.0
        %548 = vmatpush2.msra.mxu0 0.0
        %549 = vmatprep.subr.mxu0 0.0
        %550 = vmatpush2.msra.mxu0 0.0
        %551 = vmatprep.subr.mxu0 0.0
        %552 = vmatpush2.msra.mxu0 0.0
        %553 = vmatprep.subr.mxu0 0.0
        %554 = vmatpush2.msra.mxu0 0.0
        %555 = vmatprep.subr.mxu0 0.0
        %556 = vmatpush2.msra.mxu0 0.0
        %557 = vmatprep.subr.mxu0 0.0
        %558 = vmatpush2.msra.mxu0 0.0
        %559 = vmatprep.subr.mxu0 0.0
        %560 = vmatpush2.msra.mxu0 0.0
        %561 = vmatprep.subr.mxu0 0.0
        %562 = vmatpush2.msra.mxu0 0.0
        %563 = vmatprep.mubr.f32.mxu0 0.0
        %564 = vmatmul.mubr.f32.gmra.mxu0 %v340
        %v565 = vpop.f32.mrf.mxu0
        %v566 = vadd.f32 0.0, %v565
        %v567 = vpop.f32.mrf.mxu0
        %v568 = vadd.f32 0.0, %v567
        %569 = vmatprep.mubr.f32.mxu0 0.0
        %570 = vmatmul.mubr.f32.gmra.mxu0 %v343
        %v571 = vpop.f32.mrf.mxu0
        %v572 = vadd.f32 0.0, %v571
        %v573 = vpop.f32.mrf.mxu0
        %v574 = vadd.f32 0.0, %v573
        %575 = vdwg.mxu0
        %576 = vmatprep.subr.mxu0 0.0
        %577 = vmatpush1.msra.mxu0 0.0
        %578 = vmatprep.subr.mxu0 0.0
        %579 = vmatpush1.msra.mxu0 0.0
        %580 = vmatprep.subr.mxu0 0.0
        %581 = vmatpush1.msra.mxu0 0.0
        %582 = vmatprep.subr.mxu0 0.0
        %583 = vmatpush1.msra.mxu0 0.0
        %584 = vmatprep.subr.mxu0 0.0
        %585 = vmatpush1.msra.mxu0 0.0
        %586 = vmatprep.subr.mxu0 0.0
        %587 = vmatpush1.msra.mxu0 0.0
        %588 = vmatprep.subr.mxu0 0.0
        %589 = vmatpush1.msra.mxu0 0.0
        %590 = vmatprep.subr.mxu0 0.0
        %591 = vmatpush1.msra.mxu0 0.0
        %592 = vmatprep.subr.mxu0 0.0
        %593 = vmatpush1.msra.mxu0 0.0
        %594 = vmatprep.subr.mxu0 0.0
        %595 = vmatpush1.msra.mxu0 0.0
        %596 = vmatprep.subr.mxu0 0.0
        %597 = vmatpush1.msra.mxu0 0.0
        %598 = vmatprep.subr.mxu0 0.0
        %599 = vmatpush1.msra.mxu0 0.0
        %600 = vmatprep.subr.mxu0 %v329
        %601 = vmatpush1.msra.mxu0 %v328
        %602 = vmatprep.subr.mxu0 %v313
        %603 = vmatpush1.msra.mxu0 %v312
        %604 = vmatprep.subr.mxu0 %v297
        %605 = vmatpush1.msra.mxu0 %v296
        %606 = vmatprep.subr.mxu0 %v281
        %607 = vmatpush1.msra.mxu0 %v280
        %608 = vmatprep.subr.mxu0 0.0
        %609 = vmatpush2.msra.mxu0 0.0
        %610 = vmatprep.subr.mxu0 0.0
        %611 = vmatpush2.msra.mxu0 0.0
        %612 = vmatprep.subr.mxu0 0.0
        %613 = vmatpush2.msra.mxu0 0.0
        %614 = vmatprep.subr.mxu0 0.0
        %615 = vmatpush2.msra.mxu0 0.0
        %616 = vmatprep.subr.mxu0 0.0
        %617 = vmatpush2.msra.mxu0 0.0
        %618 = vmatprep.subr.mxu0 0.0
        %619 = vmatpush2.msra.mxu0 0.0
        %620 = vmatprep.subr.mxu0 0.0
        %621 = vmatpush2.msra.mxu0 0.0
        %622 = vmatprep.subr.mxu0 0.0
        %623 = vmatpush2.msra.mxu0 0.0
        %624 = vmatprep.subr.mxu0 0.0
        %625 = vmatpush2.msra.mxu0 0.0
        %626 = vmatprep.subr.mxu0 0.0
        %627 = vmatpush2.msra.mxu0 0.0
        %628 = vmatprep.subr.mxu0 0.0
        %629 = vmatpush2.msra.mxu0 0.0
        %630 = vmatprep.subr.mxu0 0.0
        %631 = vmatpush2.msra.mxu0 0.0
        %632 = vmatprep.subr.mxu0 0.0
        %633 = vmatpush2.msra.mxu0 0.0
        %634 = vmatprep.subr.mxu0 0.0
        %635 = vmatpush2.msra.mxu0 0.0
        %636 = vmatprep.subr.mxu0 0.0
        %637 = vmatpush2.msra.mxu0 0.0
        %638 = vmatprep.subr.mxu0 0.0
        %639 = vmatpush2.msra.mxu0 0.0
        %640 = vmatprep.mubr.f32.mxu0 0.0
        %641 = vmatmul.mubr.f32.gmra.mxu0 %v340
        %v642 = vpop.f32.mrf.mxu0
        %v643 = vadd.f32 0.0, %v642
        %v644 = vpop.f32.mrf.mxu0
        %v645 = vadd.f32 0.0, %v644
        %646 = vmatprep.mubr.f32.mxu0 0.0
        %647 = vmatmul.mubr.f32.gmra.mxu0 %v343
        %v648 = vpop.f32.mrf.mxu0
        %v649 = vadd.f32 0.0, %v648
        %v650 = vpop.f32.mrf.mxu0
        %v651 = vadd.f32 0.0, %v650
        %652 = vdwg.mxu0
        %653 = vmatprep.subr.mxu0 0.0
        %654 = vmatpush1.msra.mxu0 0.0
        %655 = vmatprep.subr.mxu0 0.0
        %656 = vmatpush1.msra.mxu0 0.0
        %657 = vmatprep.subr.mxu0 0.0
        %658 = vmatpush1.msra.mxu0 0.0
        %659 = vmatprep.subr.mxu0 0.0
        %660 = vmatpush1.msra.mxu0 0.0
        %661 = vmatprep.subr.mxu0 0.0
        %662 = vmatpush1.msra.mxu0 0.0
        %663 = vmatprep.subr.mxu0 0.0
        %664 = vmatpush1.msra.mxu0 0.0
        %665 = vmatprep.subr.mxu0 0.0
        %666 = vmatpush1.msra.mxu0 0.0
        %667 = vmatprep.subr.mxu0 0.0
        %668 = vmatpush1.msra.mxu0 0.0
        %669 = vmatprep.subr.mxu0 0.0
        %670 = vmatpush1.msra.mxu0 0.0
        %671 = vmatprep.subr.mxu0 0.0
        %672 = vmatpush1.msra.mxu0 0.0
        %673 = vmatprep.subr.mxu0 0.0
        %674 = vmatpush1.msra.mxu0 0.0
        %675 = vmatprep.subr.mxu0 0.0
        %676 = vmatpush1.msra.mxu0 0.0
        %677 = vmatprep.subr.mxu0 %v331
        %678 = vmatpush1.msra.mxu0 %v330
        %679 = vmatprep.subr.mxu0 %v315
        %680 = vmatpush1.msra.mxu0 %v314
        %681 = vmatprep.subr.mxu0 %v299
        %682 = vmatpush1.msra.mxu0 %v298
        %683 = vmatprep.subr.mxu0 %v283
        %684 = vmatpush1.msra.mxu0 %v282
        %685 = vmatprep.subr.mxu0 0.0
        %686 = vmatpush2.msra.mxu0 0.0
        %687 = vmatprep.subr.mxu0 0.0
        %688 = vmatpush2.msra.mxu0 0.0
        %689 = vmatprep.subr.mxu0 0.0
        %690 = vmatpush2.msra.mxu0 0.0
        %691 = vmatprep.subr.mxu0 0.0
        %692 = vmatpush2.msra.mxu0 0.0
        %693 = vmatprep.subr.mxu0 0.0
        %694 = vmatpush2.msra.mxu0 0.0
        %695 = vmatprep.subr.mxu0 0.0
        %696 = vmatpush2.msra.mxu0 0.0
        %697 = vmatprep.subr.mxu0 0.0
        %698 = vmatpush2.msra.mxu0 0.0
        %699 = vmatprep.subr.mxu0 0.0
        %700 = vmatpush2.msra.mxu0 0.0
        %701 = vmatprep.subr.mxu0 0.0
        %702 = vmatpush2.msra.mxu0 0.0
        %703 = vmatprep.subr.mxu0 0.0
        %704 = vmatpush2.msra.mxu0 0.0
        %705 = vmatprep.subr.mxu0 0.0
        %706 = vmatpush2.msra.mxu0 0.0
        %707 = vmatprep.subr.mxu0 0.0
        %708 = vmatpush2.msra.mxu0 0.0
        %709 = vmatprep.subr.mxu0 0.0
        %710 = vmatpush2.msra.mxu0 0.0
        %711 = vmatprep.subr.mxu0 0.0
        %712 = vmatpush2.msra.mxu0 0.0
        %713 = vmatprep.subr.mxu0 0.0
        %714 = vmatpush2.msra.mxu0 0.0
        %715 = vmatprep.subr.mxu0 0.0
        %716 = vmatpush2.msra.mxu0 0.0
        %717 = vmatprep.mubr.f32.mxu0 0.0
        %718 = vmatmul.mubr.f32.gmra.mxu0 %v340
        %v719 = vpop.f32.mrf.mxu0
        %v720 = vadd.f32 0.0, %v719
        %v721 = vpop.f32.mrf.mxu0
        %v722 = vadd.f32 0.0, %v721
        %723 = vmatprep.mubr.f32.mxu0 0.0
        %724 = vmatmul.mubr.f32.gmra.mxu0 %v343
        %v725 = vpop.f32.mrf.mxu0
        %v726 = vadd.f32 0.0, %v725
        %v727 = vpop.f32.mrf.mxu0
        %v728 = vadd.f32 0.0, %v727
        %729 = vdwg.mxu0
        %730 = vmatprep.subr.mxu0 0.0
        %731 = vmatpush1.msra.mxu0 0.0
        %732 = vmatprep.subr.mxu0 0.0
        %733 = vmatpush1.msra.mxu0 0.0
        %734 = vmatprep.subr.mxu0 0.0
        %735 = vmatpush1.msra.mxu0 0.0
        %736 = vmatprep.subr.mxu0 0.0
        %737 = vmatpush1.msra.mxu0 0.0
        %738 = vmatprep.subr.mxu0 0.0
        %739 = vmatpush1.msra.mxu0 0.0
        %740 = vmatprep.subr.mxu0 0.0
        %741 = vmatpush1.msra.mxu0 0.0
        %742 = vmatprep.subr.mxu0 0.0
        %743 = vmatpush1.msra.mxu0 0.0
        %744 = vmatprep.subr.mxu0 0.0
        %745 = vmatpush1.msra.mxu0 0.0
        %746 = vmatprep.subr.mxu0 0.0
        %747 = vmatpush1.msra.mxu0 0.0
        %748 = vmatprep.subr.mxu0 0.0
        %749 = vmatpush1.msra.mxu0 0.0
        %750 = vmatprep.subr.mxu0 0.0
        %751 = vmatpush1.msra.mxu0 0.0
        %752 = vmatprep.subr.mxu0 0.0
        %753 = vmatpush1.msra.mxu0 0.0
        %754 = vmatprep.subr.mxu0 %v333
        %755 = vmatpush1.msra.mxu0 %v332
        %756 = vmatprep.subr.mxu0 %v317
        %757 = vmatpush1.msra.mxu0 %v316
        %758 = vmatprep.subr.mxu0 %v301
        %759 = vmatpush1.msra.mxu0 %v300
        %760 = vmatprep.subr.mxu0 %v285
        %761 = vmatpush1.msra.mxu0 %v284
        %762 = vmatprep.subr.mxu0 0.0
        %763 = vmatpush2.msra.mxu0 0.0
        %764 = vmatprep.subr.mxu0 0.0
        %765 = vmatpush2.msra.mxu0 0.0
        %766 = vmatprep.subr.mxu0 0.0
        %767 = vmatpush2.msra.mxu0 0.0
        %768 = vmatprep.subr.mxu0 0.0
        %769 = vmatpush2.msra.mxu0 0.0
        %770 = vmatprep.subr.mxu0 0.0
        %771 = vmatpush2.msra.mxu0 0.0
        %772 = vmatprep.subr.mxu0 0.0
        %773 = vmatpush2.msra.mxu0 0.0
        %774 = vmatprep.subr.mxu0 0.0
        %775 = vmatpush2.msra.mxu0 0.0
        %776 = vmatprep.subr.mxu0 0.0
        %777 = vmatpush2.msra.mxu0 0.0
        %778 = vmatprep.subr.mxu0 0.0
        %779 = vmatpush2.msra.mxu0 0.0
        %780 = vmatprep.subr.mxu0 0.0
        %781 = vmatpush2.msra.mxu0 0.0
        %782 = vmatprep.subr.mxu0 0.0
        %783 = vmatpush2.msra.mxu0 0.0
        %784 = vmatprep.subr.mxu0 0.0
        %785 = vmatpush2.msra.mxu0 0.0
        %786 = vmatprep.subr.mxu0 0.0
        %787 = vmatpush2.msra.mxu0 0.0
        %788 = vmatprep.subr.mxu0 0.0
        %789 = vmatpush2.msra.mxu0 0.0
        %790 = vmatprep.subr.mxu0 0.0
        %791 = vmatpush2.msra.mxu0 0.0
        %792 = vmatprep.subr.mxu0 0.0
        %793 = vmatpush2.msra.mxu0 0.0
        %794 = vmatprep.mubr.f32.mxu0 0.0
        %795 = vmatmul.mubr.f32.gmra.mxu0 %v340
        %v796 = vpop.f32.mrf.mxu0
        %v797 = vadd.f32 0.0, %v796
        %v798 = vpop.f32.mrf.mxu0
        %v799 = vadd.f32 0.0, %v798
        %800 = vmatprep.mubr.f32.mxu0 0.0
        %801 = vmatmul.mubr.f32.gmra.mxu0 %v343
        %v802 = vpop.f32.mrf.mxu0
        %v803 = vadd.f32 0.0, %v802
        %v804 = vpop.f32.mrf.mxu0
        %v805 = vadd.f32 0.0, %v804
        %806 = vdwg.mxu0
        %807 = vmatprep.subr.mxu0 0.0
        %808 = vmatpush1.msra.mxu0 0.0
        %809 = vmatprep.subr.mxu0 0.0
        %810 = vmatpush1.msra.mxu0 0.0
        %811 = vmatprep.subr.mxu0 0.0
        %812 = vmatpush1.msra.mxu0 0.0
        %813 = vmatprep.subr.mxu0 0.0
        %814 = vmatpush1.msra.mxu0 0.0
        %815 = vmatprep.subr.mxu0 0.0
        %816 = vmatpush1.msra.mxu0 0.0
        %817 = vmatprep.subr.mxu0 0.0
        %818 = vmatpush1.msra.mxu0 0.0
        %819 = vmatprep.subr.mxu0 0.0
        %820 = vmatpush1.msra.mxu0 0.0
        %821 = vmatprep.subr.mxu0 0.0
        %822 = vmatpush1.msra.mxu0 0.0
        %823 = vmatprep.subr.mxu0 0.0
        %824 = vmatpush1.msra.mxu0 0.0
        %825 = vmatprep.subr.mxu0 0.0
        %826 = vmatpush1.msra.mxu0 0.0
        %827 = vmatprep.subr.mxu0 0.0
        %828 = vmatpush1.msra.mxu0 0.0
        %829 = vmatprep.subr.mxu0 0.0
        %830 = vmatpush1.msra.mxu0 0.0
        %831 = vmatprep.subr.mxu0 %v335
        %832 = vmatpush1.msra.mxu0 %v334
        %833 = vmatprep.subr.mxu0 %v319
        %834 = vmatpush1.msra.mxu0 %v318
        %835 = vmatprep.subr.mxu0 %v303
        %836 = vmatpush1.msra.mxu0 %v302
        %837 = vmatprep.subr.mxu0 %v287
        %838 = vmatpush1.msra.mxu0 %v286
        %839 = vmatprep.subr.mxu0 0.0
        %840 = vmatpush2.msra.mxu0 0.0
        %841 = vmatprep.subr.mxu0 0.0
        %842 = vmatpush2.msra.mxu0 0.0
        %843 = vmatprep.subr.mxu0 0.0
        %844 = vmatpush2.msra.mxu0 0.0
        %845 = vmatprep.subr.mxu0 0.0
        %846 = vmatpush2.msra.mxu0 0.0
        %847 = vmatprep.subr.mxu0 0.0
        %848 = vmatpush2.msra.mxu0 0.0
        %849 = vmatprep.subr.mxu0 0.0
        %850 = vmatpush2.msra.mxu0 0.0
        %851 = vmatprep.subr.mxu0 0.0
        %852 = vmatpush2.msra.mxu0 0.0
        %853 = vmatprep.subr.mxu0 0.0
        %854 = vmatpush2.msra.mxu0 0.0
        %855 = vmatprep.subr.mxu0 0.0
        %856 = vmatpush2.msra.mxu0 0.0
        %857 = vmatprep.subr.mxu0 0.0
        %858 = vmatpush2.msra.mxu0 0.0
        %859 = vmatprep.subr.mxu0 0.0
        %860 = vmatpush2.msra.mxu0 0.0
        %861 = vmatprep.subr.mxu0 0.0
        %862 = vmatpush2.msra.mxu0 0.0
        %863 = vmatprep.subr.mxu0 0.0
        %864 = vmatpush2.msra.mxu0 0.0
        %865 = vmatprep.subr.mxu0 0.0
        %866 = vmatpush2.msra.mxu0 0.0
        %867 = vmatprep.subr.mxu0 0.0
        %868 = vmatpush2.msra.mxu0 0.0
        %869 = vmatprep.subr.mxu0 0.0
        %870 = vmatpush2.msra.mxu0 0.0
        %871 = vmatprep.mubr.f32.mxu0 0.0
        %872 = vmatmul.mubr.f32.gmra.mxu0 %v340
        %v873 = vpop.f32.mrf.mxu0
        %v874 = vadd.f32 0.0, %v873
        %v875 = vpop.f32.mrf.mxu0
        %v876 = vadd.f32 0.0, %v875
        %877 = vmatprep.mubr.f32.mxu0 0.0
        %878 = vmatmul.mubr.f32.gmra.mxu0 %v343
        %v879 = vpop.f32.mrf.mxu0
        %v880 = vadd.f32 0.0, %v879
        %v881 = vpop.f32.mrf.mxu0
        %v882 = vadd.f32 0.0, %v881
        %883 = vdwg.mxu0
        %884 = vmatprep.subr.mxu0 0.0
        %885 = vmatpush1.msra.mxu0 0.0
        %886 = vmatprep.subr.mxu0 0.0
        %887 = vmatpush1.msra.mxu0 0.0
        %888 = vmatprep.subr.mxu0 0.0
        %889 = vmatpush1.msra.mxu0 0.0
        %890 = vmatprep.subr.mxu0 0.0
        %891 = vmatpush1.msra.mxu0 0.0
        %892 = vmatprep.subr.mxu0 0.0
        %893 = vmatpush1.msra.mxu0 0.0
        %894 = vmatprep.subr.mxu0 0.0
        %895 = vmatpush1.msra.mxu0 0.0
        %896 = vmatprep.subr.mxu0 0.0
        %897 = vmatpush1.msra.mxu0 0.0
        %898 = vmatprep.subr.mxu0 0.0
        %899 = vmatpush1.msra.mxu0 0.0
        %900 = vmatprep.subr.mxu0 0.0
        %901 = vmatpush1.msra.mxu0 0.0
        %902 = vmatprep.subr.mxu0 0.0
        %903 = vmatpush1.msra.mxu0 0.0
        %904 = vmatprep.subr.mxu0 0.0
        %905 = vmatpush1.msra.mxu0 0.0
        %906 = vmatprep.subr.mxu0 0.0
        %907 = vmatpush1.msra.mxu0 0.0
        %908 = vmatprep.subr.mxu0 %v337
        %909 = vmatpush1.msra.mxu0 %v336
        %910 = vmatprep.subr.mxu0 %v321
        %911 = vmatpush1.msra.mxu0 %v320
        %912 = vmatprep.subr.mxu0 %v305
        %913 = vmatpush1.msra.mxu0 %v304
        %914 = vmatprep.subr.mxu0 %v289
        %915 = vmatpush1.msra.mxu0 %v288
        %916 = vmatprep.subr.mxu0 0.0
        %917 = vmatpush2.msra.mxu0 0.0
        %918 = vmatprep.subr.mxu0 0.0
        %919 = vmatpush2.msra.mxu0 0.0
        %920 = vmatprep.subr.mxu0 0.0
        %921 = vmatpush2.msra.mxu0 0.0
        %922 = vmatprep.subr.mxu0 0.0
        %923 = vmatpush2.msra.mxu0 0.0
        %924 = vmatprep.subr.mxu0 0.0
        %925 = vmatpush2.msra.mxu0 0.0
        %926 = vmatprep.subr.mxu0 0.0
        %927 = vmatpush2.msra.mxu0 0.0
        %928 = vmatprep.subr.mxu0 0.0
        %929 = vmatpush2.msra.mxu0 0.0
        %930 = vmatprep.subr.mxu0 0.0
        %931 = vmatpush2.msra.mxu0 0.0
        %932 = vmatprep.subr.mxu0 0.0
        %933 = vmatpush2.msra.mxu0 0.0
        %934 = vmatprep.subr.mxu0 0.0
        %935 = vmatpush2.msra.mxu0 0.0
        %936 = vmatprep.subr.mxu0 0.0
        %937 = vmatpush2.msra.mxu0 0.0
        %938 = vmatprep.subr.mxu0 0.0
        %939 = vmatpush2.msra.mxu0 0.0
        %940 = vmatprep.subr.mxu0 0.0
        %941 = vmatpush2.msra.mxu0 0.0
        %942 = vmatprep.subr.mxu0 0.0
        %943 = vmatpush2.msra.mxu0 0.0
        %944 = vmatprep.subr.mxu0 0.0
        %945 = vmatpush2.msra.mxu0 0.0
        %946 = vmatprep.subr.mxu0 0.0
        %947 = vmatpush2.msra.mxu0 0.0
        %948 = vmatprep.mubr.f32.mxu0 0.0
        %949 = vmatmul.mubr.f32.gmra.mxu0 %v340
        %v950 = vpop.f32.mrf.mxu0
        %v951 = vadd.f32 0.0, %v950
        %v952 = vpop.f32.mrf.mxu0
        %v953 = vadd.f32 0.0, %v952
        %954 = vmatprep.mubr.f32.mxu0 0.0
        %955 = vmatmul.mubr.f32.gmra.mxu0 %v343
        %v956 = vpop.f32.mrf.mxu0
        %v957 = vadd.f32 0.0, %v956
        %v958 = vpop.f32.mrf.mxu0
        %v959 = vadd.f32 0.0, %v958
        %960 = vdwg.mxu0
        %v961 = vpack.c.bf16 %v418, %v412
        %v962 = vpack.c.bf16 %v420, %v414
        %v963 = vpack.c.bf16 %v495, %v489
        %v964 = vpack.c.bf16 %v497, %v491
        %v965 = vpack.c.bf16 %v572, %v566
        %v966 = vpack.c.bf16 %v574, %v568
        %v967 = vpack.c.bf16 %v649, %v643
        %v968 = vpack.c.bf16 %v651, %v645
        %v969 = vpack.c.bf16 %v726, %v720
        %v970 = vpack.c.bf16 %v728, %v722
        %v971 = vpack.c.bf16 %v803, %v797
        %v972 = vpack.c.bf16 %v805, %v799
        %v973 = vpack.c.bf16 %v880, %v874
        %v974 = vpack.c.bf16 %v882, %v876
        %v975 = vpack.c.bf16 %v957, %v951
        %v976 = vpack.c.bf16 %v959, %v953
        %v993 = vunpack.c.l.b16 %v961
        %v994 = vunpack.c.l.b16 %v962
        %v995 = vunpack.c.l.b16 %v963
        %v996 = vunpack.c.l.b16 %v964
        %v997 = vunpack.c.l.b16 %v965
        %v998 = vunpack.c.l.b16 %v966
        %v999 = vunpack.c.l.b16 %v967
        %v1000 = vunpack.c.l.b16 %v968
        %v1001 = vunpack.c.l.b16 %v969
        %v1002 = vunpack.c.l.b16 %v970
        %v1003 = vunpack.c.l.b16 %v971
        %v1004 = vunpack.c.l.b16 %v972
        %v1005 = vunpack.c.l.b16 %v973
        %v1006 = vunpack.c.l.b16 %v974
        %v1007 = vunpack.c.l.b16 %v975
        %v1008 = vunpack.c.l.b16 %v976
        %v1009 = vunpack.c.h.b16 %v961
        %v1010 = vunpack.c.h.b16 %v962
        %v1011 = vunpack.c.h.b16 %v963
        %v1012 = vunpack.c.h.b16 %v964
        %v1013 = vunpack.c.h.b16 %v965
        %v1014 = vunpack.c.h.b16 %v966
        %v1015 = vunpack.c.h.b16 %v967
        %v1016 = vunpack.c.h.b16 %v968
        %v1017 = vunpack.c.h.b16 %v969
        %v1018 = vunpack.c.h.b16 %v970
        %v1019 = vunpack.c.h.b16 %v971
        %v1020 = vunpack.c.h.b16 %v972
        %v1021 = vunpack.c.h.b16 %v973
        %v1022 = vunpack.c.h.b16 %v974
        %v1023 = vunpack.c.h.b16 %v975
        %v1024 = vunpack.c.h.b16 %v976
        %v1025 = vpack.c.b16 %v994, %v993
        %v1026 = vpack.c.b16 %v996, %v995
        %v1027 = vpack.c.b16 %v998, %v997
        %v1028 = vpack.c.b16 %v1000, %v999
        %v1029 = vpack.c.b16 %v1002, %v1001
        %v1030 = vpack.c.b16 %v1004, %v1003
        %v1031 = vpack.c.b16 %v1006, %v1005
        %v1032 = vpack.c.b16 %v1008, %v1007
        %v1033 = vpack.c.b16 %v1010, %v1009
        %v1034 = vpack.c.b16 %v1012, %v1011
        %v1035 = vpack.c.b16 %v1014, %v1013
        %v1036 = vpack.c.b16 %v1016, %v1015
        %v1037 = vpack.c.b16 %v1018, %v1017
        %v1038 = vpack.c.b16 %v1020, %v1019
        %v1039 = vpack.c.b16 %v1022, %v1021
        %v1040 = vpack.c.b16 %v1024, %v1023
        %1057 = vst [vmem:[%s237] sm:$0xff] %v1025
        %1058 = vst [vmem:[%s237 + $0x8] sm:$0xff] %v1026
        %1059 = vst [vmem:[%s237 + $0x10] sm:$0xff] %v1027
        %1060 = vst [vmem:[%s237 + $0x18] sm:$0xff] %v1028
        %1061 = vst [vmem:[%s237 + $0x20] sm:$0xff] %v1029
        %1062 = vst [vmem:[%s237 + $0x28] sm:$0xff] %v1030
        %1063 = vst [vmem:[%s237 + $0x30] sm:$0xff] %v1031
        %1064 = vst [vmem:[%s237 + $0x38] sm:$0xff] %v1032
        %1065 = vst [vmem:[%s237 + $0x40] sm:$0x77] %v1033
        %1066 = vst [vmem:[%s237 + $0x48] sm:$0x77] %v1034
        %1067 = vst [vmem:[%s237 + $0x50] sm:$0x77] %v1035
        %1068 = vst [vmem:[%s237 + $0x58] sm:$0x77] %v1036
        %1069 = vst [vmem:[%s237 + $0x60] sm:$0x77] %v1037
        %1070 = vst [vmem:[%s237 + $0x68] sm:$0x77] %v1038
        %1071 = vst [vmem:[%s237 + $0x70] sm:$0x77] %v1039
        %1072 = vst [vmem:[%s237 + $0x78] sm:$0x77] %v1040
        %s1073 = sand.u32 %s84, 1
        %s1074 = sand.u32 %s84, 1
        %s1075 = smul.addr %s1074, 128
        %s1076 = scalar_lea.vmem [#allocation3], %s1075
        // Predicated region
        $region52: #{_lambda_.4} parent=46 // pred_check
          %p1077 = pneg %p94
        $region53: #{_lambda_.4} parent=46 // pred_check_branch
          %1079 = sbr.rel (%p1077) target = $region55
        $region54: #{_lambda_.4} parent=46 // pred_region
          %s1080 = smul.u32 16, %s18
          %s1081 = smul.addr %s17, 64
          %s1082 = sadd.s32 %s1080, %s1081
          %s1083 = smul.addr %s1082, 4
          %s1084 = scalar_lea.vmem %s2, %s1083
          // Predicated region
          $region56: #{_lambda_.4} parent=54 // pred_check
            _
          $region57: #{_lambda_.4} parent=54 // pred_check_branch
            %1086 = sbr.rel (0) target = $region59
          $region58: #{_lambda_.4} parent=54 // pred_region
            // Predicated region
            $region60: #{_lambda_.4} parent=58 // pred_check
              _
            $region61: #{_lambda_.4} parent=58 // pred_check_branch
              %1088 = sbr.rel (0) target = $region63
            $region62: #{_lambda_.4} parent=58 // pred_region
              loop: start=0, step=1, limit=1
              $region64: #{_lambda_.4} parent=62 // loop_pre_header
                _
              $region65: #{_lambda_.4} parent=62 // loop_header
                %s1090 = sphi 0, %s1094
                %p1091 = scmp.ge.s32.totalorder %s1090, 1
                %s1095 = sphi %s1076, %s1076
                %s1096 = sphi %s1084, %s1084
              $region66: #{_lambda_.4} parent=62 // loop_header_branch
                %1093 = sbr.rel (%p1091) target = $region70
              $region67: #{_lambda_.4} parent=62 // loop_body
                %v1097 = vld [vmem:[%s1095] sm:$0xff]
                %1098 = vst [vmem:[%s1096] sm:$0xff] %v1097
                %v1099 = vld [vmem:[%s1095 + $0x8] sm:$0xff]
                %1100 = vst [vmem:[%s1096 + $0x8] sm:$0xff] %v1099
                %v1101 = vld [vmem:[%s1095 + $0x10] sm:$0xff]
                %1102 = vst [vmem:[%s1096 + $0x10] sm:$0xff] %v1101
                %v1103 = vld [vmem:[%s1095 + $0x18] sm:$0xff]
                %1104 = vst [vmem:[%s1096 + $0x18] sm:$0xff] %v1103
                %v1105 = vld [vmem:[%s1095 + $0x20] sm:$0xff]
                %1106 = vst [vmem:[%s1096 + $0x20] sm:$0xff] %v1105
                %v1107 = vld [vmem:[%s1095 + $0x28] sm:$0xff]
                %1108 = vst [vmem:[%s1096 + $0x28] sm:$0xff] %v1107
                %v1109 = vld [vmem:[%s1095 + $0x30] sm:$0xff]
                %1110 = vst [vmem:[%s1096 + $0x30] sm:$0xff] %v1109
                %v1111 = vld [vmem:[%s1095 + $0x38] sm:$0xff]
                %1112 = vst [vmem:[%s1096 + $0x38] sm:$0xff] %v1111
                %v1113 = vld [vmem:[%s1095 + $0x40] sm:$0xff]
                %1114 = vst [vmem:[%s1096 + $0x80] sm:$0xff] %v1113
                %v1115 = vld [vmem:[%s1095 + $0x48] sm:$0xff]
                %1116 = vst [vmem:[%s1096 + $0x88] sm:$0xff] %v1115
                %v1117 = vld [vmem:[%s1095 + $0x50] sm:$0xff]
                %1118 = vst [vmem:[%s1096 + $0x90] sm:$0xff] %v1117
                %v1119 = vld [vmem:[%s1095 + $0x58] sm:$0xff]
                %1120 = vst [vmem:[%s1096 + $0x98] sm:$0xff] %v1119
                %v1121 = vld [vmem:[%s1095 + $0x60] sm:$0xff]
                %1122 = vst [vmem:[%s1096 + $0xa0] sm:$0xff] %v1121
                %v1123 = vld [vmem:[%s1095 + $0x68] sm:$0xff]
                %1124 = vst [vmem:[%s1096 + $0xa8] sm:$0xff] %v1123
                %v1125 = vld [vmem:[%s1095 + $0x70] sm:$0xff]
                %1126 = vst [vmem:[%s1096 + $0xb0] sm:$0xff] %v1125
                %v1127 = vld [vmem:[%s1095 + $0x78] sm:$0xff]
                %1128 = vst [vmem:[%s1096 + $0xb8] sm:$0xff] %v1127
              $region68: #{_lambda_.4} parent=62 // loop_footer
                %s1094 = sadd.s32 1, %s1090
              $region69: #{_lambda_.4} parent=62 // loop_footer_branch
                %1089 = sbr.rel target = $region65
              $region70: #{_lambda_.4} parent=62 // loop_exit
                _
            $region63: #{_lambda_.4} parent=58 // pred_fallthru
              _
            // Predicated region
            $region71: #{_lambda_.4} parent=58 // pred_check
              _
            $region72: #{_lambda_.4} parent=58 // pred_check_branch
              %1130 = sbr.rel target = $region74
            $region73: #{_lambda_.4} parent=58 // pred_region
              _
            $region74: #{_lambda_.4} parent=58 // pred_fallthru
              _
          $region59: #{_lambda_.4} parent=54 // pred_fallthru
            _
          %1131 = vnop
        $region55: #{_lambda_.4} parent=46 // pred_fallthru
          _
      $region47: #{_lambda_.4} parent=5 // pred_fallthru
        _
      %p1132 = scmp.le.s32.totalorder 2, %s8
      // Predicated region
      $region75: #{_lambda_.4} parent=5 // pred_check
        %p1133 = pneg %p1132
      $region76: #{_lambda_.4} parent=5 // pred_check_branch
        %1135 = sbr.rel (%p1133) target = $region78
      $region77: #{_lambda_.4} parent=5 // pred_region
        %s1136 = ssub.s32 %s8, 2
        // Predicated region
        $region79: #{_lambda_.4} parent=77 // pred_check
          %p1137 = pneg %p100
        $region80: #{_lambda_.4} parent=77 // pred_check_branch
          %1139 = sbr.rel (%p1137) target = $region82
        $region81: #{_lambda_.4} parent=77 // pred_region
          %s1140 = sand.u32 %s85, 1
          %s1141 = sand.u32 %s85, 1
          %s1142 = smul.addr %s1141, 128
          %s1143 = scalar_lea.vmem [#allocation3], %s1142
        $region82: #{_lambda_.4} parent=77 // pred_fallthru
          _
      $region78: #{_lambda_.4} parent=5 // pred_fallthru
        _
    $region6: #{_lambda_.4} parent=1 // loop_footer
      %s12 = sadd.s32 1, %s8
    $region7: #{_lambda_.4} parent=1 // loop_footer_branch
      %7 = sbr.rel target = $region3
    $region8: #{_lambda_.4} parent=1 // loop_exit
      _

// kernel: _lambda_.5
$region0: #{_lambda_.5}
  #allocation0 [shape = 'u32[]', space=smem, size = 0x4, offset = 0x4, fixed_abs, tag = 'smem constant byte address 0x4 - core index']
  #allocation1 [shape = 'u32[144,128]{1,0:T(1,128)}', space=vmem, size = 0x12000, scoped, tag = 'internal scratch']
  %s0 = inlined_call_operand.vmem [shape: f32[14,32], index: 0, kind: input, shape index: {}]
  %s1 = inlined_call_operand.vmem [shape: bf16[2,14,32,128], index: 1, kind: input, shape index: {}]
  %s2 = inlined_call_operand.vmem [shape: f32[2,14,14,128], index: 2, kind: output, shape index: {}]
  %s3 = sld [smem:[#allocation0]]
  $region41: #{_lambda_.5} parent=0
    _
  %s5 = ssub.s32 1, %s3
  %s6 = scalar_select 0, %s5, %s3
  loop: start=0, step=1, limit=4
  $region2: #{_lambda_.5} parent=0 // loop_pre_header
    _
  $region3: #{_lambda_.5} parent=0 // loop_header
    %s8 = sphi 0, %s12
    %p9 = scmp.ge.s32.totalorder %s8, 4
    %s15 = sphi 0, %s27
    %s16 = sphi 0, %s23
    %s17 = sphi 0, %s15
    %s18 = sphi 0, %s16
    %s19 = sphi 0, %s17
    %s20 = sphi 0, %s18
    %s28 = sphi 0, %s28
    %s30 = sphi 0, %s28
    %s31 = sphi 0, %s30
    %s45 = sphi 0, %s31
    %s53 = sphi 0, %s55
    %s56 = sphi 0, %s53
    %s57 = sphi 0, %s56
    %s73 = sphi 0, %s57
    %s81 = sphi 0, %s83
    %s84 = sphi 0, %s81
    %s85 = sphi 0, %s84
    %s101 = sphi 0, %s85
  $region4: #{_lambda_.5} parent=0 // loop_header_branch
    %11 = sbr.rel (%p9) target = $region8
  $region5: #{_lambda_.5} parent=0 // loop_body
    %s13 = ssub.s32 %s8, 1
    %s14 = ssub.s32 %s8, 2
    %s21 = sadd.s32 1, %s16
    %p22 = scmp.ge.s32.totalorder %s21, 1
    %s23 = scalar_select %p22, 0, %s21
    %s24 = sadd.s32 1, %s15
    %s25 = scalar_select %p22, %s24, %s15
    %p26 = scmp.ge.s32.totalorder %s25, 2
    %s27 = scalar_select %p26, 0, %s25
    %s29 = sadd.s32 %s28, 1
    %p32 = scmp.eq.s32.totalorder %s8, 1
    %p33 = scmp.ne.s32.totalorder %s28, %s30
    %p34 = scmp.eq.s32.totalorder %s8, 0
    %p35 = por %p33, %p34
    %p36 = scmp.ne.s32.totalorder %s28, %s30
    %p37 = scmp.eq.s32.totalorder %s13, 1
    %p38 = por %p36, %p37
    %p39 = scmp.ne.s32.totalorder %s30, %s31
    %p40 = scmp.eq.s32.totalorder %s13, 0
    %p41 = por %p39, %p40
    %p42 = scmp.ne.s32.totalorder %s30, %s31
    %p43 = scmp.eq.s32.totalorder %s14, 1
    %p44 = por %p42, %p43
    %p46 = scmp.ne.s32.totalorder %s31, %s45
    %p47 = scmp.eq.s32.totalorder %s14, 0
    %p48 = por %p46, %p47
    %s49 = ssub.s32 %s15, %s27
    %s50 = ssub.s32 %s16, %s23
    %s51 = sor.u32 %s49, %s50
    %p52 = scmp.eq.s32.totalorder %s51, 0
    %s54 = sadd.s32 %s53, 1
    %s55 = scalar_select %p52, %s53, %s54
    %p58 = pneg %p52
    %p59 = scmp.eq.s32.totalorder %s8, 1
    %p60 = por %p58, %p59
    %p61 = scmp.ne.s32.totalorder %s53, %s56
    %p62 = scmp.eq.s32.totalorder %s8, 0
    %p63 = por %p61, %p62
    %p64 = scmp.ne.s32.totalorder %s53, %s56
    %p65 = scmp.eq.s32.totalorder %s13, 1
    %p66 = por %p64, %p65
    %p67 = scmp.ne.s32.totalorder %s56, %s57
    %p68 = scmp.eq.s32.totalorder %s13, 0
    %p69 = por %p67, %p68
    %p70 = scmp.ne.s32.totalorder %s56, %s57
    %p71 = scmp.eq.s32.totalorder %s14, 1
    %p72 = por %p70, %p71
    %p74 = scmp.ne.s32.totalorder %s57, %s73
    %p75 = scmp.eq.s32.totalorder %s14, 0
    %p76 = por %p74, %p75
    %s77 = ssub.s32 %s15, %s27
    %s78 = ssub.s32 %s16, %s23
    %s79 = sor.u32 %s77, %s78
    %p80 = scmp.eq.s32.totalorder %s79, 0
    %s82 = sadd.s32 %s81, 1
    %s83 = scalar_select %p80, %s81, %s82
    %p86 = pneg %p80
    %p87 = scmp.eq.s32.totalorder %s8, 1
    %p88 = por %p86, %p87
    %p89 = scmp.ne.s32.totalorder %s81, %s84
    %p90 = scmp.eq.s32.totalorder %s8, 0
    %p91 = por %p89, %p90
    %p92 = scmp.ne.s32.totalorder %s81, %s84
    %p93 = scmp.eq.s32.totalorder %s13, 1
    %p94 = por %p92, %p93
    %p95 = scmp.ne.s32.totalorder %s84, %s85
    %p96 = scmp.eq.s32.totalorder %s13, 0
    %p97 = por %p95, %p96
    %p98 = scmp.ne.s32.totalorder %s84, %s85
    %p99 = scmp.eq.s32.totalorder %s14, 1
    %p100 = por %p98, %p99
    %p102 = scmp.ne.s32.totalorder %s85, %s101
    %p103 = scmp.eq.s32.totalorder %s14, 0
    %p104 = por %p102, %p103
    %p105 = scmp.le.s32.totalorder 1, %s8
    %p106 = scmp.lt.s32.totalorder %s8, 3
    %p107 = pnand %p105, %p106
    %p108 = pneg %p107
    // Predicated region
    $region9: #{_lambda_.5} parent=5 // pred_check
      _
    $region10: #{_lambda_.5} parent=5 // pred_check_branch
      %110 = sbr.rel (%p107) target = $region12
    $region11: #{_lambda_.5} parent=5 // pred_region
      %s111 = ssub.s32 %s8, 1
      // Predicated region
      $region13: #{_lambda_.5} parent=11 // pred_check
        %p112 = pneg %p41
      $region14: #{_lambda_.5} parent=11 // pred_check_branch
        %114 = sbr.rel (%p112) target = $region16
      $region15: #{_lambda_.5} parent=11 // pred_region
        _
      $region16: #{_lambda_.5} parent=11 // pred_fallthru
        _
    $region12: #{_lambda_.5} parent=5 // pred_fallthru
      _
    %p115 = scmp.lt.s32.totalorder %s8, 2
    // Predicated region
    $region17: #{_lambda_.5} parent=5 // pred_check
      %p116 = pneg %p115
    $region18: #{_lambda_.5} parent=5 // pred_check_branch
      %118 = sbr.rel (%p116) target = $region20
    $region19: #{_lambda_.5} parent=5 // pred_region
      // Predicated region
      $region21: #{_lambda_.5} parent=19 // pred_check
        %p119 = pneg %p63
      $region22: #{_lambda_.5} parent=19 // pred_check_branch
        %121 = sbr.rel (%p119) target = $region24
      $region23: #{_lambda_.5} parent=19 // pred_region
        %p122 = scmp.lt.s32.totalorder %s15, 1
        %s123 = scalar_select %p122, %s15, 1
        %p124 = scmp.lt.s32.totalorder %s16, 0
        %s125 = scalar_select %p124, %s16, 0
        %s126 = smul.addr %s123, 56
        %s127 = sadd.s32 %s125, %s126
        %s128 = smul.addr %s127, 4
        %s129 = scalar_lea.vmem %s1, %s128
      $region24: #{_lambda_.5} parent=19 // pred_fallthru
        _
    $region20: #{_lambda_.5} parent=5 // pred_fallthru
      _
    %p130 = scmp.le.s32.totalorder 1, %s8
    %p131 = scmp.lt.s32.totalorder %s8, 3
    %p132 = pnand %p130, %p131
    %p133 = pneg %p132
    // Predicated region
    $region25: #{_lambda_.5} parent=5 // pred_check
      _
    $region26: #{_lambda_.5} parent=5 // pred_check_branch
      %135 = sbr.rel (%p132) target = $region28
    $region27: #{_lambda_.5} parent=5 // pred_region
      %s136 = ssub.s32 %s8, 1
      %p137 = pneg %p41
      %p138 = pneg %p38
      %p139 = scmp.lt.s32.totalorder %s17, 1
      %s140 = scalar_select %p139, %s17, 1
      %p141 = scmp.lt.s32.totalorder %s18, 0
      %s142 = scalar_select %p141, %s18, 0
      %s143 = smul.addr %s140, 56
      %s144 = sadd.s32 %s142, %s143
      %s145 = smul.addr %s144, 4
      %s146 = scalar_lea.vmem %s1, %s145
      %p147 = pneg %p69
      %p148 = pneg %p66
      %p149 = pneg %p97
      %p150 = pneg %p94
      %p151 = scmp.lt.s32.totalorder %s17, 1
      %s152 = scalar_select %p151, %s17, 1
      %p153 = scmp.lt.s32.totalorder %s18, 0
      %s154 = scalar_select %p153, %s18, 0
      %s155 = smul.addr %s152, 28
      %s156 = sadd.s32 %s154, %s155
      %s157 = smul.addr %s156, 8
      %s158 = scalar_lea.vmem %s2, %s157
      %p159 = scmp.lt.s32.totalorder %s17, 1
      %s160 = scalar_select %p159, %s17, 1
      %p161 = scmp.lt.s32.totalorder %s18, 0
      %s162 = scalar_select %p161, %s18, 0
      %s163 = smul.addr %s160, 56
      %s164 = sadd.s32 %s162, %s163
      %s165 = smul.addr %s164, 4
      %s166 = scalar_lea.vmem %s1, %s165
      %p167 = scmp.lt.s32.totalorder %s17, 1
      %s168 = scalar_select %p167, %s17, 1
      %p169 = scmp.lt.s32.totalorder %s18, 0
      %s170 = scalar_select %p169, %s18, 0
      %s171 = smul.addr %s168, 28
      %s172 = sadd.s32 %s170, %s171
      %s173 = smul.addr %s172, 8
      %s174 = scalar_lea.vmem %s2, %s173
      %v175 = vld [vmem:[%s0] sm:$0xff]
      %v176 = vld [vmem:[%s0 + $0x8] sm:$0x3f]
      %v177 = vld [vmem:[%s166] sm:$0xf]
      %v178 = vld [vmem:[%s166 + $0x4] sm:$0xf]
      %v179 = vld [vmem:[%s166 + $0x8] sm:$0xf]
      %v180 = vld [vmem:[%s166 + $0xc] sm:$0xf]
      %v181 = vunpack.c.l.bf16 %v177
      %v182 = vunpack.c.l.bf16 %v178
      %v183 = vunpack.c.l.bf16 %v179
      %v184 = vunpack.c.l.bf16 %v180
      %vm185 = vcmask 261120
      %v187 = vsel %vm185, %v175, 0
      %v190 = vsel %vm185, %v176, 0
      %192 = vmatprep.subr.mxu0 0.0
      %193 = vmatpush1.msra.mxu0 0.0
      %194 = vmatprep.subr.mxu0 0.0
      %195 = vmatpush1.msra.mxu0 0.0
      %196 = vmatprep.subr.mxu0 0.0
      %197 = vmatpush1.msra.mxu0 0.0
      %198 = vmatprep.subr.mxu0 0.0
      %199 = vmatpush1.msra.mxu0 0.0
      %200 = vmatprep.subr.mxu0 0.0
      %201 = vmatpush1.msra.mxu0 0.0
      %202 = vmatprep.subr.mxu0 0.0
      %203 = vmatpush1.msra.mxu0 0.0
      %204 = vmatprep.subr.mxu0 0.0
      %205 = vmatpush1.msra.mxu0 0.0
      %206 = vmatprep.subr.mxu0 0.0
      %207 = vmatpush1.msra.mxu0 0.0
      %208 = vmatprep.subr.mxu0 0.0
      %209 = vmatpush1.msra.mxu0 0.0
      %210 = vmatprep.subr.mxu0 0.0
      %211 = vmatpush1.msra.mxu0 0.0
      %212 = vmatprep.subr.mxu0 0.0
      %213 = vmatpush1.msra.mxu0 0.0
      %214 = vmatprep.subr.mxu0 0.0
      %215 = vmatpush1.msra.mxu0 0.0
      %216 = vmatprep.subr.mxu0 0.0
      %217 = vmatpush1.msra.mxu0 %v184
      %218 = vmatprep.subr.mxu0 0.0
      %219 = vmatpush1.msra.mxu0 %v183
      %220 = vmatprep.subr.mxu0 0.0
      %221 = vmatpush1.msra.mxu0 %v182
      %222 = vmatprep.subr.mxu0 0.0
      %223 = vmatpush1.msra.mxu0 %v181
      %224 = vmatprep.subr.mxu0 0.0
      %225 = vmatpush2.msra.mxu0 0.0
      %226 = vmatprep.subr.mxu0 0.0
      %227 = vmatpush2.msra.mxu0 0.0
      %228 = vmatprep.subr.mxu0 0.0
      %229 = vmatpush2.msra.mxu0 0.0
      %230 = vmatprep.subr.mxu0 0.0
      %231 = vmatpush2.msra.mxu0 0.0
      %232 = vmatprep.subr.mxu0 0.0
      %233 = vmatpush2.msra.mxu0 0.0
      %234 = vmatprep.subr.mxu0 0.0
      %235 = vmatpush2.msra.mxu0 0.0
      %236 = vmatprep.subr.mxu0 0.0
      %237 = vmatpush2.msra.mxu0 0.0
      %238 = vmatprep.subr.mxu0 0.0
      %239 = vmatpush2.msra.mxu0 0.0
      %240 = vmatprep.subr.mxu0 0.0
      %241 = vmatpush2.msra.mxu0 0.0
      %242 = vmatprep.subr.mxu0 0.0
      %243 = vmatpush2.msra.mxu0 0.0
      %244 = vmatprep.subr.mxu0 0.0
      %245 = vmatpush2.msra.mxu0 0.0
      %246 = vmatprep.subr.mxu0 0.0
      %247 = vmatpush2.msra.mxu0 0.0
      %248 = vmatprep.subr.mxu0 0.0
      %249 = vmatpush2.msra.mxu0 0.0
      %250 = vmatprep.subr.mxu0 0.0
      %251 = vmatpush2.msra.mxu0 0.0
      %252 = vmatprep.subr.mxu0 0.0
      %253 = vmatpush2.msra.mxu0 0.0
      %254 = vmatprep.subr.mxu0 0.0
      %255 = vmatpush2.msra.mxu0 0.0
      %256 = vmatprep.mubr.f32.mxu0 0.0
      %257 = vmatmul.mubr.f32.gmra.mxu0 %v187
      %v258 = vpop.f32.mrf.mxu0
      %v259 = vadd.f32 0.0, %v258
      %v260 = vpop.f32.mrf.mxu0
      %261 = vmatprep.mubr.f32.mxu0 0.0
      %262 = vmatmul.mubr.f32.gmra.mxu0 %v190
      %v263 = vpop.f32.mrf.mxu0
      %v264 = vadd.f32 0.0, %v263
      %v265 = vpop.f32.mrf.mxu0
      %266 = vdwg.mxu0
      %267 = vst [vmem:[%s174] sm:$0xff] %v259
      %268 = vst [vmem:[%s174 + $0x8] sm:$0x3f] %v264
      %v269 = vld [vmem:[%s0] sm:$0xff]
      %v270 = vld [vmem:[%s0 + $0x8] sm:$0x3f]
      %s271 = scalar_lea.vmem %s166, 16
      %v272 = vld [vmem:[%s271] sm:$0xf]
      %v273 = vld [vmem:[%s271 + $0x4] sm:$0xf]
      %v274 = vld [vmem:[%s271 + $0x8] sm:$0xf]
      %v275 = vld [vmem:[%s271 + $0xc] sm:$0xf]
      %v276 = vunpack.c.l.bf16 %v272
      %v277 = vunpack.c.l.bf16 %v273
      %v278 = vunpack.c.l.bf16 %v274
      %v279 = vunpack.c.l.bf16 %v275
      %v281 = vsel %vm185, %v269, 0
      %v284 = vsel %vm185, %v270, 0
      %286 = vmatprep.subr.mxu0 0.0
      %287 = vmatpush1.msra.mxu0 0.0
      %288 = vmatprep.subr.mxu0 0.0
      %289 = vmatpush1.msra.mxu0 0.0
      %290 = vmatprep.subr.mxu0 0.0
      %291 = vmatpush1.msra.mxu0 0.0
      %292 = vmatprep.subr.mxu0 0.0
      %293 = vmatpush1.msra.mxu0 0.0
      %294 = vmatprep.subr.mxu0 0.0
      %295 = vmatpush1.msra.mxu0 0.0
      %296 = vmatprep.subr.mxu0 0.0
      %297 = vmatpush1.msra.mxu0 0.0
      %298 = vmatprep.subr.mxu0 0.0
      %299 = vmatpush1.msra.mxu0 0.0
      %300 = vmatprep.subr.mxu0 0.0
      %301 = vmatpush1.msra.mxu0 0.0
      %302 = vmatprep.subr.mxu0 0.0
      %303 = vmatpush1.msra.mxu0 0.0
      %304 = vmatprep.subr.mxu0 0.0
      %305 = vmatpush1.msra.mxu0 0.0
      %306 = vmatprep.subr.mxu0 0.0
      %307 = vmatpush1.msra.mxu0 0.0
      %308 = vmatprep.subr.mxu0 0.0
      %309 = vmatpush1.msra.mxu0 0.0
      %310 = vmatprep.subr.mxu0 0.0
      %311 = vmatpush1.msra.mxu0 %v279
      %312 = vmatprep.subr.mxu0 0.0
      %313 = vmatpush1.msra.mxu0 %v278
      %314 = vmatprep.subr.mxu0 0.0
      %315 = vmatpush1.msra.mxu0 %v277
      %316 = vmatprep.subr.mxu0 0.0
      %317 = vmatpush1.msra.mxu0 %v276
      %318 = vmatprep.subr.mxu0 0.0
      %319 = vmatpush2.msra.mxu0 0.0
      %320 = vmatprep.subr.mxu0 0.0
      %321 = vmatpush2.msra.mxu0 0.0
      %322 = vmatprep.subr.mxu0 0.0
      %323 = vmatpush2.msra.mxu0 0.0
      %324 = vmatprep.subr.mxu0 0.0
      %325 = vmatpush2.msra.mxu0 0.0
      %326 = vmatprep.subr.mxu0 0.0
      %327 = vmatpush2.msra.mxu0 0.0
      %328 = vmatprep.subr.mxu0 0.0
      %329 = vmatpush2.msra.mxu0 0.0
      %330 = vmatprep.subr.mxu0 0.0
      %331 = vmatpush2.msra.mxu0 0.0
      %332 = vmatprep.subr.mxu0 0.0
      %333 = vmatpush2.msra.mxu0 0.0
      %334 = vmatprep.subr.mxu0 0.0
      %335 = vmatpush2.msra.mxu0 0.0
      %336 = vmatprep.subr.mxu0 0.0
      %337 = vmatpush2.msra.mxu0 0.0
      %338 = vmatprep.subr.mxu0 0.0
      %339 = vmatpush2.msra.mxu0 0.0
      %340 = vmatprep.subr.mxu0 0.0
      %341 = vmatpush2.msra.mxu0 0.0
      %342 = vmatprep.subr.mxu0 0.0
      %343 = vmatpush2.msra.mxu0 0.0
      %344 = vmatprep.subr.mxu0 0.0
      %345 = vmatpush2.msra.mxu0 0.0
      %346 = vmatprep.subr.mxu0 0.0
      %347 = vmatpush2.msra.mxu0 0.0
      %348 = vmatprep.subr.mxu0 0.0
      %349 = vmatpush2.msra.mxu0 0.0
      %350 = vmatprep.mubr.f32.mxu0 0.0
      %351 = vmatmul.mubr.f32.gmra.mxu0 %v281
      %v352 = vpop.f32.mrf.mxu0
      %v353 = vadd.f32 0.0, %v352
      %v354 = vpop.f32.mrf.mxu0
      %355 = vmatprep.mubr.f32.mxu0 0.0
      %356 = vmatmul.mubr.f32.gmra.mxu0 %v284
      %v357 = vpop.f32.mrf.mxu0
      %v358 = vadd.f32 0.0, %v357
      %v359 = vpop.f32.mrf.mxu0
      %360 = vdwg.mxu0
      %s361 = scalar_lea.vmem %s174, 16
      %362 = vst [vmem:[%s361] sm:$0xff] %v353
      %363 = vst [vmem:[%s361 + $0x8] sm:$0x3f] %v358
      %v364 = vld [vmem:[%s0] sm:$0xff]
      %v365 = vld [vmem:[%s0 + $0x8] sm:$0x3f]
      %s366 = scalar_lea.vmem %s166, 32
      %v367 = vld [vmem:[%s366] sm:$0xf]
      %v368 = vld [vmem:[%s366 + $0x4] sm:$0xf]
      %v369 = vld [vmem:[%s366 + $0x8] sm:$0xf]
      %v370 = vld [vmem:[%s366 + $0xc] sm:$0xf]
      %v371 = vunpack.c.l.bf16 %v367
      %v372 = vunpack.c.l.bf16 %v368
      %v373 = vunpack.c.l.bf16 %v369
      %v374 = vunpack.c.l.bf16 %v370
      %v376 = vsel %vm185, %v364, 0
      %v379 = vsel %vm185, %v365, 0
      %381 = vmatprep.subr.mxu0 0.0
      %382 = vmatpush1.msra.mxu0 0.0
      %383 = vmatprep.subr.mxu0 0.0
      %384 = vmatpush1.msra.mxu0 0.0
      %385 = vmatprep.subr.mxu0 0.0
      %386 = vmatpush1.msra.mxu0 0.0
      %387 = vmatprep.subr.mxu0 0.0
      %388 = vmatpush1.msra.mxu0 0.0
      %389 = vmatprep.subr.mxu0 0.0
      %390 = vmatpush1.msra.mxu0 0.0
      %391 = vmatprep.subr.mxu0 0.0
      %392 = vmatpush1.msra.mxu0 0.0
      %393 = vmatprep.subr.mxu0 0.0
      %394 = vmatpush1.msra.mxu0 0.0
      %395 = vmatprep.subr.mxu0 0.0
      %396 = vmatpush1.msra.mxu0 0.0
      %397 = vmatprep.subr.mxu0 0.0
      %398 = vmatpush1.msra.mxu0 0.0
      %399 = vmatprep.subr.mxu0 0.0
      %400 = vmatpush1.msra.mxu0 0.0
      %401 = vmatprep.subr.mxu0 0.0
      %402 = vmatpush1.msra.mxu0 0.0
      %403 = vmatprep.subr.mxu0 0.0
      %404 = vmatpush1.msra.mxu0 0.0
      %405 = vmatprep.subr.mxu0 0.0
      %406 = vmatpush1.msra.mxu0 %v374
      %407 = vmatprep.subr.mxu0 0.0
      %408 = vmatpush1.msra.mxu0 %v373
      %409 = vmatprep.subr.mxu0 0.0
      %410 = vmatpush1.msra.mxu0 %v372
      %411 = vmatprep.subr.mxu0 0.0
      %412 = vmatpush1.msra.mxu0 %v371
      %413 = vmatprep.subr.mxu0 0.0
      %414 = vmatpush2.msra.mxu0 0.0
      %415 = vmatprep.subr.mxu0 0.0
      %416 = vmatpush2.msra.mxu0 0.0
      %417 = vmatprep.subr.mxu0 0.0
      %418 = vmatpush2.msra.mxu0 0.0
      %419 = vmatprep.subr.mxu0 0.0
      %420 = vmatpush2.msra.mxu0 0.0
      %421 = vmatprep.subr.mxu0 0.0
      %422 = vmatpush2.msra.mxu0 0.0
      %423 = vmatprep.subr.mxu0 0.0
      %424 = vmatpush2.msra.mxu0 0.0
      %425 = vmatprep.subr.mxu0 0.0
      %426 = vmatpush2.msra.mxu0 0.0
      %427 = vmatprep.subr.mxu0 0.0
      %428 = vmatpush2.msra.mxu0 0.0
      %429 = vmatprep.subr.mxu0 0.0
      %430 = vmatpush2.msra.mxu0 0.0
      %431 = vmatprep.subr.mxu0 0.0
      %432 = vmatpush2.msra.mxu0 0.0
      %433 = vmatprep.subr.mxu0 0.0
      %434 = vmatpush2.msra.mxu0 0.0
      %435 = vmatprep.subr.mxu0 0.0
      %436 = vmatpush2.msra.mxu0 0.0
      %437 = vmatprep.subr.mxu0 0.0
      %438 = vmatpush2.msra.mxu0 0.0
      %439 = vmatprep.subr.mxu0 0.0
      %440 = vmatpush2.msra.mxu0 0.0
      %441 = vmatprep.subr.mxu0 0.0
      %442 = vmatpush2.msra.mxu0 0.0
      %443 = vmatprep.subr.mxu0 0.0
      %444 = vmatpush2.msra.mxu0 0.0
      %445 = vmatprep.mubr.f32.mxu0 0.0
      %446 = vmatmul.mubr.f32.gmra.mxu0 %v376
      %v447 = vpop.f32.mrf.mxu0
      %v448 = vadd.f32 0.0, %v447
      %v449 = vpop.f32.mrf.mxu0
      %450 = vmatprep.mubr.f32.mxu0 0.0
      %451 = vmatmul.mubr.f32.gmra.mxu0 %v379
      %v452 = vpop.f32.mrf.mxu0
      %v453 = vadd.f32 0.0, %v452
      %v454 = vpop.f32.mrf.mxu0
      %455 = vdwg.mxu0
      %s456 = scalar_lea.vmem %s174, 32
      %457 = vst [vmem:[%s456] sm:$0xff] %v448
      %458 = vst [vmem:[%s456 + $0x8] sm:$0x3f] %v453
      %v459 = vld [vmem:[%s0] sm:$0xff]
      %v460 = vld [vmem:[%s0 + $0x8] sm:$0x3f]
      %s461 = scalar_lea.vmem %s166, 48
      %v462 = vld [vmem:[%s461] sm:$0xf]
      %v463 = vld [vmem:[%s461 + $0x4] sm:$0xf]
      %v464 = vld [vmem:[%s461 + $0x8] sm:$0xf]
      %v465 = vld [vmem:[%s461 + $0xc] sm:$0xf]
      %v466 = vunpack.c.l.bf16 %v462
      %v467 = vunpack.c.l.bf16 %v463
      %v468 = vunpack.c.l.bf16 %v464
      %v469 = vunpack.c.l.bf16 %v465
      %v471 = vsel %vm185, %v459, 0
      %v474 = vsel %vm185, %v460, 0
      %476 = vmatprep.subr.mxu0 0.0
      %477 = vmatpush1.msra.mxu0 0.0
      %478 = vmatprep.subr.mxu0 0.0
      %479 = vmatpush1.msra.mxu0 0.0
      %480 = vmatprep.subr.mxu0 0.0
      %481 = vmatpush1.msra.mxu0 0.0
      %482 = vmatprep.subr.mxu0 0.0
      %483 = vmatpush1.msra.mxu0 0.0
      %484 = vmatprep.subr.mxu0 0.0
      %485 = vmatpush1.msra.mxu0 0.0
      %486 = vmatprep.subr.mxu0 0.0
      %487 = vmatpush1.msra.mxu0 0.0
      %488 = vmatprep.subr.mxu0 0.0
      %489 = vmatpush1.msra.mxu0 0.0
      %490 = vmatprep.subr.mxu0 0.0
      %491 = vmatpush1.msra.mxu0 0.0
      %492 = vmatprep.subr.mxu0 0.0
      %493 = vmatpush1.msra.mxu0 0.0
      %494 = vmatprep.subr.mxu0 0.0
      %495 = vmatpush1.msra.mxu0 0.0
      %496 = vmatprep.subr.mxu0 0.0
      %497 = vmatpush1.msra.mxu0 0.0
      %498 = vmatprep.subr.mxu0 0.0
      %499 = vmatpush1.msra.mxu0 0.0
      %500 = vmatprep.subr.mxu0 0.0
      %501 = vmatpush1.msra.mxu0 %v469
      %502 = vmatprep.subr.mxu0 0.0
      %503 = vmatpush1.msra.mxu0 %v468
      %504 = vmatprep.subr.mxu0 0.0
      %505 = vmatpush1.msra.mxu0 %v467
      %506 = vmatprep.subr.mxu0 0.0
      %507 = vmatpush1.msra.mxu0 %v466
      %508 = vmatprep.subr.mxu0 0.0
      %509 = vmatpush2.msra.mxu0 0.0
      %510 = vmatprep.subr.mxu0 0.0
      %511 = vmatpush2.msra.mxu0 0.0
      %512 = vmatprep.subr.mxu0 0.0
      %513 = vmatpush2.msra.mxu0 0.0
      %514 = vmatprep.subr.mxu0 0.0
      %515 = vmatpush2.msra.mxu0 0.0
      %516 = vmatprep.subr.mxu0 0.0
      %517 = vmatpush2.msra.mxu0 0.0
      %518 = vmatprep.subr.mxu0 0.0
      %519 = vmatpush2.msra.mxu0 0.0
      %520 = vmatprep.subr.mxu0 0.0
      %521 = vmatpush2.msra.mxu0 0.0
      %522 = vmatprep.subr.mxu0 0.0
      %523 = vmatpush2.msra.mxu0 0.0
      %524 = vmatprep.subr.mxu0 0.0
      %525 = vmatpush2.msra.mxu0 0.0
      %526 = vmatprep.subr.mxu0 0.0
      %527 = vmatpush2.msra.mxu0 0.0
      %528 = vmatprep.subr.mxu0 0.0
      %529 = vmatpush2.msra.mxu0 0.0
      %530 = vmatprep.subr.mxu0 0.0
      %531 = vmatpush2.msra.mxu0 0.0
      %532 = vmatprep.subr.mxu0 0.0
      %533 = vmatpush2.msra.mxu0 0.0
      %534 = vmatprep.subr.mxu0 0.0
      %535 = vmatpush2.msra.mxu0 0.0
      %536 = vmatprep.subr.mxu0 0.0
      %537 = vmatpush2.msra.mxu0 0.0
      %538 = vmatprep.subr.mxu0 0.0
      %539 = vmatpush2.msra.mxu0 0.0
      %540 = vmatprep.mubr.f32.mxu0 0.0
      %541 = vmatmul.mubr.f32.gmra.mxu0 %v471
      %v542 = vpop.f32.mrf.mxu0
      %v543 = vadd.f32 0.0, %v542
      %v544 = vpop.f32.mrf.mxu0
      %545 = vmatprep.mubr.f32.mxu0 0.0
      %546 = vmatmul.mubr.f32.gmra.mxu0 %v474
      %v547 = vpop.f32.mrf.mxu0
      %v548 = vadd.f32 0.0, %v547
      %v549 = vpop.f32.mrf.mxu0
      %550 = vdwg.mxu0
      %s551 = scalar_lea.vmem %s174, 48
      %552 = vst [vmem:[%s551] sm:$0xff] %v543
      %553 = vst [vmem:[%s551 + $0x8] sm:$0x3f] %v548
      %v554 = vld [vmem:[%s0] sm:$0xff]
      %v555 = vld [vmem:[%s0 + $0x8] sm:$0x3f]
      %s556 = scalar_lea.vmem %s166, 64
      %v557 = vld [vmem:[%s556] sm:$0xf]
      %v558 = vld [vmem:[%s556 + $0x4] sm:$0xf]
      %v559 = vld [vmem:[%s556 + $0x8] sm:$0xf]
      %v560 = vld [vmem:[%s556 + $0xc] sm:$0xf]
      %v561 = vunpack.c.l.bf16 %v557
      %v562 = vunpack.c.l.bf16 %v558
      %v563 = vunpack.c.l.bf16 %v559
      %v564 = vunpack.c.l.bf16 %v560
      %v566 = vsel %vm185, %v554, 0
      %v569 = vsel %vm185, %v555, 0
      %571 = vmatprep.subr.mxu0 0.0
      %572 = vmatpush1.msra.mxu0 0.0
      %573 = vmatprep.subr.mxu0 0.0
      %574 = vmatpush1.msra.mxu0 0.0
      %575 = vmatprep.subr.mxu0 0.0
      %576 = vmatpush1.msra.mxu0 0.0
      %577 = vmatprep.subr.mxu0 0.0
      %578 = vmatpush1.msra.mxu0 0.0
      %579 = vmatprep.subr.mxu0 0.0
      %580 = vmatpush1.msra.mxu0 0.0
      %581 = vmatprep.subr.mxu0 0.0
      %582 = vmatpush1.msra.mxu0 0.0
      %583 = vmatprep.subr.mxu0 0.0
      %584 = vmatpush1.msra.mxu0 0.0
      %585 = vmatprep.subr.mxu0 0.0
      %586 = vmatpush1.msra.mxu0 0.0
      %587 = vmatprep.subr.mxu0 0.0
      %588 = vmatpush1.msra.mxu0 0.0
      %589 = vmatprep.subr.mxu0 0.0
      %590 = vmatpush1.msra.mxu0 0.0
      %591 = vmatprep.subr.mxu0 0.0
      %592 = vmatpush1.msra.mxu0 0.0
      %593 = vmatprep.subr.mxu0 0.0
      %594 = vmatpush1.msra.mxu0 0.0
      %595 = vmatprep.subr.mxu0 0.0
      %596 = vmatpush1.msra.mxu0 %v564
      %597 = vmatprep.subr.mxu0 0.0
      %598 = vmatpush1.msra.mxu0 %v563
      %599 = vmatprep.subr.mxu0 0.0
      %600 = vmatpush1.msra.mxu0 %v562
      %601 = vmatprep.subr.mxu0 0.0
      %602 = vmatpush1.msra.mxu0 %v561
      %603 = vmatprep.subr.mxu0 0.0
      %604 = vmatpush2.msra.mxu0 0.0
      %605 = vmatprep.subr.mxu0 0.0
      %606 = vmatpush2.msra.mxu0 0.0
      %607 = vmatprep.subr.mxu0 0.0
      %608 = vmatpush2.msra.mxu0 0.0
      %609 = vmatprep.subr.mxu0 0.0
      %610 = vmatpush2.msra.mxu0 0.0
      %611 = vmatprep.subr.mxu0 0.0
      %612 = vmatpush2.msra.mxu0 0.0
      %613 = vmatprep.subr.mxu0 0.0
      %614 = vmatpush2.msra.mxu0 0.0
      %615 = vmatprep.subr.mxu0 0.0
      %616 = vmatpush2.msra.mxu0 0.0
      %617 = vmatprep.subr.mxu0 0.0
      %618 = vmatpush2.msra.mxu0 0.0
      %619 = vmatprep.subr.mxu0 0.0
      %620 = vmatpush2.msra.mxu0 0.0
      %621 = vmatprep.subr.mxu0 0.0
      %622 = vmatpush2.msra.mxu0 0.0
      %623 = vmatprep.subr.mxu0 0.0
      %624 = vmatpush2.msra.mxu0 0.0
      %625 = vmatprep.subr.mxu0 0.0
      %626 = vmatpush2.msra.mxu0 0.0
      %627 = vmatprep.subr.mxu0 0.0
      %628 = vmatpush2.msra.mxu0 0.0
      %629 = vmatprep.subr.mxu0 0.0
      %630 = vmatpush2.msra.mxu0 0.0
      %631 = vmatprep.subr.mxu0 0.0
      %632 = vmatpush2.msra.mxu0 0.0
      %633 = vmatprep.subr.mxu0 0.0
      %634 = vmatpush2.msra.mxu0 0.0
      %635 = vmatprep.mubr.f32.mxu0 0.0
      %636 = vmatmul.mubr.f32.gmra.mxu0 %v566
      %v637 = vpop.f32.mrf.mxu0
      %v638 = vadd.f32 0.0, %v637
      %v639 = vpop.f32.mrf.mxu0
      %640 = vmatprep.mubr.f32.mxu0 0.0
      %641 = vmatmul.mubr.f32.gmra.mxu0 %v569
      %v642 = vpop.f32.mrf.mxu0
      %v643 = vadd.f32 0.0, %v642
      %v644 = vpop.f32.mrf.mxu0
      %645 = vdwg.mxu0
      %s646 = scalar_lea.vmem %s174, 64
      %647 = vst [vmem:[%s646] sm:$0xff] %v638
      %648 = vst [vmem:[%s646 + $0x8] sm:$0x3f] %v643
      %v649 = vld [vmem:[%s0] sm:$0xff]
      %v650 = vld [vmem:[%s0 + $0x8] sm:$0x3f]
      %s651 = scalar_lea.vmem %s166, 80
      %v652 = vld [vmem:[%s651] sm:$0xf]
      %v653 = vld [vmem:[%s651 + $0x4] sm:$0xf]
      %v654 = vld [vmem:[%s651 + $0x8] sm:$0xf]
      %v655 = vld [vmem:[%s651 + $0xc] sm:$0xf]
      %v656 = vunpack.c.l.bf16 %v652
      %v657 = vunpack.c.l.bf16 %v653
      %v658 = vunpack.c.l.bf16 %v654
      %v659 = vunpack.c.l.bf16 %v655
      %v661 = vsel %vm185, %v649, 0
      %v664 = vsel %vm185, %v650, 0
      %666 = vmatprep.subr.mxu0 0.0
      %667 = vmatpush1.msra.mxu0 0.0
      %668 = vmatprep.subr.mxu0 0.0
      %669 = vmatpush1.msra.mxu0 0.0
      %670 = vmatprep.subr.mxu0 0.0
      %671 = vmatpush1.msra.mxu0 0.0
      %672 = vmatprep.subr.mxu0 0.0
      %673 = vmatpush1.msra.mxu0 0.0
      %674 = vmatprep.subr.mxu0 0.0
      %675 = vmatpush1.msra.mxu0 0.0
      %676 = vmatprep.subr.mxu0 0.0
      %677 = vmatpush1.msra.mxu0 0.0
      %678 = vmatprep.subr.mxu0 0.0
      %679 = vmatpush1.msra.mxu0 0.0
      %680 = vmatprep.subr.mxu0 0.0
      %681 = vmatpush1.msra.mxu0 0.0
      %682 = vmatprep.subr.mxu0 0.0
      %683 = vmatpush1.msra.mxu0 0.0
      %684 = vmatprep.subr.mxu0 0.0
      %685 = vmatpush1.msra.mxu0 0.0
      %686 = vmatprep.subr.mxu0 0.0
      %687 = vmatpush1.msra.mxu0 0.0
      %688 = vmatprep.subr.mxu0 0.0
      %689 = vmatpush1.msra.mxu0 0.0
      %690 = vmatprep.subr.mxu0 0.0
      %691 = vmatpush1.msra.mxu0 %v659
      %692 = vmatprep.subr.mxu0 0.0
      %693 = vmatpush1.msra.mxu0 %v658
      %694 = vmatprep.subr.mxu0 0.0
      %695 = vmatpush1.msra.mxu0 %v657
      %696 = vmatprep.subr.mxu0 0.0
      %697 = vmatpush1.msra.mxu0 %v656
      %698 = vmatprep.subr.mxu0 0.0
      %699 = vmatpush2.msra.mxu0 0.0
      %700 = vmatprep.subr.mxu0 0.0
      %701 = vmatpush2.msra.mxu0 0.0
      %702 = vmatprep.subr.mxu0 0.0
      %703 = vmatpush2.msra.mxu0 0.0
      %704 = vmatprep.subr.mxu0 0.0
      %705 = vmatpush2.msra.mxu0 0.0
      %706 = vmatprep.subr.mxu0 0.0
      %707 = vmatpush2.msra.mxu0 0.0
      %708 = vmatprep.subr.mxu0 0.0
      %709 = vmatpush2.msra.mxu0 0.0
      %710 = vmatprep.subr.mxu0 0.0
      %711 = vmatpush2.msra.mxu0 0.0
      %712 = vmatprep.subr.mxu0 0.0
      %713 = vmatpush2.msra.mxu0 0.0
      %714 = vmatprep.subr.mxu0 0.0
      %715 = vmatpush2.msra.mxu0 0.0
      %716 = vmatprep.subr.mxu0 0.0
      %717 = vmatpush2.msra.mxu0 0.0
      %718 = vmatprep.subr.mxu0 0.0
      %719 = vmatpush2.msra.mxu0 0.0
      %720 = vmatprep.subr.mxu0 0.0
      %721 = vmatpush2.msra.mxu0 0.0
      %722 = vmatprep.subr.mxu0 0.0
      %723 = vmatpush2.msra.mxu0 0.0
      %724 = vmatprep.subr.mxu0 0.0
      %725 = vmatpush2.msra.mxu0 0.0
      %726 = vmatprep.subr.mxu0 0.0
      %727 = vmatpush2.msra.mxu0 0.0
      %728 = vmatprep.subr.mxu0 0.0
      %729 = vmatpush2.msra.mxu0 0.0
      %730 = vmatprep.mubr.f32.mxu0 0.0
      %731 = vmatmul.mubr.f32.gmra.mxu0 %v661
      %v732 = vpop.f32.mrf.mxu0
      %v733 = vadd.f32 0.0, %v732
      %v734 = vpop.f32.mrf.mxu0
      %735 = vmatprep.mubr.f32.mxu0 0.0
      %736 = vmatmul.mubr.f32.gmra.mxu0 %v664
      %v737 = vpop.f32.mrf.mxu0
      %v738 = vadd.f32 0.0, %v737
      %v739 = vpop.f32.mrf.mxu0
      %740 = vdwg.mxu0
      %s741 = scalar_lea.vmem %s174, 80
      %742 = vst [vmem:[%s741] sm:$0xff] %v733
      %743 = vst [vmem:[%s741 + $0x8] sm:$0x3f] %v738
      %v744 = vld [vmem:[%s0] sm:$0xff]
      %v745 = vld [vmem:[%s0 + $0x8] sm:$0x3f]
      %s746 = scalar_lea.vmem %s166, 96
      %v747 = vld [vmem:[%s746] sm:$0xf]
      %v748 = vld [vmem:[%s746 + $0x4] sm:$0xf]
      %v749 = vld [vmem:[%s746 + $0x8] sm:$0xf]
      %v750 = vld [vmem:[%s746 + $0xc] sm:$0xf]
      %v751 = vunpack.c.l.bf16 %v747
      %v752 = vunpack.c.l.bf16 %v748
      %v753 = vunpack.c.l.bf16 %v749
      %v754 = vunpack.c.l.bf16 %v750
      %v756 = vsel %vm185, %v744, 0
      %v759 = vsel %vm185, %v745, 0
      %761 = vmatprep.subr.mxu0 0.0
      %762 = vmatpush1.msra.mxu0 0.0
      %763 = vmatprep.subr.mxu0 0.0
      %764 = vmatpush1.msra.mxu0 0.0
      %765 = vmatprep.subr.mxu0 0.0
      %766 = vmatpush1.msra.mxu0 0.0
      %767 = vmatprep.subr.mxu0 0.0
      %768 = vmatpush1.msra.mxu0 0.0
      %769 = vmatprep.subr.mxu0 0.0
      %770 = vmatpush1.msra.mxu0 0.0
      %771 = vmatprep.subr.mxu0 0.0
      %772 = vmatpush1.msra.mxu0 0.0
      %773 = vmatprep.subr.mxu0 0.0
      %774 = vmatpush1.msra.mxu0 0.0
      %775 = vmatprep.subr.mxu0 0.0
      %776 = vmatpush1.msra.mxu0 0.0
      %777 = vmatprep.subr.mxu0 0.0
      %778 = vmatpush1.msra.mxu0 0.0
      %779 = vmatprep.subr.mxu0 0.0
      %780 = vmatpush1.msra.mxu0 0.0
      %781 = vmatprep.subr.mxu0 0.0
      %782 = vmatpush1.msra.mxu0 0.0
      %783 = vmatprep.subr.mxu0 0.0
      %784 = vmatpush1.msra.mxu0 0.0
      %785 = vmatprep.subr.mxu0 0.0
      %786 = vmatpush1.msra.mxu0 %v754
      %787 = vmatprep.subr.mxu0 0.0
      %788 = vmatpush1.msra.mxu0 %v753
      %789 = vmatprep.subr.mxu0 0.0
      %790 = vmatpush1.msra.mxu0 %v752
      %791 = vmatprep.subr.mxu0 0.0
      %792 = vmatpush1.msra.mxu0 %v751
      %793 = vmatprep.subr.mxu0 0.0
      %794 = vmatpush2.msra.mxu0 0.0
      %795 = vmatprep.subr.mxu0 0.0
      %796 = vmatpush2.msra.mxu0 0.0
      %797 = vmatprep.subr.mxu0 0.0
      %798 = vmatpush2.msra.mxu0 0.0
      %799 = vmatprep.subr.mxu0 0.0
      %800 = vmatpush2.msra.mxu0 0.0
      %801 = vmatprep.subr.mxu0 0.0
      %802 = vmatpush2.msra.mxu0 0.0
      %803 = vmatprep.subr.mxu0 0.0
      %804 = vmatpush2.msra.mxu0 0.0
      %805 = vmatprep.subr.mxu0 0.0
      %806 = vmatpush2.msra.mxu0 0.0
      %807 = vmatprep.subr.mxu0 0.0
      %808 = vmatpush2.msra.mxu0 0.0
      %809 = vmatprep.subr.mxu0 0.0
      %810 = vmatpush2.msra.mxu0 0.0
      %811 = vmatprep.subr.mxu0 0.0
      %812 = vmatpush2.msra.mxu0 0.0
      %813 = vmatprep.subr.mxu0 0.0
      %814 = vmatpush2.msra.mxu0 0.0
      %815 = vmatprep.subr.mxu0 0.0
      %816 = vmatpush2.msra.mxu0 0.0
      %817 = vmatprep.subr.mxu0 0.0
      %818 = vmatpush2.msra.mxu0 0.0
      %819 = vmatprep.subr.mxu0 0.0
      %820 = vmatpush2.msra.mxu0 0.0
      %821 = vmatprep.subr.mxu0 0.0
      %822 = vmatpush2.msra.mxu0 0.0
      %823 = vmatprep.subr.mxu0 0.0
      %824 = vmatpush2.msra.mxu0 0.0
      %825 = vmatprep.mubr.f32.mxu0 0.0
      %826 = vmatmul.mubr.f32.gmra.mxu0 %v756
      %v827 = vpop.f32.mrf.mxu0
      %v828 = vadd.f32 0.0, %v827
      %v829 = vpop.f32.mrf.mxu0
      %830 = vmatprep.mubr.f32.mxu0 0.0
      %831 = vmatmul.mubr.f32.gmra.mxu0 %v759
      %v832 = vpop.f32.mrf.mxu0
      %v833 = vadd.f32 0.0, %v832
      %v834 = vpop.f32.mrf.mxu0
      %835 = vdwg.mxu0
      %s836 = scalar_lea.vmem %s174, 96
      %837 = vst [vmem:[%s836] sm:$0xff] %v828
      %838 = vst [vmem:[%s836 + $0x8] sm:$0x3f] %v833
      %v839 = vld [vmem:[%s0] sm:$0xff]
      %v840 = vld [vmem:[%s0 + $0x8] sm:$0x3f]
      %s841 = scalar_lea.vmem %s166, 112
      %v842 = vld [vmem:[%s841] sm:$0xf]
      %v843 = vld [vmem:[%s841 + $0x4] sm:$0xf]
      %v844 = vld [vmem:[%s841 + $0x8] sm:$0xf]
      %v845 = vld [vmem:[%s841 + $0xc] sm:$0xf]
      %v846 = vunpack.c.l.bf16 %v842
      %v847 = vunpack.c.l.bf16 %v843
      %v848 = vunpack.c.l.bf16 %v844
      %v849 = vunpack.c.l.bf16 %v845
      %v851 = vsel %vm185, %v839, 0
      %v854 = vsel %vm185, %v840, 0
      %856 = vmatprep.subr.mxu0 0.0
      %857 = vmatpush1.msra.mxu0 0.0
      %858 = vmatprep.subr.mxu0 0.0
      %859 = vmatpush1.msra.mxu0 0.0
      %860 = vmatprep.subr.mxu0 0.0
      %861 = vmatpush1.msra.mxu0 0.0
      %862 = vmatprep.subr.mxu0 0.0
      %863 = vmatpush1.msra.mxu0 0.0
      %864 = vmatprep.subr.mxu0 0.0
      %865 = vmatpush1.msra.mxu0 0.0
      %866 = vmatprep.subr.mxu0 0.0
      %867 = vmatpush1.msra.mxu0 0.0
      %868 = vmatprep.subr.mxu0 0.0
      %869 = vmatpush1.msra.mxu0 0.0
      %870 = vmatprep.subr.mxu0 0.0
      %871 = vmatpush1.msra.mxu0 0.0
      %872 = vmatprep.subr.mxu0 0.0
      %873 = vmatpush1.msra.mxu0 0.0
      %874 = vmatprep.subr.mxu0 0.0
      %875 = vmatpush1.msra.mxu0 0.0
      %876 = vmatprep.subr.mxu0 0.0
      %877 = vmatpush1.msra.mxu0 0.0
      %878 = vmatprep.subr.mxu0 0.0
      %879 = vmatpush1.msra.mxu0 0.0
      %880 = vmatprep.subr.mxu0 0.0
      %881 = vmatpush1.msra.mxu0 %v849
      %882 = vmatprep.subr.mxu0 0.0
      %883 = vmatpush1.msra.mxu0 %v848
      %884 = vmatprep.subr.mxu0 0.0
      %885 = vmatpush1.msra.mxu0 %v847
      %886 = vmatprep.subr.mxu0 0.0
      %887 = vmatpush1.msra.mxu0 %v846
      %888 = vmatprep.subr.mxu0 0.0
      %889 = vmatpush2.msra.mxu0 0.0
      %890 = vmatprep.subr.mxu0 0.0
      %891 = vmatpush2.msra.mxu0 0.0
      %892 = vmatprep.subr.mxu0 0.0
      %893 = vmatpush2.msra.mxu0 0.0
      %894 = vmatprep.subr.mxu0 0.0
      %895 = vmatpush2.msra.mxu0 0.0
      %896 = vmatprep.subr.mxu0 0.0
      %897 = vmatpush2.msra.mxu0 0.0
      %898 = vmatprep.subr.mxu0 0.0
      %899 = vmatpush2.msra.mxu0 0.0
      %900 = vmatprep.subr.mxu0 0.0
      %901 = vmatpush2.msra.mxu0 0.0
      %902 = vmatprep.subr.mxu0 0.0
      %903 = vmatpush2.msra.mxu0 0.0
      %904 = vmatprep.subr.mxu0 0.0
      %905 = vmatpush2.msra.mxu0 0.0
      %906 = vmatprep.subr.mxu0 0.0
      %907 = vmatpush2.msra.mxu0 0.0
      %908 = vmatprep.subr.mxu0 0.0
      %909 = vmatpush2.msra.mxu0 0.0
      %910 = vmatprep.subr.mxu0 0.0
      %911 = vmatpush2.msra.mxu0 0.0
      %912 = vmatprep.subr.mxu0 0.0
      %913 = vmatpush2.msra.mxu0 0.0
      %914 = vmatprep.subr.mxu0 0.0
      %915 = vmatpush2.msra.mxu0 0.0
      %916 = vmatprep.subr.mxu0 0.0
      %917 = vmatpush2.msra.mxu0 0.0
      %918 = vmatprep.subr.mxu0 0.0
      %919 = vmatpush2.msra.mxu0 0.0
      %920 = vmatprep.mubr.f32.mxu0 0.0
      %921 = vmatmul.mubr.f32.gmra.mxu0 %v851
      %v922 = vpop.f32.mrf.mxu0
      %v923 = vadd.f32 0.0, %v922
      %v924 = vpop.f32.mrf.mxu0
      %925 = vmatprep.mubr.f32.mxu0 0.0
      %926 = vmatmul.mubr.f32.gmra.mxu0 %v854
      %v927 = vpop.f32.mrf.mxu0
      %v928 = vadd.f32 0.0, %v927
      %v929 = vpop.f32.mrf.mxu0
      %930 = vdwg.mxu0
      %s931 = scalar_lea.vmem %s174, 112
      %932 = vst [vmem:[%s931] sm:$0xff] %v923
      %933 = vst [vmem:[%s931 + $0x8] sm:$0x3f] %v928
      %v934 = vld [vmem:[%s0] sm:$0xff]
      %v935 = vld [vmem:[%s0 + $0x8] sm:$0x3f]
      %s936 = scalar_lea.vmem %s166, 128
      %v937 = vld [vmem:[%s936] sm:$0xf]
      %v938 = vld [vmem:[%s936 + $0x4] sm:$0xf]
      %v939 = vld [vmem:[%s936 + $0x8] sm:$0xf]
      %v940 = vld [vmem:[%s936 + $0xc] sm:$0xf]
      %v941 = vunpack.c.l.bf16 %v937
      %v942 = vunpack.c.l.bf16 %v938
      %v943 = vunpack.c.l.bf16 %v939
      %v944 = vunpack.c.l.bf16 %v940
      %v946 = vsel %vm185, %v934, 0
      %v949 = vsel %vm185, %v935, 0
      %951 = vmatprep.subr.mxu0 0.0
      %952 = vmatpush1.msra.mxu0 0.0
      %953 = vmatprep.subr.mxu0 0.0
      %954 = vmatpush1.msra.mxu0 0.0
      %955 = vmatprep.subr.mxu0 0.0
      %956 = vmatpush1.msra.mxu0 0.0
      %957 = vmatprep.subr.mxu0 0.0
      %958 = vmatpush1.msra.mxu0 0.0
      %959 = vmatprep.subr.mxu0 0.0
      %960 = vmatpush1.msra.mxu0 0.0
      %961 = vmatprep.subr.mxu0 0.0
      %962 = vmatpush1.msra.mxu0 0.0
      %963 = vmatprep.subr.mxu0 0.0
      %964 = vmatpush1.msra.mxu0 0.0
      %965 = vmatprep.subr.mxu0 0.0
      %966 = vmatpush1.msra.mxu0 0.0
      %967 = vmatprep.subr.mxu0 0.0
      %968 = vmatpush1.msra.mxu0 0.0
      %969 = vmatprep.subr.mxu0 0.0
      %970 = vmatpush1.msra.mxu0 0.0
      %971 = vmatprep.subr.mxu0 0.0
      %972 = vmatpush1.msra.mxu0 0.0
      %973 = vmatprep.subr.mxu0 0.0
      %974 = vmatpush1.msra.mxu0 0.0
      %975 = vmatprep.subr.mxu0 0.0
      %976 = vmatpush1.msra.mxu0 %v944
      %977 = vmatprep.subr.mxu0 0.0
      %978 = vmatpush1.msra.mxu0 %v943
      %979 = vmatprep.subr.mxu0 0.0
      %980 = vmatpush1.msra.mxu0 %v942
      %981 = vmatprep.subr.mxu0 0.0
      %982 = vmatpush1.msra.mxu0 %v941
      %983 = vmatprep.subr.mxu0 0.0
      %984 = vmatpush2.msra.mxu0 0.0
      %985 = vmatprep.subr.mxu0 0.0
      %986 = vmatpush2.msra.mxu0 0.0
      %987 = vmatprep.subr.mxu0 0.0
      %988 = vmatpush2.msra.mxu0 0.0
      %989 = vmatprep.subr.mxu0 0.0
      %990 = vmatpush2.msra.mxu0 0.0
      %991 = vmatprep.subr.mxu0 0.0
      %992 = vmatpush2.msra.mxu0 0.0
      %993 = vmatprep.subr.mxu0 0.0
      %994 = vmatpush2.msra.mxu0 0.0
      %995 = vmatprep.subr.mxu0 0.0
      %996 = vmatpush2.msra.mxu0 0.0
      %997 = vmatprep.subr.mxu0 0.0
      %998 = vmatpush2.msra.mxu0 0.0
      %999 = vmatprep.subr.mxu0 0.0
      %1000 = vmatpush2.msra.mxu0 0.0
      %1001 = vmatprep.subr.mxu0 0.0
      %1002 = vmatpush2.msra.mxu0 0.0
      %1003 = vmatprep.subr.mxu0 0.0
      %1004 = vmatpush2.msra.mxu0 0.0
      %1005 = vmatprep.subr.mxu0 0.0
      %1006 = vmatpush2.msra.mxu0 0.0
      %1007 = vmatprep.subr.mxu0 0.0
      %1008 = vmatpush2.msra.mxu0 0.0
      %1009 = vmatprep.subr.mxu0 0.0
      %1010 = vmatpush2.msra.mxu0 0.0
      %1011 = vmatprep.subr.mxu0 0.0
      %1012 = vmatpush2.msra.mxu0 0.0
      %1013 = vmatprep.subr.mxu0 0.0
      %1014 = vmatpush2.msra.mxu0 0.0
      %1015 = vmatprep.mubr.f32.mxu0 0.0
      %1016 = vmatmul.mubr.f32.gmra.mxu0 %v946
      %v1017 = vpop.f32.mrf.mxu0
      %v1018 = vadd.f32 0.0, %v1017
      %v1019 = vpop.f32.mrf.mxu0
      %1020 = vmatprep.mubr.f32.mxu0 0.0
      %1021 = vmatmul.mubr.f32.gmra.mxu0 %v949
      %v1022 = vpop.f32.mrf.mxu0
      %v1023 = vadd.f32 0.0, %v1022
      %v1024 = vpop.f32.mrf.mxu0
      %1025 = vdwg.mxu0
      %s1026 = scalar_lea.vmem %s174, 128
      %1027 = vst [vmem:[%s1026] sm:$0xff] %v1018
      %1028 = vst [vmem:[%s1026 + $0x8] sm:$0x3f] %v1023
      %v1029 = vld [vmem:[%s0] sm:$0xff]
      %v1030 = vld [vmem:[%s0 + $0x8] sm:$0x3f]
      %s1031 = scalar_lea.vmem %s166, 144
      %v1032 = vld [vmem:[%s1031] sm:$0xf]
      %v1033 = vld [vmem:[%s1031 + $0x4] sm:$0xf]
      %v1034 = vld [vmem:[%s1031 + $0x8] sm:$0xf]
      %v1035 = vld [vmem:[%s1031 + $0xc] sm:$0xf]
      %v1036 = vunpack.c.l.bf16 %v1032
      %v1037 = vunpack.c.l.bf16 %v1033
      %v1038 = vunpack.c.l.bf16 %v1034
      %v1039 = vunpack.c.l.bf16 %v1035
      %v1041 = vsel %vm185, %v1029, 0
      %v1044 = vsel %vm185, %v1030, 0
      %1046 = vmatprep.subr.mxu0 0.0
      %1047 = vmatpush1.msra.mxu0 0.0
      %1048 = vmatprep.subr.mxu0 0.0
      %1049 = vmatpush1.msra.mxu0 0.0
      %1050 = vmatprep.subr.mxu0 0.0
      %1051 = vmatpush1.msra.mxu0 0.0
      %1052 = vmatprep.subr.mxu0 0.0
      %1053 = vmatpush1.msra.mxu0 0.0
      %1054 = vmatprep.subr.mxu0 0.0
      %1055 = vmatpush1.msra.mxu0 0.0
      %1056 = vmatprep.subr.mxu0 0.0
      %1057 = vmatpush1.msra.mxu0 0.0
      %1058 = vmatprep.subr.mxu0 0.0
      %1059 = vmatpush1.msra.mxu0 0.0
      %1060 = vmatprep.subr.mxu0 0.0
      %1061 = vmatpush1.msra.mxu0 0.0
      %1062 = vmatprep.subr.mxu0 0.0
      %1063 = vmatpush1.msra.mxu0 0.0
      %1064 = vmatprep.subr.mxu0 0.0
      %1065 = vmatpush1.msra.mxu0 0.0
      %1066 = vmatprep.subr.mxu0 0.0
      %1067 = vmatpush1.msra.mxu0 0.0
      %1068 = vmatprep.subr.mxu0 0.0
      %1069 = vmatpush1.msra.mxu0 0.0
      %1070 = vmatprep.subr.mxu0 0.0
      %1071 = vmatpush1.msra.mxu0 %v1039
      %1072 = vmatprep.subr.mxu0 0.0
      %1073 = vmatpush1.msra.mxu0 %v1038
      %1074 = vmatprep.subr.mxu0 0.0
      %1075 = vmatpush1.msra.mxu0 %v1037
      %1076 = vmatprep.subr.mxu0 0.0
      %1077 = vmatpush1.msra.mxu0 %v1036
      %1078 = vmatprep.subr.mxu0 0.0
      %1079 = vmatpush2.msra.mxu0 0.0
      %1080 = vmatprep.subr.mxu0 0.0
      %1081 = vmatpush2.msra.mxu0 0.0
      %1082 = vmatprep.subr.mxu0 0.0
      %1083 = vmatpush2.msra.mxu0 0.0
      %1084 = vmatprep.subr.mxu0 0.0
      %1085 = vmatpush2.msra.mxu0 0.0
      %1086 = vmatprep.subr.mxu0 0.0
      %1087 = vmatpush2.msra.mxu0 0.0
      %1088 = vmatprep.subr.mxu0 0.0
      %1089 = vmatpush2.msra.mxu0 0.0
      %1090 = vmatprep.subr.mxu0 0.0
      %1091 = vmatpush2.msra.mxu0 0.0
      %1092 = vmatprep.subr.mxu0 0.0
      %1093 = vmatpush2.msra.mxu0 0.0
      %1094 = vmatprep.subr.mxu0 0.0
      %1095 = vmatpush2.msra.mxu0 0.0
      %1096 = vmatprep.subr.mxu0 0.0
      %1097 = vmatpush2.msra.mxu0 0.0
      %1098 = vmatprep.subr.mxu0 0.0
      %1099 = vmatpush2.msra.mxu0 0.0
      %1100 = vmatprep.subr.mxu0 0.0
      %1101 = vmatpush2.msra.mxu0 0.0
      %1102 = vmatprep.subr.mxu0 0.0
      %1103 = vmatpush2.msra.mxu0 0.0
      %1104 = vmatprep.subr.mxu0 0.0
      %1105 = vmatpush2.msra.mxu0 0.0
      %1106 = vmatprep.subr.mxu0 0.0
      %1107 = vmatpush2.msra.mxu0 0.0
      %1108 = vmatprep.subr.mxu0 0.0
      %1109 = vmatpush2.msra.mxu0 0.0
      %1110 = vmatprep.mubr.f32.mxu0 0.0
      %1111 = vmatmul.mubr.f32.gmra.mxu0 %v1041
      %v1112 = vpop.f32.mrf.mxu0
      %v1113 = vadd.f32 0.0, %v1112
      %v1114 = vpop.f32.mrf.mxu0
      %1115 = vmatprep.mubr.f32.mxu0 0.0
      %1116 = vmatmul.mubr.f32.gmra.mxu0 %v1044
      %v1117 = vpop.f32.mrf.mxu0
      %v1118 = vadd.f32 0.0, %v1117
      %v1119 = vpop.f32.mrf.mxu0
      %1120 = vdwg.mxu0
      %s1121 = scalar_lea.vmem %s174, 144
      %1122 = vst [vmem:[%s1121] sm:$0xff] %v1113
      %1123 = vst [vmem:[%s1121 + $0x8] sm:$0x3f] %v1118
      %v1124 = vld [vmem:[%s0] sm:$0xff]
      %v1125 = vld [vmem:[%s0 + $0x8] sm:$0x3f]
      %s1126 = scalar_lea.vmem %s166, 160
      %v1127 = vld [vmem:[%s1126] sm:$0xf]
      %v1128 = vld [vmem:[%s1126 + $0x4] sm:$0xf]
      %v1129 = vld [vmem:[%s1126 + $0x8] sm:$0xf]
      %v1130 = vld [vmem:[%s1126 + $0xc] sm:$0xf]
      %v1131 = vunpack.c.l.bf16 %v1127
      %v1132 = vunpack.c.l.bf16 %v1128
      %v1133 = vunpack.c.l.bf16 %v1129
      %v1134 = vunpack.c.l.bf16 %v1130
      %v1136 = vsel %vm185, %v1124, 0
      %v1139 = vsel %vm185, %v1125, 0
      %1141 = vmatprep.subr.mxu0 0.0
      %1142 = vmatpush1.msra.mxu0 0.0
      %1143 = vmatprep.subr.mxu0 0.0
      %1144 = vmatpush1.msra.mxu0 0.0
      %1145 = vmatprep.subr.mxu0 0.0
      %1146 = vmatpush1.msra.mxu0 0.0
      %1147 = vmatprep.subr.mxu0 0.0
      %1148 = vmatpush1.msra.mxu0 0.0
      %1149 = vmatprep.subr.mxu0 0.0
      %1150 = vmatpush1.msra.mxu0 0.0
      %1151 = vmatprep.subr.mxu0 0.0
      %1152 = vmatpush1.msra.mxu0 0.0
      %1153 = vmatprep.subr.mxu0 0.0
      %1154 = vmatpush1.msra.mxu0 0.0
      %1155 = vmatprep.subr.mxu0 0.0
      %1156 = vmatpush1.msra.mxu0 0.0
      %1157 = vmatprep.subr.mxu0 0.0
      %1158 = vmatpush1.msra.mxu0 0.0
      %1159 = vmatprep.subr.mxu0 0.0
      %1160 = vmatpush1.msra.mxu0 0.0
      %1161 = vmatprep.subr.mxu0 0.0
      %1162 = vmatpush1.msra.mxu0 0.0
      %1163 = vmatprep.subr.mxu0 0.0
      %1164 = vmatpush1.msra.mxu0 0.0
      %1165 = vmatprep.subr.mxu0 0.0
      %1166 = vmatpush1.msra.mxu0 %v1134
      %1167 = vmatprep.subr.mxu0 0.0
      %1168 = vmatpush1.msra.mxu0 %v1133
      %1169 = vmatprep.subr.mxu0 0.0
      %1170 = vmatpush1.msra.mxu0 %v1132
      %1171 = vmatprep.subr.mxu0 0.0
      %1172 = vmatpush1.msra.mxu0 %v1131
      %1173 = vmatprep.subr.mxu0 0.0
      %1174 = vmatpush2.msra.mxu0 0.0
      %1175 = vmatprep.subr.mxu0 0.0
      %1176 = vmatpush2.msra.mxu0 0.0
      %1177 = vmatprep.subr.mxu0 0.0
      %1178 = vmatpush2.msra.mxu0 0.0
      %1179 = vmatprep.subr.mxu0 0.0
      %1180 = vmatpush2.msra.mxu0 0.0
      %1181 = vmatprep.subr.mxu0 0.0
      %1182 = vmatpush2.msra.mxu0 0.0
      %1183 = vmatprep.subr.mxu0 0.0
      %1184 = vmatpush2.msra.mxu0 0.0
      %1185 = vmatprep.subr.mxu0 0.0
      %1186 = vmatpush2.msra.mxu0 0.0
      %1187 = vmatprep.subr.mxu0 0.0
      %1188 = vmatpush2.msra.mxu0 0.0
      %1189 = vmatprep.subr.mxu0 0.0
      %1190 = vmatpush2.msra.mxu0 0.0
      %1191 = vmatprep.subr.mxu0 0.0
      %1192 = vmatpush2.msra.mxu0 0.0
      %1193 = vmatprep.subr.mxu0 0.0
      %1194 = vmatpush2.msra.mxu0 0.0
      %1195 = vmatprep.subr.mxu0 0.0
      %1196 = vmatpush2.msra.mxu0 0.0
      %1197 = vmatprep.subr.mxu0 0.0
      %1198 = vmatpush2.msra.mxu0 0.0
      %1199 = vmatprep.subr.mxu0 0.0
      %1200 = vmatpush2.msra.mxu0 0.0
      %1201 = vmatprep.subr.mxu0 0.0
      %1202 = vmatpush2.msra.mxu0 0.0
      %1203 = vmatprep.subr.mxu0 0.0
      %1204 = vmatpush2.msra.mxu0 0.0
      %1205 = vmatprep.mubr.f32.mxu0 0.0
      %1206 = vmatmul.mubr.f32.gmra.mxu0 %v1136
      %v1207 = vpop.f32.mrf.mxu0
      %v1208 = vadd.f32 0.0, %v1207
      %v1209 = vpop.f32.mrf.mxu0
      %1210 = vmatprep.mubr.f32.mxu0 0.0
      %1211 = vmatmul.mubr.f32.gmra.mxu0 %v1139
      %v1212 = vpop.f32.mrf.mxu0
      %v1213 = vadd.f32 0.0, %v1212
      %v1214 = vpop.f32.mrf.mxu0
      %1215 = vdwg.mxu0
      %s1216 = scalar_lea.vmem %s174, 160
      %1217 = vst [vmem:[%s1216] sm:$0xff] %v1208
      %1218 = vst [vmem:[%s1216 + $0x8] sm:$0x3f] %v1213
      %v1219 = vld [vmem:[%s0] sm:$0xff]
      %v1220 = vld [vmem:[%s0 + $0x8] sm:$0x3f]
      %s1221 = scalar_lea.vmem %s166, 176
      %v1222 = vld [vmem:[%s1221] sm:$0xf]
      %v1223 = vld [vmem:[%s1221 + $0x4] sm:$0xf]
      %v1224 = vld [vmem:[%s1221 + $0x8] sm:$0xf]
      %v1225 = vld [vmem:[%s1221 + $0xc] sm:$0xf]
      %v1226 = vunpack.c.l.bf16 %v1222
      %v1227 = vunpack.c.l.bf16 %v1223
      %v1228 = vunpack.c.l.bf16 %v1224
      %v1229 = vunpack.c.l.bf16 %v1225
      %v1231 = vsel %vm185, %v1219, 0
      %v1234 = vsel %vm185, %v1220, 0
      %1236 = vmatprep.subr.mxu0 0.0
      %1237 = vmatpush1.msra.mxu0 0.0
      %1238 = vmatprep.subr.mxu0 0.0
      %1239 = vmatpush1.msra.mxu0 0.0
      %1240 = vmatprep.subr.mxu0 0.0
      %1241 = vmatpush1.msra.mxu0 0.0
      %1242 = vmatprep.subr.mxu0 0.0
      %1243 = vmatpush1.msra.mxu0 0.0
      %1244 = vmatprep.subr.mxu0 0.0
      %1245 = vmatpush1.msra.mxu0 0.0
      %1246 = vmatprep.subr.mxu0 0.0
      %1247 = vmatpush1.msra.mxu0 0.0
      %1248 = vmatprep.subr.mxu0 0.0
      %1249 = vmatpush1.msra.mxu0 0.0
      %1250 = vmatprep.subr.mxu0 0.0
      %1251 = vmatpush1.msra.mxu0 0.0
      %1252 = vmatprep.subr.mxu0 0.0
      %1253 = vmatpush1.msra.mxu0 0.0
      %1254 = vmatprep.subr.mxu0 0.0
      %1255 = vmatpush1.msra.mxu0 0.0
      %1256 = vmatprep.subr.mxu0 0.0
      %1257 = vmatpush1.msra.mxu0 0.0
      %1258 = vmatprep.subr.mxu0 0.0
      %1259 = vmatpush1.msra.mxu0 0.0
      %1260 = vmatprep.subr.mxu0 0.0
      %1261 = vmatpush1.msra.mxu0 %v1229
      %1262 = vmatprep.subr.mxu0 0.0
      %1263 = vmatpush1.msra.mxu0 %v1228
      %1264 = vmatprep.subr.mxu0 0.0
      %1265 = vmatpush1.msra.mxu0 %v1227
      %1266 = vmatprep.subr.mxu0 0.0
      %1267 = vmatpush1.msra.mxu0 %v1226
      %1268 = vmatprep.subr.mxu0 0.0
      %1269 = vmatpush2.msra.mxu0 0.0
      %1270 = vmatprep.subr.mxu0 0.0
      %1271 = vmatpush2.msra.mxu0 0.0
      %1272 = vmatprep.subr.mxu0 0.0
      %1273 = vmatpush2.msra.mxu0 0.0
      %1274 = vmatprep.subr.mxu0 0.0
      %1275 = vmatpush2.msra.mxu0 0.0
      %1276 = vmatprep.subr.mxu0 0.0
      %1277 = vmatpush2.msra.mxu0 0.0
      %1278 = vmatprep.subr.mxu0 0.0
      %1279 = vmatpush2.msra.mxu0 0.0
      %1280 = vmatprep.subr.mxu0 0.0
      %1281 = vmatpush2.msra.mxu0 0.0
      %1282 = vmatprep.subr.mxu0 0.0
      %1283 = vmatpush2.msra.mxu0 0.0
      %1284 = vmatprep.subr.mxu0 0.0
      %1285 = vmatpush2.msra.mxu0 0.0
      %1286 = vmatprep.subr.mxu0 0.0
      %1287 = vmatpush2.msra.mxu0 0.0
      %1288 = vmatprep.subr.mxu0 0.0
      %1289 = vmatpush2.msra.mxu0 0.0
      %1290 = vmatprep.subr.mxu0 0.0
      %1291 = vmatpush2.msra.mxu0 0.0
      %1292 = vmatprep.subr.mxu0 0.0
      %1293 = vmatpush2.msra.mxu0 0.0
      %1294 = vmatprep.subr.mxu0 0.0
      %1295 = vmatpush2.msra.mxu0 0.0
      %1296 = vmatprep.subr.mxu0 0.0
      %1297 = vmatpush2.msra.mxu0 0.0
      %1298 = vmatprep.subr.mxu0 0.0
      %1299 = vmatpush2.msra.mxu0 0.0
      %1300 = vmatprep.mubr.f32.mxu0 0.0
      %1301 = vmatmul.mubr.f32.gmra.mxu0 %v1231
      %v1302 = vpop.f32.mrf.mxu0
      %v1303 = vadd.f32 0.0, %v1302
      %v1304 = vpop.f32.mrf.mxu0
      %1305 = vmatprep.mubr.f32.mxu0 0.0
      %1306 = vmatmul.mubr.f32.gmra.mxu0 %v1234
      %v1307 = vpop.f32.mrf.mxu0
      %v1308 = vadd.f32 0.0, %v1307
      %v1309 = vpop.f32.mrf.mxu0
      %1310 = vdwg.mxu0
      %s1311 = scalar_lea.vmem %s174, 176
      %1312 = vst [vmem:[%s1311] sm:$0xff] %v1303
      %1313 = vst [vmem:[%s1311 + $0x8] sm:$0x3f] %v1308
      %v1314 = vld [vmem:[%s0] sm:$0xff]
      %v1315 = vld [vmem:[%s0 + $0x8] sm:$0x3f]
      %s1316 = scalar_lea.vmem %s166, 192
      %v1317 = vld [vmem:[%s1316] sm:$0xf]
      %v1318 = vld [vmem:[%s1316 + $0x4] sm:$0xf]
      %v1319 = vld [vmem:[%s1316 + $0x8] sm:$0xf]
      %v1320 = vld [vmem:[%s1316 + $0xc] sm:$0xf]
      %v1321 = vunpack.c.l.bf16 %v1317
      %v1322 = vunpack.c.l.bf16 %v1318
      %v1323 = vunpack.c.l.bf16 %v1319
      %v1324 = vunpack.c.l.bf16 %v1320
      %v1326 = vsel %vm185, %v1314, 0
      %v1329 = vsel %vm185, %v1315, 0
      %1331 = vmatprep.subr.mxu0 0.0
      %1332 = vmatpush1.msra.mxu0 0.0
      %1333 = vmatprep.subr.mxu0 0.0
      %1334 = vmatpush1.msra.mxu0 0.0
      %1335 = vmatprep.subr.mxu0 0.0
      %1336 = vmatpush1.msra.mxu0 0.0
      %1337 = vmatprep.subr.mxu0 0.0
      %1338 = vmatpush1.msra.mxu0 0.0
      %1339 = vmatprep.subr.mxu0 0.0
      %1340 = vmatpush1.msra.mxu0 0.0
      %1341 = vmatprep.subr.mxu0 0.0
      %1342 = vmatpush1.msra.mxu0 0.0
      %1343 = vmatprep.subr.mxu0 0.0
      %1344 = vmatpush1.msra.mxu0 0.0
      %1345 = vmatprep.subr.mxu0 0.0
      %1346 = vmatpush1.msra.mxu0 0.0
      %1347 = vmatprep.subr.mxu0 0.0
      %1348 = vmatpush1.msra.mxu0 0.0
      %1349 = vmatprep.subr.mxu0 0.0
      %1350 = vmatpush1.msra.mxu0 0.0
      %1351 = vmatprep.subr.mxu0 0.0
      %1352 = vmatpush1.msra.mxu0 0.0
      %1353 = vmatprep.subr.mxu0 0.0
      %1354 = vmatpush1.msra.mxu0 0.0
      %1355 = vmatprep.subr.mxu0 0.0
      %1356 = vmatpush1.msra.mxu0 %v1324
      %1357 = vmatprep.subr.mxu0 0.0
      %1358 = vmatpush1.msra.mxu0 %v1323
      %1359 = vmatprep.subr.mxu0 0.0
      %1360 = vmatpush1.msra.mxu0 %v1322
      %1361 = vmatprep.subr.mxu0 0.0
      %1362 = vmatpush1.msra.mxu0 %v1321
      %1363 = vmatprep.subr.mxu0 0.0
      %1364 = vmatpush2.msra.mxu0 0.0
      %1365 = vmatprep.subr.mxu0 0.0
      %1366 = vmatpush2.msra.mxu0 0.0
      %1367 = vmatprep.subr.mxu0 0.0
      %1368 = vmatpush2.msra.mxu0 0.0
      %1369 = vmatprep.subr.mxu0 0.0
      %1370 = vmatpush2.msra.mxu0 0.0
      %1371 = vmatprep.subr.mxu0 0.0
      %1372 = vmatpush2.msra.mxu0 0.0
      %1373 = vmatprep.subr.mxu0 0.0
      %1374 = vmatpush2.msra.mxu0 0.0
      %1375 = vmatprep.subr.mxu0 0.0
      %1376 = vmatpush2.msra.mxu0 0.0
      %1377 = vmatprep.subr.mxu0 0.0
      %1378 = vmatpush2.msra.mxu0 0.0
      %1379 = vmatprep.subr.mxu0 0.0
      %1380 = vmatpush2.msra.mxu0 0.0
      %1381 = vmatprep.subr.mxu0 0.0
      %1382 = vmatpush2.msra.mxu0 0.0
      %1383 = vmatprep.subr.mxu0 0.0
      %1384 = vmatpush2.msra.mxu0 0.0
      %1385 = vmatprep.subr.mxu0 0.0
      %1386 = vmatpush2.msra.mxu0 0.0
      %1387 = vmatprep.subr.mxu0 0.0
      %1388 = vmatpush2.msra.mxu0 0.0
      %1389 = vmatprep.subr.mxu0 0.0
      %1390 = vmatpush2.msra.mxu0 0.0
      %1391 = vmatprep.subr.mxu0 0.0
      %1392 = vmatpush2.msra.mxu0 0.0
      %1393 = vmatprep.subr.mxu0 0.0
      %1394 = vmatpush2.msra.mxu0 0.0
      %1395 = vmatprep.mubr.f32.mxu0 0.0
      %1396 = vmatmul.mubr.f32.gmra.mxu0 %v1326
      %v1397 = vpop.f32.mrf.mxu0
      %v1398 = vadd.f32 0.0, %v1397
      %v1399 = vpop.f32.mrf.mxu0
      %1400 = vmatprep.mubr.f32.mxu0 0.0
      %1401 = vmatmul.mubr.f32.gmra.mxu0 %v1329
      %v1402 = vpop.f32.mrf.mxu0
      %v1403 = vadd.f32 0.0, %v1402
      %v1404 = vpop.f32.mrf.mxu0
      %1405 = vdwg.mxu0
      %s1406 = scalar_lea.vmem %s174, 192
      %1407 = vst [vmem:[%s1406] sm:$0xff] %v1398
      %1408 = vst [vmem:[%s1406 + $0x8] sm:$0x3f] %v1403
      %v1409 = vld [vmem:[%s0] sm:$0xff]
      %v1410 = vld [vmem:[%s0 + $0x8] sm:$0x3f]
      %s1411 = scalar_lea.vmem %s166, 208
      %v1412 = vld [vmem:[%s1411] sm:$0xf]
      %v1413 = vld [vmem:[%s1411 + $0x4] sm:$0xf]
      %v1414 = vld [vmem:[%s1411 + $0x8] sm:$0xf]
      %v1415 = vld [vmem:[%s1411 + $0xc] sm:$0xf]
      %v1416 = vunpack.c.l.bf16 %v1412
      %v1417 = vunpack.c.l.bf16 %v1413
      %v1418 = vunpack.c.l.bf16 %v1414
      %v1419 = vunpack.c.l.bf16 %v1415
      %v1421 = vsel %vm185, %v1409, 0
      %v1424 = vsel %vm185, %v1410, 0
      %1426 = vmatprep.subr.mxu0 0.0
      %1427 = vmatpush1.msra.mxu0 0.0
      %1428 = vmatprep.subr.mxu0 0.0
      %1429 = vmatpush1.msra.mxu0 0.0
      %1430 = vmatprep.subr.mxu0 0.0
      %1431 = vmatpush1.msra.mxu0 0.0
      %1432 = vmatprep.subr.mxu0 0.0
      %1433 = vmatpush1.msra.mxu0 0.0
      %1434 = vmatprep.subr.mxu0 0.0
      %1435 = vmatpush1.msra.mxu0 0.0
      %1436 = vmatprep.subr.mxu0 0.0
      %1437 = vmatpush1.msra.mxu0 0.0
      %1438 = vmatprep.subr.mxu0 0.0
      %1439 = vmatpush1.msra.mxu0 0.0
      %1440 = vmatprep.subr.mxu0 0.0
      %1441 = vmatpush1.msra.mxu0 0.0
      %1442 = vmatprep.subr.mxu0 0.0
      %1443 = vmatpush1.msra.mxu0 0.0
      %1444 = vmatprep.subr.mxu0 0.0
      %1445 = vmatpush1.msra.mxu0 0.0
      %1446 = vmatprep.subr.mxu0 0.0
      %1447 = vmatpush1.msra.mxu0 0.0
      %1448 = vmatprep.subr.mxu0 0.0
      %1449 = vmatpush1.msra.mxu0 0.0
      %1450 = vmatprep.subr.mxu0 0.0
      %1451 = vmatpush1.msra.mxu0 %v1419
      %1452 = vmatprep.subr.mxu0 0.0
      %1453 = vmatpush1.msra.mxu0 %v1418
      %1454 = vmatprep.subr.mxu0 0.0
      %1455 = vmatpush1.msra.mxu0 %v1417
      %1456 = vmatprep.subr.mxu0 0.0
      %1457 = vmatpush1.msra.mxu0 %v1416
      %1458 = vmatprep.subr.mxu0 0.0
      %1459 = vmatpush2.msra.mxu0 0.0
      %1460 = vmatprep.subr.mxu0 0.0
      %1461 = vmatpush2.msra.mxu0 0.0
      %1462 = vmatprep.subr.mxu0 0.0
      %1463 = vmatpush2.msra.mxu0 0.0
      %1464 = vmatprep.subr.mxu0 0.0
      %1465 = vmatpush2.msra.mxu0 0.0
      %1466 = vmatprep.subr.mxu0 0.0
      %1467 = vmatpush2.msra.mxu0 0.0
      %1468 = vmatprep.subr.mxu0 0.0
      %1469 = vmatpush2.msra.mxu0 0.0
      %1470 = vmatprep.subr.mxu0 0.0
      %1471 = vmatpush2.msra.mxu0 0.0
      %1472 = vmatprep.subr.mxu0 0.0
      %1473 = vmatpush2.msra.mxu0 0.0
      %1474 = vmatprep.subr.mxu0 0.0
      %1475 = vmatpush2.msra.mxu0 0.0
      %1476 = vmatprep.subr.mxu0 0.0
      %1477 = vmatpush2.msra.mxu0 0.0
      %1478 = vmatprep.subr.mxu0 0.0
      %1479 = vmatpush2.msra.mxu0 0.0
      %1480 = vmatprep.subr.mxu0 0.0
      %1481 = vmatpush2.msra.mxu0 0.0
      %1482 = vmatprep.subr.mxu0 0.0
      %1483 = vmatpush2.msra.mxu0 0.0
      %1484 = vmatprep.subr.mxu0 0.0
      %1485 = vmatpush2.msra.mxu0 0.0
      %1486 = vmatprep.subr.mxu0 0.0
      %1487 = vmatpush2.msra.mxu0 0.0
      %1488 = vmatprep.subr.mxu0 0.0
      %1489 = vmatpush2.msra.mxu0 0.0
      %1490 = vmatprep.mubr.f32.mxu0 0.0
      %1491 = vmatmul.mubr.f32.gmra.mxu0 %v1421
      %v1492 = vpop.f32.mrf.mxu0
      %v1493 = vadd.f32 0.0, %v1492
      %v1494 = vpop.f32.mrf.mxu0
      %1495 = vmatprep.mubr.f32.mxu0 0.0
      %1496 = vmatmul.mubr.f32.gmra.mxu0 %v1424
      %v1497 = vpop.f32.mrf.mxu0
      %v1498 = vadd.f32 0.0, %v1497
      %v1499 = vpop.f32.mrf.mxu0
      %1500 = vdwg.mxu0
      %s1501 = scalar_lea.vmem %s174, 208
      %1502 = vst [vmem:[%s1501] sm:$0xff] %v1493
      %1503 = vst [vmem:[%s1501 + $0x8] sm:$0x3f] %v1498
      %p1504 = scmp.lt.s32.totalorder %s17, 1
      %s1505 = scalar_select %p1504, %s17, 1
      %p1506 = scmp.lt.s32.totalorder %s18, 0
      %s1507 = scalar_select %p1506, %s18, 0
      %s1508 = smul.addr %s1505, 28
      %s1509 = sadd.s32 %s1507, %s1508
      %s1510 = smul.addr %s1509, 8
      %s1511 = scalar_lea.vmem %s2, %s1510
      // Predicated region
      $region29: #{_lambda_.5} parent=27 // pred_check
        %p1512 = pneg %p94
      $region30: #{_lambda_.5} parent=27 // pred_check_branch
        %1514 = sbr.rel (%p1512) target = $region32
      $region31: #{_lambda_.5} parent=27 // pred_region
        _
      $region32: #{_lambda_.5} parent=27 // pred_fallthru
        _
    $region28: #{_lambda_.5} parent=5 // pred_fallthru
      _
    %p1515 = scmp.le.s32.totalorder 2, %s8
    // Predicated region
    $region33: #{_lambda_.5} parent=5 // pred_check
      %p1516 = pneg %p1515
    $region34: #{_lambda_.5} parent=5 // pred_check_branch
      %1518 = sbr.rel (%p1516) target = $region36
    $region35: #{_lambda_.5} parent=5 // pred_region
      %s1519 = ssub.s32 %s8, 2
      // Predicated region
      $region37: #{_lambda_.5} parent=35 // pred_check
        %p1520 = pneg %p100
      $region38: #{_lambda_.5} parent=35 // pred_check_branch
        %1522 = sbr.rel (%p1520) target = $region40
      $region39: #{_lambda_.5} parent=35 // pred_region
        %p1523 = scmp.lt.s32.totalorder %s19, 1
        %s1524 = scalar_select %p1523, %s19, 1
        %p1525 = scmp.lt.s32.totalorder %s20, 0
        %s1526 = scalar_select %p1525, %s20, 0
        %s1527 = smul.addr %s1524, 28
        %s1528 = sadd.s32 %s1526, %s1527
        %s1529 = smul.addr %s1528, 8
        %s1530 = scalar_lea.vmem %s2, %s1529
      $region40: #{_lambda_.5} parent=35 // pred_fallthru
        _
    $region36: #{_lambda_.5} parent=5 // pred_fallthru
      _
  $region6: #{_lambda_.5} parent=0 // loop_footer
    %s12 = sadd.s32 1, %s8
  $region7: #{_lambda_.5} parent=0 // loop_footer_branch
    %7 = sbr.rel target = $region3
  $region8: #{_lambda_.5} parent=0 // loop_exit
    _

</llo_original>
